<compile_context>
chip_gen: v7x
topology: tpu7x:2x2x1
jax: 0.10.0
libtpu: 0.0.40
codegen_flags: <defaults>
</compile_context>

<pallas_src>
import math
from functools import partial

import jax
import jax.numpy as jnp
from jax.experimental import pallas as pl
from jax.experimental.pallas import tpu as pltpu


# ------------------------------ tiling helpers ------------------------------

def _q_row_tile(n, dtype, target=256):
    """Largest divisor of n <= target with sublane-aligned granularity."""
    mult = max(8, 32 // jnp.dtype(dtype).itemsize)   # 8 rows f32, 16 bf16, 32 i8
    if n <= target:
        return n
    t = target - (target % mult)
    while t >= mult:
        if n % t == 0:
            return t
        t -= mult
    # TODO(synk): no aligned divisor <= target; fall back to full rows (VMEM heavy).
    return n


def _kv_row_tile(n, target=512):
    """KV-kernel row tile: multiple of 128 (it is the K^T output lane dim) or full."""
    if n <= target:
        return n
    t = target - (target % 128)
    while t >= 128:
        if n % t == 0:
            return t
        t -= 128
    return n


def _mosaic_params(est_block_bytes):
    """dimension_semantics + explicit scoped-VMEM limit from a per-step estimate."""
    limit = int(min(max(2 * est_block_bytes + (16 << 20), 32 << 20), 64 << 20))
    return pltpu.CompilerParams(
        dimension_semantics=("parallel", "parallel"),
        vmem_limit_bytes=limit)


def _extract_sr_patches(x, H, W, sr):
    """(B, N, C) tokens -> (B, (H/sr)*(W/sr), sr*sr*C) non-overlapping patches."""
    B, N, C = x.shape
    xi = x.reshape(B, H, W, C)
    p = xi.reshape(B, H // sr, sr, W // sr, sr, C).transpose(0, 1, 3, 2, 4, 5)
    return p.reshape(B, (H // sr) * (W // sr), sr * sr * C)


# ----------------------------- Pallas kernels ------------------------------

def _kv_kernel(x_ref, kwt_ref, vw_ref, *rest, has_bias):
    """K/V projection (sr_ratio == 1).  x: (TKV, C) -> kt: (C, TKV), v: (TKV, C).

    kwt is the K weight pre-transposed to (C_out, C_in); the NT dot produces
    K^T directly, so no per-query-tile K transpose is needed downstream.
    """
    if has_bias:
        kb_ref, vb_ref, kt_ref, v_ref = rest
    else:
        kt_ref, v_ref = rest
    dt = v_ref.dtype
    x = x_ref[...]
    kt = jax.lax.dot_general(kwt_ref[...], x, (((1,), (1,)), ((), ())),
                             preferred_element_type=jnp.float32)        # (C, TKV)
    v = jnp.dot(x, vw_ref[...], preferred_element_type=jnp.float32)     # (TKV, C)
    if has_bias:
        kt = kt + kb_ref[...]                                           # (C, 1)
        v = v + vb_ref[...]                                             # (1, C)
    kt_ref[...] = kt.astype(dt)
    v_ref[...] = v.astype(dt)


def _sr_kv_kernel(p_ref, srw_ref, srb_ref, g_ref, b_ref, kwt_ref, vw_ref, *rest,
                  eps, has_bias):
    """Spatial-reduction conv (patch matmul) + LayerNorm + K/V projections.

    p_ref: (TKV, sr*sr*C) patches -> kt: (C, TKV), v: (TKV, C).
    """
    if has_bias:
        kb_ref, vb_ref, kt_ref, v_ref = rest
    else:
        kt_ref, v_ref = rest
    dt = v_ref.dtype
    # sr conv == patch matmul (kernel_size == stride, non-overlapping patches)
    t = (jnp.dot(p_ref[...], srw_ref[...], preferred_element_type=jnp.float32)
         + srb_ref[...])                                                # (TKV, C) f32
    mu = jnp.mean(t, axis=-1, keepdims=True)
    var = jnp.mean((t - mu) ** 2, axis=-1, keepdims=True)
    t = (t - mu) * jax.lax.rsqrt(var + eps)
    t = (t * g_ref[...] + b_ref[...]).astype(dt)
    kt = jax.lax.dot_general(kwt_ref[...], t, (((1,), (1,)), ((), ())),
                             preferred_element_type=jnp.float32)        # (C, TKV)
    v = jnp.dot(t, vw_ref[...], preferred_element_type=jnp.float32)     # (TKV, C)
    if has_bias:
        kt = kt + kb_ref[...]
        v = v + vb_ref[...]
    kt_ref[...] = kt.astype(dt)
    v_ref[...] = v.astype(dt)


def _fused_attn_kernel(x_ref, kt_ref, v_ref, qw_ref, *rest, num_heads, has_bias):
    """q-projection + multi-head softmax attention + output projection.

    x_ref: (TQ, C) query tile; kt_ref: (C, Nk) transposed keys; v_ref: (Nk, C);
    o_ref: (TQ, C) lane-dense output (heads concatenated along channels).
    """
    if has_bias:
        qb_ref, pw_ref, pb_ref, o_ref, q_scr, acc_scr = rest
    else:
        pw_ref, pb_ref, o_ref, q_scr, acc_scr = rest
    dt = x_ref.dtype
    C = x_ref.shape[1]
    hd = C // num_heads

    # q projection (1/sqrt(hd) scale already folded into qw/qb on the wrapper
    # side). Staged through VMEM scratch so only per-head slices are live below.
    q = jnp.dot(x_ref[...], qw_ref[...], preferred_element_type=jnp.float32)
    if has_bias:
        q = q + qb_ref[...]
    q_scr[...] = q.astype(dt)

    # Static unroll over heads (num_heads <= 8 in PVT).  Each head's (TQ, hd)
    # output is written straight into the scratch accumulator at a static
    # channel offset, so s / p / o_h die at the end of the head and no
    # jnp.concatenate of sub-128-lane slices is needed.
    for h in range(num_heads):
        lo = h * hd
        q_h = q_scr[:, lo:lo + hd]                                      # (TQ, hd)
        k_h = kt_ref[lo:lo + hd, :]                                     # (hd, Nk)
        v_h = v_ref[:, lo:lo + hd]                                      # (Nk, hd)
        s = jnp.dot(q_h, k_h, preferred_element_type=jnp.float32)       # (TQ, Nk)
        s = s - jnp.max(s, axis=-1, keepdims=True)
        p = jnp.exp(s)
        l = jnp.sum(p, axis=-1, keepdims=True)                          # (TQ, 1)
        o_h = jnp.dot(p.astype(dt), v_h,
                      preferred_element_type=jnp.float32)               # (TQ, hd)
        # normalize the small f32 output AFTER the PV matmul (perf + accuracy)
        o_h = o_h * pl.reciprocal(l, approx=True)
        acc_scr[:, lo:lo + hd] = o_h.astype(dt)

    y = (jnp.dot(acc_scr[...], pw_ref[...], preferred_element_type=jnp.float32)
         + pb_ref[...])
    o_ref[...] = y.astype(o_ref.dtype)


# ----------------------------- Attention module -----------------------------

def init_attention_params(key, dim, num_heads, sr_ratio, qkv_bias=False):
    ks = jax.random.split(key, 5)
    p = {}
    std = 0.02
    # Linear weights stored as (in, out); applied as x @ W.
    p["q_w"] = std * jax.random.normal(ks[0], (dim, dim), jnp.float32)
    p["q_b"] = jnp.zeros((dim,), jnp.float32)
    p["kv_w"] = std * jax.random.normal(ks[1], (dim, 2 * dim), jnp.float32)
    p["kv_b"] = jnp.zeros((2 * dim,), jnp.float32)
    p["proj_w"] = std * jax.random.normal(ks[2], (dim, dim), jnp.float32)
    p["proj_b"] = jnp.zeros((dim,), jnp.float32)
    if sr_ratio > 1:
        fan_out = sr_ratio * sr_ratio * dim
        conv_std = math.sqrt(2.0 / fan_out)
        # Conv2d weight, PyTorch layout (out_ch, in_ch, kh, kw)
        p["sr_w"] = conv_std * jax.random.normal(
            ks[3], (dim, dim, sr_ratio, sr_ratio), jnp.float32)
        p["sr_b"] = jnp.zeros((dim,), jnp.float32)
        p["ln_g"] = jnp.ones((dim,), jnp.float32)
        p["ln_b"] = jnp.zeros((dim,), jnp.float32)
    return p


def attention_forward(params, x, *, H, W, num_heads, sr_ratio, qkv_bias=False):
    B, N, C = x.shape
    assert N == H * W, "token count must equal H*W"
    assert C % num_heads == 0
    hd = C // num_heads
    scale = hd ** -0.5
    dt = x.dtype
    isz = jnp.dtype(dt).itemsize

    # K / V projection weights (static split; K weight pre-transposed so the
    # KV kernel emits K^T straight from the MXU).
    kwt = params["kv_w"][:, :C].T.astype(dt)         # (C_out, C_in)
    vw = params["kv_w"][:, C:].astype(dt)            # (C_in, C_out)
    kv_bias_args, kv_bias_specs = [], []
    if qkv_bias:
        kv_bias_args = [params["kv_b"][:C].reshape(C, 1).astype(jnp.float32),
                        params["kv_b"][C:].reshape(1, C).astype(jnp.float32)]
        kv_bias_specs = [pl.BlockSpec((C, 1), lambda b, r: (0, 0)),
                         pl.BlockSpec((1, C), lambda b, r: (0, 0))]

    # ---- KV pre-kernel: (sr conv + LN +) K/V projections ----
    if sr_ratio > 1:
        sr = sr_ratio
        assert H % sr == 0 and W % sr == 0, "H, W must be divisible by sr_ratio"
        # TODO(synk): fold this pure-layout patch extraction into the KV kernel.
        patches = _extract_sr_patches(x, H, W, sr)              # (B, Nk, sr*sr*C)
        Nk = patches.shape[1]
        P = sr * sr * C
        srw = params["sr_w"].transpose(2, 3, 1, 0).reshape(P, C).astype(dt)
        srb = params["sr_b"].reshape(1, C).astype(jnp.float32)
        g = params["ln_g"].reshape(1, C).astype(jnp.float32)
        bt = params["ln_b"].reshape(1, C).astype(jnp.float32)
        TKV = _kv_row_tile(Nk)
        est = (TKV * P + P * C + 2 * TKV * C + 2 * C * C) * isz + 8 * C * 4
        kt, v = pl.pallas_call(
            partial(_sr_kv_kernel, eps=1e-5, has_bias=qkv_bias),
            out_shape=(jax.ShapeDtypeStruct((B, C, Nk), dt),
                       jax.ShapeDtypeStruct((B, Nk, C), dt)),
            grid=(B, Nk // TKV),
            in_specs=[
                pl.BlockSpec((None, TKV, P), lambda b, r: (b, r, 0)),
                pl.BlockSpec((P, C), lambda b, r: (0, 0)),
                pl.BlockSpec((1, C), lambda b, r: (0, 0)),
                pl.BlockSpec((1, C), lambda b, r: (0, 0)),
                pl.BlockSpec((1, C), lambda b, r: (0, 0)),
                pl.BlockSpec((C, C), lambda b, r: (0, 0)),
                pl.BlockSpec((C, C), lambda b, r: (0, 0)),
            ] + kv_bias_specs,
            out_specs=(pl.BlockSpec((None, C, TKV), lambda b, r: (b, 0, r)),
                       pl.BlockSpec((None, TKV, C), lambda b, r: (b, r, 0))),
            compiler_params=_mosaic_params(est),
        )(patches, srw, srb, g, bt, kwt, vw, *kv_bias_args)
    else:
        Nk = N
        TKV = _kv_row_tile(Nk)
        est = (3 * TKV * C + 2 * C * C) * isz + 8 * C * 4
        kt, v = pl.pallas_call(
            partial(_kv_kernel, has_bias=qkv_bias),
            out_shape=(jax.ShapeDtypeStruct((B, C, Nk), dt),
                       jax.ShapeDtypeStruct((B, Nk, C), dt)),
            grid=(B, Nk // TKV),
            in_specs=[
                pl.BlockSpec((None, TKV, C), lambda b, r: (b, r, 0)),
                pl.BlockSpec((C, C), lambda b, r: (0, 0)),
                pl.BlockSpec((C, C), lambda b, r: (0, 0)),
            ] + kv_bias_specs,
            out_specs=(pl.BlockSpec((None, C, TKV), lambda b, r: (b, 0, r)),
                       pl.BlockSpec((None, TKV, C), lambda b, r: (b, r, 0))),
            compiler_params=_mosaic_params(est),
        )(x, kwt, vw, *kv_bias_args)

    # ---- Fused q-proj + attention + out-proj over (batch, query tiles) ----
    TQ = _q_row_tile(N, dt)
    # weight-side fold of the 1/sqrt(hd) softmax scale into q_w / q_b
    qw = (params["q_w"] * scale).astype(dt)
    pw = params["proj_w"].astype(dt)
    pb = params["proj_b"].reshape(1, C).astype(jnp.float32)
    q_bias_args, q_bias_specs = [], []
    if qkv_bias:
        q_bias_args = [(params["q_b"] * scale).reshape(1, C).astype(jnp.float32)]
        q_bias_specs = [pl.BlockSpec((1, C), lambda b, q: (0, 0))]

    est = (2 * TQ * C + 2 * Nk * C + 2 * C * C) * isz \
          + 2 * TQ * C * isz + TQ * Nk * 4 + 8 * C * 4
    out = pl.pallas_call(
        partial(_fused_attn_kernel, num_heads=num_heads, has_bias=qkv_bias),
        out_shape=jax.ShapeDtypeStruct((B, N, C), dt),
        grid=(B, N // TQ),
        in_specs=[
            pl.BlockSpec((None, TQ, C), lambda b, q: (b, q, 0)),
            pl.BlockSpec((None, C, Nk), lambda b, q: (b, 0, 0)),
            pl.BlockSpec((None, Nk, C), lambda b, q: (b, 0, 0)),
            pl.BlockSpec((C, C), lambda b, q: (0, 0)),
        ] + q_bias_specs + [
            pl.BlockSpec((C, C), lambda b, q: (0, 0)),
            pl.BlockSpec((1, C), lambda b, q: (0, 0)),
        ],
        out_specs=pl.BlockSpec((None, TQ, C), lambda b, q: (b, q, 0)),
        scratch_shapes=[pltpu.VMEM((TQ, C), dt),      # q staging
                        pltpu.VMEM((TQ, C), dt)],     # per-head output accumulator
        compiler_params=_mosaic_params(est),
    )(x, kt, v, qw, *q_bias_args, pw, pb)
    return out


# ----------------------- Pure-JAX reference (for checks) --------------------

def attention_reference(params, x, H, W, *, num_heads, sr_ratio):
    B, N, C = x.shape
    hd = C // num_heads
    scale = hd ** -0.5
    q = (x @ params["q_w"] + params["q_b"]).reshape(B, N, num_heads, hd).transpose(0, 2, 1, 3)
    if sr_ratio > 1:
        sr = sr_ratio
        Ho, Wo = H // sr, W // sr
        xi = x.reshape(B, H, W, C).reshape(B, Ho, sr, Wo, sr, C).transpose(0, 1, 3, 2, 4, 5)
        xi = xi.reshape(B, Ho * Wo, sr * sr * C)
        w_mat = params["sr_w"].transpose(2, 3, 1, 0).reshape(sr * sr * C, C)
        x_ = xi @ w_mat + params["sr_b"]
        mu = jnp.mean(x_, -1, keepdims=True)
        var = jnp.mean((x_ - mu) ** 2, -1, keepdims=True)
        x_ = (x_ - mu) * jax.lax.rsqrt(var + 1e-5) * params["ln_g"] + params["ln_b"]
    else:
        x_ = x
    Nk = x_.shape[1]
    kv = (x_ @ params["kv_w"] + params["kv_b"]).reshape(B, Nk, 2, num_heads, hd)
    kv = kv.transpose(2, 0, 3, 1, 4)
    k, v = kv[0], kv[1]
    attn = jnp.einsum("bhnd,bhkd->bhnk", q, k) * scale
    attn = jax.nn.softmax(attn, axis=-1)
    o = jnp.einsum("bhnk,bhkd->bhnd", attn, v).transpose(0, 2, 1, 3).reshape(B, N, C)
    return o @ params["proj_w"] + params["proj_b"]


if __name__ == "__main__":
    # Small module-consistent shapes: dim=64, 8 heads (head_dim=8), 8x8 tokens.
    B, H, W, dim, num_heads = 2, 8, 8, 64, 8
    N = H * W

    key = jax.random.PRNGKey(0)
    k_params, k_x, k_b1, k_b2 = jax.random.split(key, 4)
    x = jax.random.normal(k_x, (B, N, dim), jnp.float32)

    # --- sr_ratio = 2 path (sr conv + LN fused into the KV kernel) ---
    params2 = init_attention_params(k_params, dim, num_heads, sr_ratio=2)
    fwd2 = jax.jit(partial(attention_forward, num_heads=num_heads, sr_ratio=2),
                   static_argnames=("H", "W"))
    out2 = jax.block_until_ready(fwd2(params2, x, H=H, W=W))
    ref2 = attention_reference(params2, x, H, W, num_heads=num_heads, sr_ratio=2)
    assert out2.shape == (B, N, dim)
    assert jnp.allclose(out2, ref2, atol=2e-3, rtol=2e-3), "sr=2 mismatch vs JAX reference"

    # --- sr_ratio = 1 path (plain KV projection) ---
    params1 = init_attention_params(k_params, dim, num_heads, sr_ratio=1)
    fwd1 = jax.jit(partial(attention_forward, num_heads=num_heads, sr_ratio=1),
                   static_argnames=("H", "W"))
    out1 = jax.block_until_ready(fwd1(params1, x, H=H, W=W))
    ref1 = attention_reference(params1, x, H, W, num_heads=num_heads, sr_ratio=1)
    assert jnp.allclose(out1, ref1, atol=2e-3, rtol=2e-3), "sr=1 mismatch vs JAX reference"

    # --- qkv_bias=True path (bias operands statically included) ---
    params1b = dict(params1)
    params1b["q_b"] = 0.1 * jax.random.normal(k_b1, (dim,), jnp.float32)
    params1b["kv_b"] = 0.1 * jax.random.normal(k_b2, (2 * dim,), jnp.float32)
    fwd1b = jax.jit(partial(attention_forward, num_heads=num_heads, sr_ratio=1,
                            qkv_bias=True), static_argnames=("H", "W"))
    out1b = jax.block_until_ready(fwd1b(params1b, x, H=H, W=W))
    ref1b = attention_reference(params1b, x, H, W, num_heads=num_heads, sr_ratio=1)
    assert jnp.allclose(out1b, ref1b, atol=2e-3, rtol=2e-3), "qkv_bias mismatch vs JAX reference"

    # --- bf16 smoke run (bf16 MXU operands, f32 accumulation / softmax / LN) ---
    out_bf16 = jax.block_until_ready(fwd2(params2, x.astype(jnp.bfloat16), H=H, W=W))
    assert out_bf16.shape == (B, N, dim) and out_bf16.dtype == jnp.bfloat16
    assert bool(jnp.all(jnp.isfinite(out_bf16.astype(jnp.float32))))

    print("KERNEL_OK")
</pallas_src>

<mosaic_0001>
module attributes {stable_mosaic.version = 11 : i64} {
  func.func @_sr_kv_kernel(%arg0: i32, %arg1: i32, %arg2: memref<1x16x256xf32, #tpu.memory_space<vmem>>, %arg3: memref<256x64xf32, #tpu.memory_space<vmem>>, %arg4: memref<1x64xf32, #tpu.memory_space<vmem>>, %arg5: memref<1x64xf32, #tpu.memory_space<vmem>>, %arg6: memref<1x64xf32, #tpu.memory_space<vmem>>, %arg7: memref<64x64xf32, #tpu.memory_space<vmem>>, %arg8: memref<64x64xf32, #tpu.memory_space<vmem>>, %arg9: memref<1x64x16xf32, #tpu.memory_space<vmem>>, %arg10: memref<1x16x64xf32, #tpu.memory_space<vmem>>) attributes {dimension_semantics = [#tpu.dimension_semantics<parallel>, #tpu.dimension_semantics<parallel>], iteration_bounds = array<i64: 2, 1>, scalar_prefetch = 0 : i64, scratch_operands = 0 : i64, tpu.core_type = #tpu.core_type<tc>, window_params = [{transform_indices = @transform_0, window_bounds = array<i64: 1, 16, 256>}, {pipeline_mode = #tpu.pipeline_mode<synchronous>, transform_indices = @transform_1, window_bounds = array<i64: 256, 64>}, {pipeline_mode = #tpu.pipeline_mode<synchronous>, transform_indices = @transform_2, window_bounds = array<i64: 1, 64>}, {pipeline_mode = #tpu.pipeline_mode<synchronous>, transform_indices = @transform_3, window_bounds = array<i64: 1, 64>}, {pipeline_mode = #tpu.pipeline_mode<synchronous>, transform_indices = @transform_4, window_bounds = array<i64: 1, 64>}, {pipeline_mode = #tpu.pipeline_mode<synchronous>, transform_indices = @transform_5, window_bounds = array<i64: 64, 64>}, {pipeline_mode = #tpu.pipeline_mode<synchronous>, transform_indices = @transform_6, window_bounds = array<i64: 64, 64>}, {transform_indices = @transform_7, window_bounds = array<i64: 1, 64, 16>}, {transform_indices = @transform_8, window_bounds = array<i64: 1, 16, 64>}]} {
    %c0 = arith.constant 0 : index
    %c0_0 = arith.constant 0 : index
    %c0_1 = arith.constant 0 : index
    %0 = vector.load %arg2[%c0, %c0_0, %c0_1] : memref<1x16x256xf32, #tpu.memory_space<vmem>>, vector<1x16x256xf32>
    %1 = vector.shape_cast %0 : vector<1x16x256xf32> to vector<16x256xf32>
    %c0_2 = arith.constant 0 : index
    %c0_3 = arith.constant 0 : index
    %2 = vector.load %arg3[%c0_2, %c0_3] : memref<256x64xf32, #tpu.memory_space<vmem>>, vector<256x64xf32>
    %cst = arith.constant dense<0.000000e+00> : vector<16x64xf32>
    %3 = tpu.matmul %1, %2, %cst {dimension_numbers = #tpu.dot_dimension_numbers<[1], [0], [0], [1], [0, 0, 1, 1], [], []>} : vector<16x256xf32>, vector<256x64xf32>, vector<16x64xf32> -> vector<16x64xf32>
    %c0_4 = arith.constant 0 : index
    %c0_5 = arith.constant 0 : index
    %4 = vector.load %arg4[%c0_4, %c0_5] : memref<1x64xf32, #tpu.memory_space<vmem>>, vector<1x64xf32>
    %5 = vector.broadcast %4 : vector<1x64xf32> to vector<16x64xf32>
    %6 = arith.addf %3, %5 : vector<16x64xf32>
    %cst_6 = arith.constant dense<0.000000e+00> : vector<16xf32>
    %7 = vector.multi_reduction <add>, %6, %cst_6 [1] : vector<16x64xf32> to vector<16xf32>
    %8 = vector.shape_cast %7 : vector<16xf32> to vector<16x1xf32>
    %cst_7 = arith.constant 6.400000e+01 : f32
    %9 = vector.broadcast %cst_7 : f32 to vector<16x1xf32>
    %10 = arith.divf %8, %9 : vector<16x1xf32>
    %11 = vector.broadcast %10 : vector<16x1xf32> to vector<16x64xf32>
    %12 = arith.subf %6, %11 : vector<16x64xf32>
    %13 = arith.mulf %12, %12 : vector<16x64xf32>
    %cst_8 = arith.constant dense<0.000000e+00> : vector<16xf32>
    %14 = vector.multi_reduction <add>, %13, %cst_8 [1] : vector<16x64xf32> to vector<16xf32>
    %15 = vector.shape_cast %14 : vector<16xf32> to vector<16x1xf32>
    %cst_9 = arith.constant 6.400000e+01 : f32
    %16 = vector.broadcast %cst_9 : f32 to vector<16x1xf32>
    %17 = arith.divf %15, %16 : vector<16x1xf32>
    %18 = vector.broadcast %10 : vector<16x1xf32> to vector<16x64xf32>
    %19 = arith.subf %6, %18 : vector<16x64xf32>
    %cst_10 = arith.constant 9.99999974E-6 : f32
    %20 = vector.broadcast %cst_10 : f32 to vector<16x1xf32>
    %21 = arith.addf %17, %20 : vector<16x1xf32>
    %22 = math.rsqrt %21 : vector<16x1xf32>
    %23 = vector.broadcast %22 : vector<16x1xf32> to vector<16x64xf32>
    %24 = arith.mulf %19, %23 : vector<16x64xf32>
    %c0_11 = arith.constant 0 : index
    %c0_12 = arith.constant 0 : index
    %25 = vector.load %arg5[%c0_11, %c0_12] : memref<1x64xf32, #tpu.memory_space<vmem>>, vector<1x64xf32>
    %26 = vector.broadcast %25 : vector<1x64xf32> to vector<16x64xf32>
    %27 = arith.mulf %24, %26 : vector<16x64xf32>
    %c0_13 = arith.constant 0 : index
    %c0_14 = arith.constant 0 : index
    %28 = vector.load %arg6[%c0_13, %c0_14] : memref<1x64xf32, #tpu.memory_space<vmem>>, vector<1x64xf32>
    %29 = vector.broadcast %28 : vector<1x64xf32> to vector<16x64xf32>
    %30 = arith.addf %27, %29 : vector<16x64xf32>
    %c0_15 = arith.constant 0 : index
    %c0_16 = arith.constant 0 : index
    %31 = vector.load %arg7[%c0_15, %c0_16] : memref<64x64xf32, #tpu.memory_space<vmem>>, vector<64x64xf32>
    %cst_17 = arith.constant dense<0.000000e+00> : vector<64x16xf32>
    %32 = tpu.matmul %31, %30, %cst_17 {dimension_numbers = #tpu.dot_dimension_numbers<[1], [1], [0], [0], [0, 0, 1, 0], [], []>} : vector<64x64xf32>, vector<16x64xf32>, vector<64x16xf32> -> vector<64x16xf32>
    %c0_18 = arith.constant 0 : index
    %c0_19 = arith.constant 0 : index
    %33 = vector.load %arg8[%c0_18, %c0_19] : memref<64x64xf32, #tpu.memory_space<vmem>>, vector<64x64xf32>
    %cst_20 = arith.constant dense<0.000000e+00> : vector<16x64xf32>
    %34 = tpu.matmul %30, %33, %cst_20 {dimension_numbers = #tpu.dot_dimension_numbers<[1], [0], [0], [1], [0, 0, 1, 1], [], []>} : vector<16x64xf32>, vector<64x64xf32>, vector<16x64xf32> -> vector<16x64xf32>
    %c0_21 = arith.constant 0 : index
    %c0_22 = arith.constant 0 : index
    %c0_23 = arith.constant 0 : index
    %35 = vector.load %arg9[%c0_21, %c0_22, %c0_23] : memref<1x64x16xf32, #tpu.memory_space<vmem>>, vector<1x64x16xf32>
    %36 = vector.shape_cast %35 : vector<1x64x16xf32> to vector<64x16xf32>
    %37 = vector.shape_cast %32 : vector<64x16xf32> to vector<1x64x16xf32>
    tpu.vector_store %arg9[%c0_21, %c0_22, %c0_23], %37 {strides = array<i32>} : memref<1x64x16xf32, #tpu.memory_space<vmem>>, vector<1x64x16xf32>,
    %c0_24 = arith.constant 0 : index
    %c0_25 = arith.constant 0 : index
    %c0_26 = arith.constant 0 : index
    %38 = vector.load %arg10[%c0_24, %c0_25, %c0_26] : memref<1x16x64xf32, #tpu.memory_space<vmem>>, vector<1x16x64xf32>
    %39 = vector.shape_cast %38 : vector<1x16x64xf32> to vector<16x64xf32>
    %40 = vector.shape_cast %34 : vector<16x64xf32> to vector<1x16x64xf32>
    tpu.vector_store %arg10[%c0_24, %c0_25, %c0_26], %40 {strides = array<i32>} : memref<1x16x64xf32, #tpu.memory_space<vmem>>, vector<1x16x64xf32>,
    return
  }
  func.func @transform_0(%arg0: i32, %arg1: i32) -> (i32, i32, i32) {
    %c0_i32 = arith.constant 0 : i32
    %c0_i32_0 = arith.constant 0 : i32
    return %arg0, %arg1, %c0_i32 : i32, i32, i32
  }
  func.func @transform_1(%arg0: i32, %arg1: i32) -> (i32, i32) {
    %c0_i32 = arith.constant 0 : i32
    %c0_i32_0 = arith.constant 0 : i32
    %c0_i32_1 = arith.constant 0 : i32
    return %c0_i32, %c0_i32_0 : i32, i32
  }
  func.func @transform_2(%arg0: i32, %arg1: i32) -> (i32, i32) {
    %c0_i32 = arith.constant 0 : i32
    %c0_i32_0 = arith.constant 0 : i32
    %c0_i32_1 = arith.constant 0 : i32
    return %c0_i32, %c0_i32_0 : i32, i32
  }
  func.func @transform_3(%arg0: i32, %arg1: i32) -> (i32, i32) {
    %c0_i32 = arith.constant 0 : i32
    %c0_i32_0 = arith.constant 0 : i32
    %c0_i32_1 = arith.constant 0 : i32
    return %c0_i32, %c0_i32_0 : i32, i32
  }
  func.func @transform_4(%arg0: i32, %arg1: i32) -> (i32, i32) {
    %c0_i32 = arith.constant 0 : i32
    %c0_i32_0 = arith.constant 0 : i32
    %c0_i32_1 = arith.constant 0 : i32
    return %c0_i32, %c0_i32_0 : i32, i32
  }
  func.func @transform_5(%arg0: i32, %arg1: i32) -> (i32, i32) {
    %c0_i32 = arith.constant 0 : i32
    %c0_i32_0 = arith.constant 0 : i32
    %c0_i32_1 = arith.constant 0 : i32
    return %c0_i32, %c0_i32_0 : i32, i32
  }
  func.func @transform_6(%arg0: i32, %arg1: i32) -> (i32, i32) {
    %c0_i32 = arith.constant 0 : i32
    %c0_i32_0 = arith.constant 0 : i32
    %c0_i32_1 = arith.constant 0 : i32
    return %c0_i32, %c0_i32_0 : i32, i32
  }
  func.func @transform_7(%arg0: i32, %arg1: i32) -> (i32, i32, i32) {
    %c0_i32 = arith.constant 0 : i32
    %c0_i32_0 = arith.constant 0 : i32
    return %arg0, %c0_i32, %arg1 : i32, i32, i32
  }
  func.func @transform_8(%arg0: i32, %arg1: i32) -> (i32, i32, i32) {
    %c0_i32 = arith.constant 0 : i32
    %c0_i32_0 = arith.constant 0 : i32
    return %arg0, %arg1, %c0_i32 : i32, i32, i32
  }
}

module attributes {stable_mosaic.version = 11 : i64} {
  func.func @_fused_attn_kernel(%arg0: i32, %arg1: i32, %arg2: memref<1x64x64xf32, #tpu.memory_space<vmem>>, %arg3: memref<1x64x16xf32, #tpu.memory_space<vmem>>, %arg4: memref<1x16x64xf32, #tpu.memory_space<vmem>>, %arg5: memref<64x64xf32, #tpu.memory_space<vmem>>, %arg6: memref<64x64xf32, #tpu.memory_space<vmem>>, %arg7: memref<1x64xf32, #tpu.memory_space<vmem>>, %arg8: memref<1x64x64xf32, #tpu.memory_space<vmem>>, %arg9: memref<64x64xf32, #tpu.memory_space<vmem>>, %arg10: memref<64x64xf32, #tpu.memory_space<vmem>>) attributes {dimension_semantics = [#tpu.dimension_semantics<parallel>, #tpu.dimension_semantics<parallel>], iteration_bounds = array<i64: 2, 1>, scalar_prefetch = 0 : i64, scratch_operands = 2 : i64, tpu.core_type = #tpu.core_type<tc>, window_params = [{transform_indices = @transform_0, window_bounds = array<i64: 1, 64, 64>}, {transform_indices = @transform_1, window_bounds = array<i64: 1, 64, 16>}, {transform_indices = @transform_2, window_bounds = array<i64: 1, 16, 64>}, {pipeline_mode = #tpu.pipeline_mode<synchronous>, transform_indices = @transform_3, window_bounds = array<i64: 64, 64>}, {pipeline_mode = #tpu.pipeline_mode<synchronous>, transform_indices = @transform_4, window_bounds = array<i64: 64, 64>}, {pipeline_mode = #tpu.pipeline_mode<synchronous>, transform_indices = @transform_5, window_bounds = array<i64: 1, 64>}, {transform_indices = @transform_6, window_bounds = array<i64: 1, 64, 64>}]} {
    %c0 = arith.constant 0 : index
    %c0_0 = arith.constant 0 : index
    %c0_1 = arith.constant 0 : index
    %0 = vector.load %arg2[%c0, %c0_0, %c0_1] : memref<1x64x64xf32, #tpu.memory_space<vmem>>, vector<1x64x64xf32>
    %1 = vector.shape_cast %0 : vector<1x64x64xf32> to vector<64x64xf32>
    %c0_2 = arith.constant 0 : index
    %c0_3 = arith.constant 0 : index
    %2 = vector.load %arg5[%c0_2, %c0_3] : memref<64x64xf32, #tpu.memory_space<vmem>>, vector<64x64xf32>
    %cst = arith.constant dense<0.000000e+00> : vector<64x64xf32>
    %3 = tpu.matmul %1, %2, %cst {dimension_numbers = #tpu.dot_dimension_numbers<[1], [0], [0], [1], [0, 0, 1, 1], [], []>} : vector<64x64xf32>, vector<64x64xf32>, vector<64x64xf32> -> vector<64x64xf32>
    %c0_4 = arith.constant 0 : index
    %c0_5 = arith.constant 0 : index
    %4 = vector.load %arg9[%c0_4, %c0_5] : memref<64x64xf32, #tpu.memory_space<vmem>>, vector<64x64xf32>
    tpu.vector_store %arg9[%c0_4, %c0_5], %3 {strides = array<i32>} : memref<64x64xf32, #tpu.memory_space<vmem>>, vector<64x64xf32>,
    %c0_6 = arith.constant 0 : index
    %c0_7 = arith.constant 0 : index
    %5 = vector.load %arg9[%c0_6, %c0_7] : memref<64x64xf32, #tpu.memory_space<vmem>>, vector<64x8xf32>
    %c0_8 = arith.constant 0 : index
    %c0_9 = arith.constant 0 : index
    %c0_10 = arith.constant 0 : index
    %6 = vector.load %arg3[%c0_8, %c0_9, %c0_10] : memref<1x64x16xf32, #tpu.memory_space<vmem>>, vector<1x8x16xf32>
    %7 = vector.shape_cast %6 : vector<1x8x16xf32> to vector<8x16xf32>
    %c0_11 = arith.constant 0 : index
    %c0_12 = arith.constant 0 : index
    %c0_13 = arith.constant 0 : index
    %8 = vector.load %arg4[%c0_11, %c0_12, %c0_13] : memref<1x16x64xf32, #tpu.memory_space<vmem>>, vector<1x16x8xf32>
    %9 = vector.shape_cast %8 : vector<1x16x8xf32> to vector<16x8xf32>
    %cst_14 = arith.constant dense<0.000000e+00> : vector<64x16xf32>
    %10 = tpu.matmul %5, %7, %cst_14 {dimension_numbers = #tpu.dot_dimension_numbers<[1], [0], [0], [1], [0, 0, 1, 1], [], []>} : vector<64x8xf32>, vector<8x16xf32>, vector<64x16xf32> -> vector<64x16xf32>
    %cst_15 = arith.constant dense<0xFF800000> : vector<64xf32>
    %11 = vector.multi_reduction <maximumf>, %10, %cst_15 [1] : vector<64x16xf32> to vector<64xf32>
    %12 = vector.shape_cast %11 : vector<64xf32> to vector<64x1xf32>
    %13 = vector.broadcast %12 : vector<64x1xf32> to vector<64x16xf32>
    %14 = arith.subf %10, %13 : vector<64x16xf32>
    %15 = math.exp %14 : vector<64x16xf32>
    %cst_16 = arith.constant dense<0.000000e+00> : vector<64xf32>
    %16 = vector.multi_reduction <add>, %15, %cst_16 [1] : vector<64x16xf32> to vector<64xf32>
    %17 = vector.shape_cast %16 : vector<64xf32> to vector<64x1xf32>
    %cst_17 = arith.constant dense<0.000000e+00> : vector<64x8xf32>
    %18 = tpu.matmul %15, %9, %cst_17 {dimension_numbers = #tpu.dot_dimension_numbers<[1], [0], [0], [1], [0, 0, 1, 1], [], []>} : vector<64x16xf32>, vector<16x8xf32>, vector<64x8xf32> -> vector<64x8xf32>
    %19 = tpu.reciprocal %17 {approx = true} : vector<64x1xf32> -> vector<64x1xf32>
    %20 = vector.broadcast %19 : vector<64x1xf32> to vector<64x8xf32>
    %21 = arith.mulf %18, %20 : vector<64x8xf32>
    %c0_18 = arith.constant 0 : index
    %c0_19 = arith.constant 0 : index
    %22 = vector.load %arg10[%c0_18, %c0_19] : memref<64x64xf32, #tpu.memory_space<vmem>>, vector<64x8xf32>
    tpu.vector_store %arg10[%c0_18, %c0_19], %21 {strides = array<i32>} : memref<64x64xf32, #tpu.memory_space<vmem>>, vector<64x8xf32>,
    %c0_20 = arith.constant 0 : index
    %c8 = arith.constant 8 : index
    %23 = vector.load %arg9[%c0_20, %c8] : memref<64x64xf32, #tpu.memory_space<vmem>>, vector<64x8xf32>
    %c0_21 = arith.constant 0 : index
    %c8_22 = arith.constant 8 : index
    %c0_23 = arith.constant 0 : index
    %24 = vector.load %arg3[%c0_21, %c8_22, %c0_23] : memref<1x64x16xf32, #tpu.memory_space<vmem>>, vector<1x8x16xf32>
    %25 = vector.shape_cast %24 : vector<1x8x16xf32> to vector<8x16xf32>
    %c0_24 = arith.constant 0 : index
    %c0_25 = arith.constant 0 : index
    %c8_26 = arith.constant 8 : index
    %26 = vector.load %arg4[%c0_24, %c0_25, %c8_26] : memref<1x16x64xf32, #tpu.memory_space<vmem>>, vector<1x16x8xf32>
    %27 = vector.shape_cast %26 : vector<1x16x8xf32> to vector<16x8xf32>
    %cst_27 = arith.constant dense<0.000000e+00> : vector<64x16xf32>
    %28 = tpu.matmul %23, %25, %cst_27 {dimension_numbers = #tpu.dot_dimension_numbers<[1], [0], [0], [1], [0, 0, 1, 1], [], []>} : vector<64x8xf32>, vector<8x16xf32>, vector<64x16xf32> -> vector<64x16xf32>
    %cst_28 = arith.constant dense<0xFF800000> : vector<64xf32>
    %29 = vector.multi_reduction <maximumf>, %28, %cst_28 [1] : vector<64x16xf32> to vector<64xf32>
    %30 = vector.shape_cast %29 : vector<64xf32> to vector<64x1xf32>
    %31 = vector.broadcast %30 : vector<64x1xf32> to vector<64x16xf32>
    %32 = arith.subf %28, %31 : vector<64x16xf32>
    %33 = math.exp %32 : vector<64x16xf32>
    %cst_29 = arith.constant dense<0.000000e+00> : vector<64xf32>
    %34 = vector.multi_reduction <add>, %33, %cst_29 [1] : vector<64x16xf32> to vector<64xf32>
    %35 = vector.shape_cast %34 : vector<64xf32> to vector<64x1xf32>
    %cst_30 = arith.constant dense<0.000000e+00> : vector<64x8xf32>
    %36 = tpu.matmul %33, %27, %cst_30 {dimension_numbers = #tpu.dot_dimension_numbers<[1], [0], [0], [1], [0, 0, 1, 1], [], []>} : vector<64x16xf32>, vector<16x8xf32>, vector<64x8xf32> -> vector<64x8xf32>
    %37 = tpu.reciprocal %35 {approx = true} : vector<64x1xf32> -> vector<64x1xf32>
    %38 = vector.broadcast %37 : vector<64x1xf32> to vector<64x8xf32>
    %39 = arith.mulf %36, %38 : vector<64x8xf32>
    %c0_31 = arith.constant 0 : index
    %c8_32 = arith.constant 8 : index
    %40 = vector.load %arg10[%c0_31, %c8_32] : memref<64x64xf32, #tpu.memory_space<vmem>>, vector<64x8xf32>
    tpu.vector_store %arg10[%c0_31, %c8_32], %39 {strides = array<i32>} : memref<64x64xf32, #tpu.memory_space<vmem>>, vector<64x8xf32>,
    %c0_33 = arith.constant 0 : index
    %c16 = arith.constant 16 : index
    %41 = vector.load %arg9[%c0_33, %c16] : memref<64x64xf32, #tpu.memory_space<vmem>>, vector<64x8xf32>
    %c0_34 = arith.constant 0 : index
    %c16_35 = arith.constant 16 : index
    %c0_36 = arith.constant 0 : index
    %42 = vector.load %arg3[%c0_34, %c16_35, %c0_36] : memref<1x64x16xf32, #tpu.memory_space<vmem>>, vector<1x8x16xf32>
    %43 = vector.shape_cast %42 : vector<1x8x16xf32> to vector<8x16xf32>
    %c0_37 = arith.constant 0 : index
    %c0_38 = arith.constant 0 : index
    %c16_39 = arith.constant 16 : index
    %44 = vector.load %arg4[%c0_37, %c0_38, %c16_39] : memref<1x16x64xf32, #tpu.memory_space<vmem>>, vector<1x16x8xf32>
    %45 = vector.shape_cast %44 : vector<1x16x8xf32> to vector<16x8xf32>
    %cst_40 = arith.constant dense<0.000000e+00> : vector<64x16xf32>
    %46 = tpu.matmul %41, %43, %cst_40 {dimension_numbers = #tpu.dot_dimension_numbers<[1], [0], [0], [1], [0, 0, 1, 1], [], []>} : vector<64x8xf32>, vector<8x16xf32>, vector<64x16xf32> -> vector<64x16xf32>
    %cst_41 = arith.constant dense<0xFF800000> : vector<64xf32>
    %47 = vector.multi_reduction <maximumf>, %46, %cst_41 [1] : vector<64x16xf32> to vector<64xf32>
    %48 = vector.shape_cast %47 : vector<64xf32> to vector<64x1xf32>
    %49 = vector.broadcast %48 : vector<64x1xf32> to vector<64x16xf32>
    %50 = arith.subf %46, %49 : vector<64x16xf32>
    %51 = math.exp %50 : vector<64x16xf32>
    %cst_42 = arith.constant dense<0.000000e+00> : vector<64xf32>
    %52 = vector.multi_reduction <add>, %51, %cst_42 [1] : vector<64x16xf32> to vector<64xf32>
    %53 = vector.shape_cast %52 : vector<64xf32> to vector<64x1xf32>
    %cst_43 = arith.constant dense<0.000000e+00> : vector<64x8xf32>
    %54 = tpu.matmul %51, %45, %cst_43 {dimension_numbers = #tpu.dot_dimension_numbers<[1], [0], [0], [1], [0, 0, 1, 1], [], []>} : vector<64x16xf32>, vector<16x8xf32>, vector<64x8xf32> -> vector<64x8xf32>
    %55 = tpu.reciprocal %53 {approx = true} : vector<64x1xf32> -> vector<64x1xf32>
    %56 = vector.broadcast %55 : vector<64x1xf32> to vector<64x8xf32>
    %57 = arith.mulf %54, %56 : vector<64x8xf32>
    %c0_44 = arith.constant 0 : index
    %c16_45 = arith.constant 16 : index
    %58 = vector.load %arg10[%c0_44, %c16_45] : memref<64x64xf32, #tpu.memory_space<vmem>>, vector<64x8xf32>
    tpu.vector_store %arg10[%c0_44, %c16_45], %57 {strides = array<i32>} : memref<64x64xf32, #tpu.memory_space<vmem>>, vector<64x8xf32>,
    %c0_46 = arith.constant 0 : index
    %c24 = arith.constant 24 : index
    %59 = vector.load %arg9[%c0_46, %c24] : memref<64x64xf32, #tpu.memory_space<vmem>>, vector<64x8xf32>
    %c0_47 = arith.constant 0 : index
    %c24_48 = arith.constant 24 : index
    %c0_49 = arith.constant 0 : index
    %60 = vector.load %arg3[%c0_47, %c24_48, %c0_49] : memref<1x64x16xf32, #tpu.memory_space<vmem>>, vector<1x8x16xf32>
    %61 = vector.shape_cast %60 : vector<1x8x16xf32> to vector<8x16xf32>
    %c0_50 = arith.constant 0 : index
    %c0_51 = arith.constant 0 : index
    %c24_52 = arith.constant 24 : index
    %62 = vector.load %arg4[%c0_50, %c0_51, %c24_52] : memref<1x16x64xf32, #tpu.memory_space<vmem>>, vector<1x16x8xf32>
    %63 = vector.shape_cast %62 : vector<1x16x8xf32> to vector<16x8xf32>
    %cst_53 = arith.constant dense<0.000000e+00> : vector<64x16xf32>
    %64 = tpu.matmul %59, %61, %cst_53 {dimension_numbers = #tpu.dot_dimension_numbers<[1], [0], [0], [1], [0, 0, 1, 1], [], []>} : vector<64x8xf32>, vector<8x16xf32>, vector<64x16xf32> -> vector<64x16xf32>
    %cst_54 = arith.constant dense<0xFF800000> : vector<64xf32>
    %65 = vector.multi_reduction <maximumf>, %64, %cst_54 [1] : vector<64x16xf32> to vector<64xf32>
    %66 = vector.shape_cast %65 : vector<64xf32> to vector<64x1xf32>
    %67 = vector.broadcast %66 : vector<64x1xf32> to vector<64x16xf32>
    %68 = arith.subf %64, %67 : vector<64x16xf32>
    %69 = math.exp %68 : vector<64x16xf32>
    %cst_55 = arith.constant dense<0.000000e+00> : vector<64xf32>
    %70 = vector.multi_reduction <add>, %69, %cst_55 [1] : vector<64x16xf32> to vector<64xf32>
    %71 = vector.shape_cast %70 : vector<64xf32> to vector<64x1xf32>
    %cst_56 = arith.constant dense<0.000000e+00> : vector<64x8xf32>
    %72 = tpu.matmul %69, %63, %cst_56 {dimension_numbers = #tpu.dot_dimension_numbers<[1], [0], [0], [1], [0, 0, 1, 1], [], []>} : vector<64x16xf32>, vector<16x8xf32>, vector<64x8xf32> -> vector<64x8xf32>
    %73 = tpu.reciprocal %71 {approx = true} : vector<64x1xf32> -> vector<64x1xf32>
    %74 = vector.broadcast %73 : vector<64x1xf32> to vector<64x8xf32>
    %75 = arith.mulf %72, %74 : vector<64x8xf32>
    %c0_57 = arith.constant 0 : index
    %c24_58 = arith.constant 24 : index
    %76 = vector.load %arg10[%c0_57, %c24_58] : memref<64x64xf32, #tpu.memory_space<vmem>>, vector<64x8xf32>
    tpu.vector_store %arg10[%c0_57, %c24_58], %75 {strides = array<i32>} : memref<64x64xf32, #tpu.memory_space<vmem>>, vector<64x8xf32>,
    %c0_59 = arith.constant 0 : index
    %c32 = arith.constant 32 : index
    %77 = vector.load %arg9[%c0_59, %c32] : memref<64x64xf32, #tpu.memory_space<vmem>>, vector<64x8xf32>
    %c0_60 = arith.constant 0 : index
    %c32_61 = arith.constant 32 : index
    %c0_62 = arith.constant 0 : index
    %78 = vector.load %arg3[%c0_60, %c32_61, %c0_62] : memref<1x64x16xf32, #tpu.memory_space<vmem>>, vector<1x8x16xf32>
    %79 = vector.shape_cast %78 : vector<1x8x16xf32> to vector<8x16xf32>
    %c0_63 = arith.constant 0 : index
    %c0_64 = arith.constant 0 : index
    %c32_65 = arith.constant 32 : index
    %80 = vector.load %arg4[%c0_63, %c0_64, %c32_65] : memref<1x16x64xf32, #tpu.memory_space<vmem>>, vector<1x16x8xf32>
    %81 = vector.shape_cast %80 : vector<1x16x8xf32> to vector<16x8xf32>
    %cst_66 = arith.constant dense<0.000000e+00> : vector<64x16xf32>
    %82 = tpu.matmul %77, %79, %cst_66 {dimension_numbers = #tpu.dot_dimension_numbers<[1], [0], [0], [1], [0, 0, 1, 1], [], []>} : vector<64x8xf32>, vector<8x16xf32>, vector<64x16xf32> -> vector<64x16xf32>
    %cst_67 = arith.constant dense<0xFF800000> : vector<64xf32>
    %83 = vector.multi_reduction <maximumf>, %82, %cst_67 [1] : vector<64x16xf32> to vector<64xf32>
    %84 = vector.shape_cast %83 : vector<64xf32> to vector<64x1xf32>
    %85 = vector.broadcast %84 : vector<64x1xf32> to vector<64x16xf32>
    %86 = arith.subf %82, %85 : vector<64x16xf32>
    %87 = math.exp %86 : vector<64x16xf32>
    %cst_68 = arith.constant dense<0.000000e+00> : vector<64xf32>
    %88 = vector.multi_reduction <add>, %87, %cst_68 [1] : vector<64x16xf32> to vector<64xf32>
    %89 = vector.shape_cast %88 : vector<64xf32> to vector<64x1xf32>
    %cst_69 = arith.constant dense<0.000000e+00> : vector<64x8xf32>
    %90 = tpu.matmul %87, %81, %cst_69 {dimension_numbers = #tpu.dot_dimension_numbers<[1], [0], [0], [1], [0, 0, 1, 1], [], []>} : vector<64x16xf32>, vector<16x8xf32>, vector<64x8xf32> -> vector<64x8xf32>
    %91 = tpu.reciprocal %89 {approx = true} : vector<64x1xf32> -> vector<64x1xf32>
    %92 = vector.broadcast %91 : vector<64x1xf32> to vector<64x8xf32>
    %93 = arith.mulf %90, %92 : vector<64x8xf32>
    %c0_70 = arith.constant 0 : index
    %c32_71 = arith.constant 32 : index
    %94 = vector.load %arg10[%c0_70, %c32_71] : memref<64x64xf32, #tpu.memory_space<vmem>>, vector<64x8xf32>
    tpu.vector_store %arg10[%c0_70, %c32_71], %93 {strides = array<i32>} : memref<64x64xf32, #tpu.memory_space<vmem>>, vector<64x8xf32>,
    %c0_72 = arith.constant 0 : index
    %c40 = arith.constant 40 : index
    %95 = vector.load %arg9[%c0_72, %c40] : memref<64x64xf32, #tpu.memory_space<vmem>>, vector<64x8xf32>
    %c0_73 = arith.constant 0 : index
    %c40_74 = arith.constant 40 : index
    %c0_75 = arith.constant 0 : index
    %96 = vector.load %arg3[%c0_73, %c40_74, %c0_75] : memref<1x64x16xf32, #tpu.memory_space<vmem>>, vector<1x8x16xf32>
    %97 = vector.shape_cast %96 : vector<1x8x16xf32> to vector<8x16xf32>
    %c0_76 = arith.constant 0 : index
    %c0_77 = arith.constant 0 : index
    %c40_78 = arith.constant 40 : index
    %98 = vector.load %arg4[%c0_76, %c0_77, %c40_78] : memref<1x16x64xf32, #tpu.memory_space<vmem>>, vector<1x16x8xf32>
    %99 = vector.shape_cast %98 : vector<1x16x8xf32> to vector<16x8xf32>
    %cst_79 = arith.constant dense<0.000000e+00> : vector<64x16xf32>
    %100 = tpu.matmul %95, %97, %cst_79 {dimension_numbers = #tpu.dot_dimension_numbers<[1], [0], [0], [1], [0, 0, 1, 1], [], []>} : vector<64x8xf32>, vector<8x16xf32>, vector<64x16xf32> -> vector<64x16xf32>
    %cst_80 = arith.constant dense<0xFF800000> : vector<64xf32>
    %101 = vector.multi_reduction <maximumf>, %100, %cst_80 [1] : vector<64x16xf32> to vector<64xf32>
    %102 = vector.shape_cast %101 : vector<64xf32> to vector<64x1xf32>
    %103 = vector.broadcast %102 : vector<64x1xf32> to vector<64x16xf32>
    %104 = arith.subf %100, %103 : vector<64x16xf32>
    %105 = math.exp %104 : vector<64x16xf32>
    %cst_81 = arith.constant dense<0.000000e+00> : vector<64xf32>
    %106 = vector.multi_reduction <add>, %105, %cst_81 [1] : vector<64x16xf32> to vector<64xf32>
    %107 = vector.shape_cast %106 : vector<64xf32> to vector<64x1xf32>
    %cst_82 = arith.constant dense<0.000000e+00> : vector<64x8xf32>
    %108 = tpu.matmul %105, %99, %cst_82 {dimension_numbers = #tpu.dot_dimension_numbers<[1], [0], [0], [1], [0, 0, 1, 1], [], []>} : vector<64x16xf32>, vector<16x8xf32>, vector<64x8xf32> -> vector<64x8xf32>
    %109 = tpu.reciprocal %107 {approx = true} : vector<64x1xf32> -> vector<64x1xf32>
    %110 = vector.broadcast %109 : vector<64x1xf32> to vector<64x8xf32>
    %111 = arith.mulf %108, %110 : vector<64x8xf32>
    %c0_83 = arith.constant 0 : index
    %c40_84 = arith.constant 40 : index
    %112 = vector.load %arg10[%c0_83, %c40_84] : memref<64x64xf32, #tpu.memory_space<vmem>>, vector<64x8xf32>
    tpu.vector_store %arg10[%c0_83, %c40_84], %111 {strides = array<i32>} : memref<64x64xf32, #tpu.memory_space<vmem>>, vector<64x8xf32>,
    %c0_85 = arith.constant 0 : index
    %c48 = arith.constant 48 : index
    %113 = vector.load %arg9[%c0_85, %c48] : memref<64x64xf32, #tpu.memory_space<vmem>>, vector<64x8xf32>
    %c0_86 = arith.constant 0 : index
    %c48_87 = arith.constant 48 : index
    %c0_88 = arith.constant 0 : index
    %114 = vector.load %arg3[%c0_86, %c48_87, %c0_88] : memref<1x64x16xf32, #tpu.memory_space<vmem>>, vector<1x8x16xf32>
    %115 = vector.shape_cast %114 : vector<1x8x16xf32> to vector<8x16xf32>
    %c0_89 = arith.constant 0 : index
    %c0_90 = arith.constant 0 : index
    %c48_91 = arith.constant 48 : index
    %116 = vector.load %arg4[%c0_89, %c0_90, %c48_91] : memref<1x16x64xf32, #tpu.memory_space<vmem>>, vector<1x16x8xf32>
    %117 = vector.shape_cast %116 : vector<1x16x8xf32> to vector<16x8xf32>
    %cst_92 = arith.constant dense<0.000000e+00> : vector<64x16xf32>
    %118 = tpu.matmul %113, %115, %cst_92 {dimension_numbers = #tpu.dot_dimension_numbers<[1], [0], [0], [1], [0, 0, 1, 1], [], []>} : vector<64x8xf32>, vector<8x16xf32>, vector<64x16xf32> -> vector<64x16xf32>
    %cst_93 = arith.constant dense<0xFF800000> : vector<64xf32>
    %119 = vector.multi_reduction <maximumf>, %118, %cst_93 [1] : vector<64x16xf32> to vector<64xf32>
    %120 = vector.shape_cast %119 : vector<64xf32> to vector<64x1xf32>
    %121 = vector.broadcast %120 : vector<64x1xf32> to vector<64x16xf32>
    %122 = arith.subf %118, %121 : vector<64x16xf32>
    %123 = math.exp %122 : vector<64x16xf32>
    %cst_94 = arith.constant dense<0.000000e+00> : vector<64xf32>
    %124 = vector.multi_reduction <add>, %123, %cst_94 [1] : vector<64x16xf32> to vector<64xf32>
    %125 = vector.shape_cast %124 : vector<64xf32> to vector<64x1xf32>
    %cst_95 = arith.constant dense<0.000000e+00> : vector<64x8xf32>
    %126 = tpu.matmul %123, %117, %cst_95 {dimension_numbers = #tpu.dot_dimension_numbers<[1], [0], [0], [1], [0, 0, 1, 1], [], []>} : vector<64x16xf32>, vector<16x8xf32>, vector<64x8xf32> -> vector<64x8xf32>
    %127 = tpu.reciprocal %125 {approx = true} : vector<64x1xf32> -> vector<64x1xf32>
    %128 = vector.broadcast %127 : vector<64x1xf32> to vector<64x8xf32>
    %129 = arith.mulf %126, %128 : vector<64x8xf32>
    %c0_96 = arith.constant 0 : index
    %c48_97 = arith.constant 48 : index
    %130 = vector.load %arg10[%c0_96, %c48_97] : memref<64x64xf32, #tpu.memory_space<vmem>>, vector<64x8xf32>
    tpu.vector_store %arg10[%c0_96, %c48_97], %129 {strides = array<i32>} : memref<64x64xf32, #tpu.memory_space<vmem>>, vector<64x8xf32>,
    %c0_98 = arith.constant 0 : index
    %c56 = arith.constant 56 : index
    %131 = vector.load %arg9[%c0_98, %c56] : memref<64x64xf32, #tpu.memory_space<vmem>>, vector<64x8xf32>
    %c0_99 = arith.constant 0 : index
    %c56_100 = arith.constant 56 : index
    %c0_101 = arith.constant 0 : index
    %132 = vector.load %arg3[%c0_99, %c56_100, %c0_101] : memref<1x64x16xf32, #tpu.memory_space<vmem>>, vector<1x8x16xf32>
    %133 = vector.shape_cast %132 : vector<1x8x16xf32> to vector<8x16xf32>
    %c0_102 = arith.constant 0 : index
    %c0_103 = arith.constant 0 : index
    %c56_104 = arith.constant 56 : index
    %134 = vector.load %arg4[%c0_102, %c0_103, %c56_104] : memref<1x16x64xf32, #tpu.memory_space<vmem>>, vector<1x16x8xf32>
    %135 = vector.shape_cast %134 : vector<1x16x8xf32> to vector<16x8xf32>
    %cst_105 = arith.constant dense<0.000000e+00> : vector<64x16xf32>
    %136 = tpu.matmul %131, %133, %cst_105 {dimension_numbers = #tpu.dot_dimension_numbers<[1], [0], [0], [1], [0, 0, 1, 1], [], []>} : vector<64x8xf32>, vector<8x16xf32>, vector<64x16xf32> -> vector<64x16xf32>
    %cst_106 = arith.constant dense<0xFF800000> : vector<64xf32>
    %137 = vector.multi_reduction <maximumf>, %136, %cst_106 [1] : vector<64x16xf32> to vector<64xf32>
    %138 = vector.shape_cast %137 : vector<64xf32> to vector<64x1xf32>
    %139 = vector.broadcast %138 : vector<64x1xf32> to vector<64x16xf32>
    %140 = arith.subf %136, %139 : vector<64x16xf32>
    %141 = math.exp %140 : vector<64x16xf32>
    %cst_107 = arith.constant dense<0.000000e+00> : vector<64xf32>
    %142 = vector.multi_reduction <add>, %141, %cst_107 [1] : vector<64x16xf32> to vector<64xf32>
    %143 = vector.shape_cast %142 : vector<64xf32> to vector<64x1xf32>
    %cst_108 = arith.constant dense<0.000000e+00> : vector<64x8xf32>
    %144 = tpu.matmul %141, %135, %cst_108 {dimension_numbers = #tpu.dot_dimension_numbers<[1], [0], [0], [1], [0, 0, 1, 1], [], []>} : vector<64x16xf32>, vector<16x8xf32>, vector<64x8xf32> -> vector<64x8xf32>
    %145 = tpu.reciprocal %143 {approx = true} : vector<64x1xf32> -> vector<64x1xf32>
    %146 = vector.broadcast %145 : vector<64x1xf32> to vector<64x8xf32>
    %147 = arith.mulf %144, %146 : vector<64x8xf32>
    %c0_109 = arith.constant 0 : index
    %c56_110 = arith.constant 56 : index
    %148 = vector.load %arg10[%c0_109, %c56_110] : memref<64x64xf32, #tpu.memory_space<vmem>>, vector<64x8xf32>
    tpu.vector_store %arg10[%c0_109, %c56_110], %147 {strides = array<i32>} : memref<64x64xf32, #tpu.memory_space<vmem>>, vector<64x8xf32>,
    %c0_111 = arith.constant 0 : index
    %c0_112 = arith.constant 0 : index
    %149 = vector.load %arg10[%c0_111, %c0_112] : memref<64x64xf32, #tpu.memory_space<vmem>>, vector<64x64xf32>
    %c0_113 = arith.constant 0 : index
    %c0_114 = arith.constant 0 : index
    %150 = vector.load %arg6[%c0_113, %c0_114] : memref<64x64xf32, #tpu.memory_space<vmem>>, vector<64x64xf32>
    %cst_115 = arith.constant dense<0.000000e+00> : vector<64x64xf32>
    %151 = tpu.matmul %149, %150, %cst_115 {dimension_numbers = #tpu.dot_dimension_numbers<[1], [0], [0], [1], [0, 0, 1, 1], [], []>} : vector<64x64xf32>, vector<64x64xf32>, vector<64x64xf32> -> vector<64x64xf32>
    %c0_116 = arith.constant 0 : index
    %c0_117 = arith.constant 0 : index
    %152 = vector.load %arg7[%c0_116, %c0_117] : memref<1x64xf32, #tpu.memory_space<vmem>>, vector<1x64xf32>
    %153 = vector.broadcast %152 : vector<1x64xf32> to vector<64x64xf32>
    %154 = arith.addf %151, %153 : vector<64x64xf32>
    %c0_118 = arith.constant 0 : index
    %c0_119 = arith.constant 0 : index
    %c0_120 = arith.constant 0 : index
    %155 = vector.load %arg8[%c0_118, %c0_119, %c0_120] : memref<1x64x64xf32, #tpu.memory_space<vmem>>, vector<1x64x64xf32>
    %156 = vector.shape_cast %155 : vector<1x64x64xf32> to vector<64x64xf32>
    %157 = vector.shape_cast %154 : vector<64x64xf32> to vector<1x64x64xf32>
    tpu.vector_store %arg8[%c0_118, %c0_119, %c0_120], %157 {strides = array<i32>} : memref<1x64x64xf32, #tpu.memory_space<vmem>>, vector<1x64x64xf32>,
    return
  }
  func.func @transform_0(%arg0: i32, %arg1: i32) -> (i32, i32, i32) {
    %c0_i32 = arith.constant 0 : i32
    %c0_i32_0 = arith.constant 0 : i32
    return %arg0, %arg1, %c0_i32 : i32, i32, i32
  }
  func.func @transform_1(%arg0: i32, %arg1: i32) -> (i32, i32, i32) {
    %c0_i32 = arith.constant 0 : i32
    %c0_i32_0 = arith.constant 0 : i32
    %c0_i32_1 = arith.constant 0 : i32
    return %arg0, %c0_i32, %c0_i32_0 : i32, i32, i32
  }
  func.func @transform_2(%arg0: i32, %arg1: i32) -> (i32, i32, i32) {
    %c0_i32 = arith.constant 0 : i32
    %c0_i32_0 = arith.constant 0 : i32
    %c0_i32_1 = arith.constant 0 : i32
    return %arg0, %c0_i32, %c0_i32_0 : i32, i32, i32
  }
  func.func @transform_3(%arg0: i32, %arg1: i32) -> (i32, i32) {
    %c0_i32 = arith.constant 0 : i32
    %c0_i32_0 = arith.constant 0 : i32
    %c0_i32_1 = arith.constant 0 : i32
    return %c0_i32, %c0_i32_0 : i32, i32
  }
  func.func @transform_4(%arg0: i32, %arg1: i32) -> (i32, i32) {
    %c0_i32 = arith.constant 0 : i32
    %c0_i32_0 = arith.constant 0 : i32
    %c0_i32_1 = arith.constant 0 : i32
    return %c0_i32, %c0_i32_0 : i32, i32
  }
  func.func @transform_5(%arg0: i32, %arg1: i32) -> (i32, i32) {
    %c0_i32 = arith.constant 0 : i32
    %c0_i32_0 = arith.constant 0 : i32
    %c0_i32_1 = arith.constant 0 : i32
    return %c0_i32, %c0_i32_0 : i32, i32
  }
  func.func @transform_6(%arg0: i32, %arg1: i32) -> (i32, i32, i32) {
    %c0_i32 = arith.constant 0 : i32
    %c0_i32_0 = arith.constant 0 : i32
    return %arg0, %arg1, %c0_i32 : i32, i32, i32
  }
}

</mosaic_0001>

<llo_original>
// kernel: attention_forward.2
$region0: #{attention_forward.2}
  #allocation0 [shape = 'u32[]', space=smem, size = 0x4, offset = 0x4, fixed_abs, tag = 'smem constant byte address 0x4 - core index']
  #allocation1 [shape = 'u32[144,128]{1,0:T(1,128)}', space=vmem, size = 0x12000, scoped, tag = 'internal scratch']
  %s0 = inlined_call_operand.vmem [shape: f32[2,16,256], index: 0, kind: input, shape index: {}]
  %s1 = inlined_call_operand.vmem [shape: f32[256,64], index: 1, kind: input, shape index: {}]
  %s2 = inlined_call_operand.vmem [shape: f32[1,64], index: 2, kind: input, shape index: {}]
  %s3 = inlined_call_operand.vmem [shape: f32[1,64], index: 3, kind: input, shape index: {}]
  %s4 = inlined_call_operand.vmem [shape: f32[1,64], index: 4, kind: input, shape index: {}]
  %s5 = inlined_call_operand.vmem [shape: f32[64,64], index: 5, kind: input, shape index: {}]
  %s6 = inlined_call_operand.vmem [shape: f32[64,64], index: 6, kind: input, shape index: {}]
  %s7 = inlined_call_operand.vmem [shape: f32[2,64,16], index: 7, kind: output, shape index: {0}]
  %s8 = inlined_call_operand.vmem [shape: f32[2,16,64], index: 8, kind: output, shape index: {1}]
  %9 = xla_tuple %s7, %s8
  %s10 = sld [smem:[#allocation0]]
  $region69: #{attention_forward.2} parent=0
    _
  %s12 = ssub.s32 1, %s10
  %s13 = scalar_select 0, %s12, %s10
  loop: start=0, step=1, limit=4
  $region2: #{attention_forward.2} parent=0 // loop_pre_header
    _
  $region3: #{attention_forward.2} parent=0 // loop_header
    %s15 = sphi 0, %s19
    %p16 = scmp.ge.s32.totalorder %s15, 4
    %s22 = sphi 0, %s34
    %s23 = sphi 0, %s30
    %s24 = sphi 0, %s22
    %s25 = sphi 0, %s23
    %s26 = sphi 0, %s24
    %s27 = sphi 0, %s25
    %s39 = sphi 0, %s41
    %s42 = sphi 0, %s39
    %s43 = sphi 0, %s42
    %s59 = sphi 0, %s43
    %s63 = sphi 0, %s63
    %s65 = sphi 0, %s63
    %s66 = sphi 0, %s65
    %s80 = sphi 0, %s66
    %s84 = sphi 0, %s84
    %s86 = sphi 0, %s84
    %s87 = sphi 0, %s86
    %s101 = sphi 0, %s87
    %s105 = sphi 0, %s105
    %s107 = sphi 0, %s105
    %s108 = sphi 0, %s107
    %s122 = sphi 0, %s108
    %s126 = sphi 0, %s126
    %s128 = sphi 0, %s126
    %s129 = sphi 0, %s128
    %s143 = sphi 0, %s129
    %s147 = sphi 0, %s147
    %s149 = sphi 0, %s147
    %s150 = sphi 0, %s149
    %s164 = sphi 0, %s150
    %s168 = sphi 0, %s168
    %s170 = sphi 0, %s168
    %s171 = sphi 0, %s170
    %s185 = sphi 0, %s171
    %s193 = sphi 0, %s195
    %s196 = sphi 0, %s193
    %s197 = sphi 0, %s196
    %s213 = sphi 0, %s197
    %s221 = sphi 0, %s223
    %s224 = sphi 0, %s221
    %s225 = sphi 0, %s224
    %s241 = sphi 0, %s225
  $region4: #{attention_forward.2} parent=0 // loop_header_branch
    %18 = sbr.rel (%p16) target = $region8
  $region5: #{attention_forward.2} parent=0 // loop_body
    %s20 = ssub.s32 %s15, 1
    %s21 = ssub.s32 %s15, 2
    %s28 = sadd.s32 1, %s23
    %p29 = scmp.ge.s32.totalorder %s28, 1
    %s30 = scalar_select %p29, 0, %s28
    %s31 = sadd.s32 1, %s22
    %s32 = scalar_select %p29, %s31, %s22
    %p33 = scmp.ge.s32.totalorder %s32, 2
    %s34 = scalar_select %p33, 0, %s32
    %s35 = ssub.s32 %s22, %s34
    %s36 = ssub.s32 %s23, %s30
    %s37 = sor.u32 %s35, %s36
    %p38 = scmp.eq.s32.totalorder %s37, 0
    %s40 = sadd.s32 %s39, 1
    %s41 = scalar_select %p38, %s39, %s40
    %p44 = pneg %p38
    %p45 = scmp.eq.s32.totalorder %s15, 1
    %p46 = por %p44, %p45
    %p47 = scmp.ne.s32.totalorder %s39, %s42
    %p48 = scmp.eq.s32.totalorder %s15, 0
    %p49 = por %p47, %p48
    %p50 = scmp.ne.s32.totalorder %s39, %s42
    %p51 = scmp.eq.s32.totalorder %s20, 1
    %p52 = por %p50, %p51
    %p53 = scmp.ne.s32.totalorder %s42, %s43
    %p54 = scmp.eq.s32.totalorder %s20, 0
    %p55 = por %p53, %p54
    %p56 = scmp.ne.s32.totalorder %s42, %s43
    %p57 = scmp.eq.s32.totalorder %s21, 1
    %p58 = por %p56, %p57
    %p60 = scmp.ne.s32.totalorder %s43, %s59
    %p61 = scmp.eq.s32.totalorder %s21, 0
    %p62 = por %p60, %p61
    %s64 = sadd.s32 %s63, 1
    %p67 = scmp.eq.s32.totalorder %s15, 1
    %p68 = scmp.ne.s32.totalorder %s63, %s65
    %p69 = scmp.eq.s32.totalorder %s15, 0
    %p70 = por %p68, %p69
    %p71 = scmp.ne.s32.totalorder %s63, %s65
    %p72 = scmp.eq.s32.totalorder %s20, 1
    %p73 = por %p71, %p72
    %p74 = scmp.ne.s32.totalorder %s65, %s66
    %p75 = scmp.eq.s32.totalorder %s20, 0
    %p76 = por %p74, %p75
    %p77 = scmp.ne.s32.totalorder %s65, %s66
    %p78 = scmp.eq.s32.totalorder %s21, 1
    %p79 = por %p77, %p78
    %p81 = scmp.ne.s32.totalorder %s66, %s80
    %p82 = scmp.eq.s32.totalorder %s21, 0
    %p83 = por %p81, %p82
    %s85 = sadd.s32 %s84, 1
    %p88 = scmp.eq.s32.totalorder %s15, 1
    %p89 = scmp.ne.s32.totalorder %s84, %s86
    %p90 = scmp.eq.s32.totalorder %s15, 0
    %p91 = por %p89, %p90
    %p92 = scmp.ne.s32.totalorder %s84, %s86
    %p93 = scmp.eq.s32.totalorder %s20, 1
    %p94 = por %p92, %p93
    %p95 = scmp.ne.s32.totalorder %s86, %s87
    %p96 = scmp.eq.s32.totalorder %s20, 0
    %p97 = por %p95, %p96
    %p98 = scmp.ne.s32.totalorder %s86, %s87
    %p99 = scmp.eq.s32.totalorder %s21, 1
    %p100 = por %p98, %p99
    %p102 = scmp.ne.s32.totalorder %s87, %s101
    %p103 = scmp.eq.s32.totalorder %s21, 0
    %p104 = por %p102, %p103
    %s106 = sadd.s32 %s105, 1
    %p109 = scmp.eq.s32.totalorder %s15, 1
    %p110 = scmp.ne.s32.totalorder %s105, %s107
    %p111 = scmp.eq.s32.totalorder %s15, 0
    %p112 = por %p110, %p111
    %p113 = scmp.ne.s32.totalorder %s105, %s107
    %p114 = scmp.eq.s32.totalorder %s20, 1
    %p115 = por %p113, %p114
    %p116 = scmp.ne.s32.totalorder %s107, %s108
    %p117 = scmp.eq.s32.totalorder %s20, 0
    %p118 = por %p116, %p117
    %p119 = scmp.ne.s32.totalorder %s107, %s108
    %p120 = scmp.eq.s32.totalorder %s21, 1
    %p121 = por %p119, %p120
    %p123 = scmp.ne.s32.totalorder %s108, %s122
    %p124 = scmp.eq.s32.totalorder %s21, 0
    %p125 = por %p123, %p124
    %s127 = sadd.s32 %s126, 1
    %p130 = scmp.eq.s32.totalorder %s15, 1
    %p131 = scmp.ne.s32.totalorder %s126, %s128
    %p132 = scmp.eq.s32.totalorder %s15, 0
    %p133 = por %p131, %p132
    %p134 = scmp.ne.s32.totalorder %s126, %s128
    %p135 = scmp.eq.s32.totalorder %s20, 1
    %p136 = por %p134, %p135
    %p137 = scmp.ne.s32.totalorder %s128, %s129
    %p138 = scmp.eq.s32.totalorder %s20, 0
    %p139 = por %p137, %p138
    %p140 = scmp.ne.s32.totalorder %s128, %s129
    %p141 = scmp.eq.s32.totalorder %s21, 1
    %p142 = por %p140, %p141
    %p144 = scmp.ne.s32.totalorder %s129, %s143
    %p145 = scmp.eq.s32.totalorder %s21, 0
    %p146 = por %p144, %p145
    %s148 = sadd.s32 %s147, 1
    %p151 = scmp.eq.s32.totalorder %s15, 1
    %p152 = scmp.ne.s32.totalorder %s147, %s149
    %p153 = scmp.eq.s32.totalorder %s15, 0
    %p154 = por %p152, %p153
    %p155 = scmp.ne.s32.totalorder %s147, %s149
    %p156 = scmp.eq.s32.totalorder %s20, 1
    %p157 = por %p155, %p156
    %p158 = scmp.ne.s32.totalorder %s149, %s150
    %p159 = scmp.eq.s32.totalorder %s20, 0
    %p160 = por %p158, %p159
    %p161 = scmp.ne.s32.totalorder %s149, %s150
    %p162 = scmp.eq.s32.totalorder %s21, 1
    %p163 = por %p161, %p162
    %p165 = scmp.ne.s32.totalorder %s150, %s164
    %p166 = scmp.eq.s32.totalorder %s21, 0
    %p167 = por %p165, %p166
    %s169 = sadd.s32 %s168, 1
    %p172 = scmp.eq.s32.totalorder %s15, 1
    %p173 = scmp.ne.s32.totalorder %s168, %s170
    %p174 = scmp.eq.s32.totalorder %s15, 0
    %p175 = por %p173, %p174
    %p176 = scmp.ne.s32.totalorder %s168, %s170
    %p177 = scmp.eq.s32.totalorder %s20, 1
    %p178 = por %p176, %p177
    %p179 = scmp.ne.s32.totalorder %s170, %s171
    %p180 = scmp.eq.s32.totalorder %s20, 0
    %p181 = por %p179, %p180
    %p182 = scmp.ne.s32.totalorder %s170, %s171
    %p183 = scmp.eq.s32.totalorder %s21, 1
    %p184 = por %p182, %p183
    %p186 = scmp.ne.s32.totalorder %s171, %s185
    %p187 = scmp.eq.s32.totalorder %s21, 0
    %p188 = por %p186, %p187
    %s189 = ssub.s32 %s22, %s34
    %s190 = ssub.s32 %s23, %s30
    %s191 = sor.u32 %s189, %s190
    %p192 = scmp.eq.s32.totalorder %s191, 0
    %s194 = sadd.s32 %s193, 1
    %s195 = scalar_select %p192, %s193, %s194
    %p198 = pneg %p192
    %p199 = scmp.eq.s32.totalorder %s15, 1
    %p200 = por %p198, %p199
    %p201 = scmp.ne.s32.totalorder %s193, %s196
    %p202 = scmp.eq.s32.totalorder %s15, 0
    %p203 = por %p201, %p202
    %p204 = scmp.ne.s32.totalorder %s193, %s196
    %p205 = scmp.eq.s32.totalorder %s20, 1
    %p206 = por %p204, %p205
    %p207 = scmp.ne.s32.totalorder %s196, %s197
    %p208 = scmp.eq.s32.totalorder %s20, 0
    %p209 = por %p207, %p208
    %p210 = scmp.ne.s32.totalorder %s196, %s197
    %p211 = scmp.eq.s32.totalorder %s21, 1
    %p212 = por %p210, %p211
    %p214 = scmp.ne.s32.totalorder %s197, %s213
    %p215 = scmp.eq.s32.totalorder %s21, 0
    %p216 = por %p214, %p215
    %s217 = ssub.s32 %s22, %s34
    %s218 = ssub.s32 %s23, %s30
    %s219 = sor.u32 %s217, %s218
    %p220 = scmp.eq.s32.totalorder %s219, 0
    %s222 = sadd.s32 %s221, 1
    %s223 = scalar_select %p220, %s221, %s222
    %p226 = pneg %p220
    %p227 = scmp.eq.s32.totalorder %s15, 1
    %p228 = por %p226, %p227
    %p229 = scmp.ne.s32.totalorder %s221, %s224
    %p230 = scmp.eq.s32.totalorder %s15, 0
    %p231 = por %p229, %p230
    %p232 = scmp.ne.s32.totalorder %s221, %s224
    %p233 = scmp.eq.s32.totalorder %s20, 1
    %p234 = por %p232, %p233
    %p235 = scmp.ne.s32.totalorder %s224, %s225
    %p236 = scmp.eq.s32.totalorder %s20, 0
    %p237 = por %p235, %p236
    %p238 = scmp.ne.s32.totalorder %s224, %s225
    %p239 = scmp.eq.s32.totalorder %s21, 1
    %p240 = por %p238, %p239
    %p242 = scmp.ne.s32.totalorder %s225, %s241
    %p243 = scmp.eq.s32.totalorder %s21, 0
    %p244 = por %p242, %p243
    %p245 = scmp.le.s32.totalorder 1, %s15
    %p246 = scmp.lt.s32.totalorder %s15, 3
    %p247 = pnand %p245, %p246
    %p248 = pneg %p247
    // Predicated region
    $region9: #{attention_forward.2} parent=5 // pred_check
      _
    $region10: #{attention_forward.2} parent=5 // pred_check_branch
      %250 = sbr.rel (%p247) target = $region12
    $region11: #{attention_forward.2} parent=5 // pred_region
      %s251 = ssub.s32 %s15, 1
      // Predicated region
      $region13: #{attention_forward.2} parent=11 // pred_check
        %p252 = pneg %p76
      $region14: #{attention_forward.2} parent=11 // pred_check_branch
        %254 = sbr.rel (%p252) target = $region16
      $region15: #{attention_forward.2} parent=11 // pred_region
        _
      $region16: #{attention_forward.2} parent=11 // pred_fallthru
        _
      // Predicated region
      $region17: #{attention_forward.2} parent=11 // pred_check
        %p255 = pneg %p97
      $region18: #{attention_forward.2} parent=11 // pred_check_branch
        %257 = sbr.rel (%p255) target = $region20
      $region19: #{attention_forward.2} parent=11 // pred_region
        _
      $region20: #{attention_forward.2} parent=11 // pred_fallthru
        _
      // Predicated region
      $region21: #{attention_forward.2} parent=11 // pred_check
        %p258 = pneg %p118
      $region22: #{attention_forward.2} parent=11 // pred_check_branch
        %260 = sbr.rel (%p258) target = $region24
      $region23: #{attention_forward.2} parent=11 // pred_region
        _
      $region24: #{attention_forward.2} parent=11 // pred_fallthru
        _
      // Predicated region
      $region25: #{attention_forward.2} parent=11 // pred_check
        %p261 = pneg %p139
      $region26: #{attention_forward.2} parent=11 // pred_check_branch
        %263 = sbr.rel (%p261) target = $region28
      $region27: #{attention_forward.2} parent=11 // pred_region
        _
      $region28: #{attention_forward.2} parent=11 // pred_fallthru
        _
      // Predicated region
      $region29: #{attention_forward.2} parent=11 // pred_check
        %p264 = pneg %p160
      $region30: #{attention_forward.2} parent=11 // pred_check_branch
        %266 = sbr.rel (%p264) target = $region32
      $region31: #{attention_forward.2} parent=11 // pred_region
        _
      $region32: #{attention_forward.2} parent=11 // pred_fallthru
        _
      // Predicated region
      $region33: #{attention_forward.2} parent=11 // pred_check
        %p267 = pneg %p181
      $region34: #{attention_forward.2} parent=11 // pred_check_branch
        %269 = sbr.rel (%p267) target = $region36
      $region35: #{attention_forward.2} parent=11 // pred_region
        _
      $region36: #{attention_forward.2} parent=11 // pred_fallthru
        _
    $region12: #{attention_forward.2} parent=5 // pred_fallthru
      _
    %p270 = scmp.lt.s32.totalorder %s15, 2
    // Predicated region
    $region37: #{attention_forward.2} parent=5 // pred_check
      %p271 = pneg %p270
    $region38: #{attention_forward.2} parent=5 // pred_check_branch
      %273 = sbr.rel (%p271) target = $region40
    $region39: #{attention_forward.2} parent=5 // pred_region
      // Predicated region
      $region41: #{attention_forward.2} parent=39 // pred_check
        %p274 = pneg %p49
      $region42: #{attention_forward.2} parent=39 // pred_check_branch
        %276 = sbr.rel (%p274) target = $region44
      $region43: #{attention_forward.2} parent=39 // pred_region
        %s277 = smul.u32 2, %s23
        %p278 = scmp.lt.s32.totalorder %s22, 1
        %s279 = scalar_select %p278, %s22, 1
        %p280 = scmp.lt.s32.totalorder %s277, 1
        %s281 = scalar_select %p280, %s277, 1
        %s282 = smul.addr %s281, 2
        %s283 = smul.addr %s279, 4
        %s284 = sadd.s32 %s282, %s283
        %s285 = smul.addr %s284, 8
        %s286 = scalar_lea.vmem %s0, %s285
        %s287 = smul.u32 2, %s23
      $region44: #{attention_forward.2} parent=39 // pred_fallthru
        _
    $region40: #{attention_forward.2} parent=5 // pred_fallthru
      _
    %p288 = scmp.le.s32.totalorder 1, %s15
    %p289 = scmp.lt.s32.totalorder %s15, 3
    %p290 = pnand %p288, %p289
    %p291 = pneg %p290
    // Predicated region
    $region45: #{attention_forward.2} parent=5 // pred_check
      _
    $region46: #{attention_forward.2} parent=5 // pred_check_branch
      %293 = sbr.rel (%p290) target = $region48
    $region47: #{attention_forward.2} parent=5 // pred_region
      %s294 = ssub.s32 %s15, 1
      %s295 = smul.u32 2, %s25
      %p296 = scmp.lt.s32.totalorder %s24, 1
      %s297 = scalar_select %p296, %s24, 1
      %p298 = scmp.lt.s32.totalorder %s295, 1
      %s299 = scalar_select %p298, %s295, 1
      %s300 = smul.addr %s299, 2
      %s301 = smul.addr %s297, 4
      %s302 = sadd.s32 %s300, %s301
      %s303 = smul.addr %s302, 8
      %s304 = scalar_lea.vmem %s0, %s303
      %p305 = pneg %p55
      %p306 = pneg %p52
      %p307 = pneg %p76
      %p308 = pneg %p73
      %p309 = pneg %p97
      %p310 = pneg %p94
      %p311 = pneg %p118
      %p312 = pneg %p115
      %p313 = pneg %p139
      %p314 = pneg %p136
      %p315 = pneg %p160
      %p316 = pneg %p157
      %p317 = pneg %p181
      %p318 = pneg %p178
      %p319 = pneg %p209
      %p320 = pneg %p206
      %p321 = scmp.lt.s32.totalorder %s24, 1
      %s322 = scalar_select %p321, %s24, 1
      %p323 = scmp.lt.s32.totalorder %s25, 0
      %s324 = scalar_select %p323, %s25, 0
      %s325 = smul.addr %s322, 8
      %s326 = sadd.s32 %s324, %s325
      %s327 = smul.addr %s326, 8
      %s328 = scalar_lea.vmem %s7, %s327
      %p329 = pneg %p237
      %p330 = pneg %p234
      %s331 = smul.u32 2, %s25
      %p332 = scmp.lt.s32.totalorder %s24, 1
      %s333 = scalar_select %p332, %s24, 1
      %p334 = scmp.lt.s32.totalorder %s331, 1
      %s335 = scalar_select %p334, %s331, 1
      %s336 = smul.addr %s333, 2
      %s337 = sadd.s32 %s335, %s336
      %s338 = smul.addr %s337, 8
      %s339 = scalar_lea.vmem %s8, %s338
      %s340 = smul.u32 2, %s25
      %p341 = scmp.lt.s32.totalorder %s24, 1
      %s342 = scalar_select %p341, %s24, 1
      %p343 = scmp.lt.s32.totalorder %s340, 1
      %s344 = scalar_select %p343, %s340, 1
      %s345 = smul.addr %s344, 2
      %s346 = smul.addr %s342, 4
      %s347 = sadd.s32 %s345, %s346
      %s348 = smul.addr %s347, 8
      %s349 = scalar_lea.vmem %s0, %s348
      %s350 = smul.u32 2, %s25
      %p351 = scmp.lt.s32.totalorder %s24, 1
      %s352 = scalar_select %p351, %s24, 1
      %p353 = scmp.lt.s32.totalorder %s25, 0
      %s354 = scalar_select %p353, %s25, 0
      %s355 = smul.addr %s352, 8
      %s356 = sadd.s32 %s354, %s355
      %s357 = smul.addr %s356, 8
      %s358 = scalar_lea.vmem %s7, %s357
      %s359 = smul.u32 2, %s25
      %p360 = scmp.lt.s32.totalorder %s24, 1
      %s361 = scalar_select %p360, %s24, 1
      %p362 = scmp.lt.s32.totalorder %s359, 1
      %s363 = scalar_select %p362, %s359, 1
      %s364 = smul.addr %s361, 2
      %s365 = sadd.s32 %s363, %s364
      %s366 = smul.addr %s365, 8
      %s367 = scalar_lea.vmem %s8, %s366
      %s368 = smul.u32 2, %s25
      %v369 = vld [vmem:[%s349] sm:$0xff]
      %v370 = vld [vmem:[%s349 + $0x8] sm:$0xff]
      %v371 = vld [vmem:[%s349 + $0x10] sm:$0xff]
      %v372 = vld [vmem:[%s349 + $0x18] sm:$0xff]
      %v373 = vld [vmem:[%s1] sm:$0xff]
      %v374 = vld [vmem:[%s1 + $0x8] sm:$0xff]
      %v375 = vld [vmem:[%s1 + $0x10] sm:$0xff]
      %v376 = vld [vmem:[%s1 + $0x18] sm:$0xff]
      %v377 = vld [vmem:[%s1 + $0x20] sm:$0xff]
      %v378 = vld [vmem:[%s1 + $0x28] sm:$0xff]
      %v379 = vld [vmem:[%s1 + $0x30] sm:$0xff]
      %v380 = vld [vmem:[%s1 + $0x38] sm:$0xff]
      %v381 = vld [vmem:[%s1 + $0x40] sm:$0xff]
      %v382 = vld [vmem:[%s1 + $0x48] sm:$0xff]
      %v383 = vld [vmem:[%s1 + $0x50] sm:$0xff]
      %v384 = vld [vmem:[%s1 + $0x58] sm:$0xff]
      %v385 = vld [vmem:[%s1 + $0x60] sm:$0xff]
      %v386 = vld [vmem:[%s1 + $0x68] sm:$0xff]
      %v387 = vld [vmem:[%s1 + $0x70] sm:$0xff]
      %v388 = vld [vmem:[%s1 + $0x78] sm:$0xff]
      %v389 = vld [vmem:[%s1 + $0x80] sm:$0xff]
      %v390 = vld [vmem:[%s1 + $0x88] sm:$0xff]
      %v391 = vld [vmem:[%s1 + $0x90] sm:$0xff]
      %v392 = vld [vmem:[%s1 + $0x98] sm:$0xff]
      %v393 = vld [vmem:[%s1 + $0xa0] sm:$0xff]
      %v394 = vld [vmem:[%s1 + $0xa8] sm:$0xff]
      %v395 = vld [vmem:[%s1 + $0xb0] sm:$0xff]
      %v396 = vld [vmem:[%s1 + $0xb8] sm:$0xff]
      %v397 = vld [vmem:[%s1 + $0xc0] sm:$0xff]
      %v398 = vld [vmem:[%s1 + $0xc8] sm:$0xff]
      %v399 = vld [vmem:[%s1 + $0xd0] sm:$0xff]
      %v400 = vld [vmem:[%s1 + $0xd8] sm:$0xff]
      %v401 = vld [vmem:[%s1 + $0xe0] sm:$0xff]
      %v402 = vld [vmem:[%s1 + $0xe8] sm:$0xff]
      %v403 = vld [vmem:[%s1 + $0xf0] sm:$0xff]
      %v404 = vld [vmem:[%s1 + $0xf8] sm:$0xff]
      %v405 = vld [vmem:[%s2] sm:$0x1]
      %v407 = vlaneseq
      %v408 = vshrl.u32 %v407, 7
      %v409 = vsub.s32 0, %v408
      %v410 = vrot.slane %v405, %v409
      %412 = vmatprep.subr.mxu0 0.0
      %413 = vmatpush1.msra.mxu0 %v373
      %414 = vmatprep.subr.mxu0 0.0
      %415 = vmatpush1.msra.mxu0 %v374
      %416 = vmatprep.subr.mxu0 0.0
      %417 = vmatpush1.msra.mxu0 %v375
      %418 = vmatprep.subr.mxu0 0.0
      %419 = vmatpush1.msra.mxu0 %v376
      %420 = vmatprep.subr.mxu0 0.0
      %421 = vmatpush1.msra.mxu0 %v377
      %422 = vmatprep.subr.mxu0 0.0
      %423 = vmatpush1.msra.mxu0 %v378
      %424 = vmatprep.subr.mxu0 0.0
      %425 = vmatpush1.msra.mxu0 %v379
      %426 = vmatprep.subr.mxu0 0.0
      %427 = vmatpush1.msra.mxu0 %v380
      %428 = vmatprep.subr.mxu0 0.0
      %429 = vmatpush1.msra.mxu0 %v381
      %430 = vmatprep.subr.mxu0 0.0
      %431 = vmatpush1.msra.mxu0 %v382
      %432 = vmatprep.subr.mxu0 0.0
      %433 = vmatpush1.msra.mxu0 %v383
      %434 = vmatprep.subr.mxu0 0.0
      %435 = vmatpush1.msra.mxu0 %v384
      %436 = vmatprep.subr.mxu0 0.0
      %437 = vmatpush1.msra.mxu0 %v385
      %438 = vmatprep.subr.mxu0 0.0
      %439 = vmatpush1.msra.mxu0 %v386
      %440 = vmatprep.subr.mxu0 0.0
      %441 = vmatpush1.msra.mxu0 %v387
      %442 = vmatprep.subr.mxu0 0.0
      %443 = vmatpush1.msra.mxu0 %v388
      %444 = vmatprep.subr.mxu0 0.0
      %445 = vmatpush1.msra.mxu0 %v389
      %446 = vmatprep.subr.mxu0 0.0
      %447 = vmatpush1.msra.mxu0 %v390
      %448 = vmatprep.subr.mxu0 0.0
      %449 = vmatpush1.msra.mxu0 %v391
      %450 = vmatprep.subr.mxu0 0.0
      %451 = vmatpush1.msra.mxu0 %v392
      %452 = vmatprep.subr.mxu0 0.0
      %453 = vmatpush1.msra.mxu0 %v393
      %454 = vmatprep.subr.mxu0 0.0
      %455 = vmatpush1.msra.mxu0 %v394
      %456 = vmatprep.subr.mxu0 0.0
      %457 = vmatpush1.msra.mxu0 %v395
      %458 = vmatprep.subr.mxu0 0.0
      %459 = vmatpush1.msra.mxu0 %v396
      %460 = vmatprep.subr.mxu0 0.0
      %461 = vmatpush1.msra.mxu0 %v397
      %462 = vmatprep.subr.mxu0 0.0
      %463 = vmatpush1.msra.mxu0 %v398
      %464 = vmatprep.subr.mxu0 0.0
      %465 = vmatpush1.msra.mxu0 %v399
      %466 = vmatprep.subr.mxu0 0.0
      %467 = vmatpush1.msra.mxu0 %v400
      %468 = vmatprep.subr.mxu0 0.0
      %469 = vmatpush1.msra.mxu0 %v401
      %470 = vmatprep.subr.mxu0 0.0
      %471 = vmatpush1.msra.mxu0 %v402
      %472 = vmatprep.subr.mxu0 0.0
      %473 = vmatpush1.msra.mxu0 %v403
      %474 = vmatprep.subr.mxu0 0.0
      %475 = vmatpush1.msra.mxu0 %v404
      %476 = vmatprep.mubr.f32.mxu0 %v370
      %477 = vmatmul.mubr.f32.gmra.mrb[0].mxu0 %v369
      %v478 = vpop.f32.mrb[0].mxu0
      %v479 = vadd.f32 %v410, %v478
      %v480 = vpop.f32.mrb[0].mxu0
      %481 = vmatprep.mubr.f32.mxu0 %v372
      %482 = vmatmul.mubr.f32.gmra.mrb[0].mxu0 %v371
      %v483 = vpop.f32.mrb[0].mxu0
      %v484 = vadd.f32 %v410, %v483
      %v485 = vpop.f32.mrb[0].mxu0
      %486 = vdwg.mxu0
      %vm487 = vcmask 523264
      %v488 = vsel %vm487, %v479, 0.0
      %489 = vadd.xlane.f32.xlu0 %v488
      %v490 = vpop.xlane.xlu0 %489
      %v491 = vsel %vm487, %v484, 0.0
      %492 = vadd.xlane.f32.xlu0 %v491
      %v493 = vpop.xlane.xlu0 %492
      %v494 = vrcp.pop 64.0
      %v495 = vmul.f32 %v490, %v494
      %v496 = vmul.f32 %v493, %v494
      %v497 = vsub.f32 %v479, %v495
      %v498 = vsub.f32 %v484, %v496
      %v499 = vmul.f32 %v497, %v497
      %v500 = vmul.f32 %v498, %v498
      %v501 = vsel %vm487, %v499, 0.0
      %502 = vadd.xlane.f32.xlu0 %v501
      %v503 = vpop.xlane.xlu0 %502
      %v504 = vsel %vm487, %v500, 0.0
      %505 = vadd.xlane.f32.xlu0 %v504
      %v506 = vpop.xlane.xlu0 %505
      %v507 = vmul.f32 %v503, %v494
      %v508 = vmul.f32 %v506, %v494
      %v509 = vadd.f32 %v507, 1e-05
      %v510 = vadd.f32 %v508, 1e-05
      %v511 = vrsqrt.pop %v509
      %v512 = vrsqrt.pop %v510
      %v513 = vmul.f32 %v497, %v511
      %v514 = vmul.f32 %v498, %v512
      %v515 = vld [vmem:[%s3] sm:$0x1]
      %v517 = vlaneseq
      %v518 = vshrl.u32 %v517, 7
      %v519 = vsub.s32 0, %v518
      %v520 = vrot.slane %v515, %v519
      %v522 = vmul.f32 %v513, %v520
      %v523 = vmul.f32 %v514, %v520
      %v524 = vld [vmem:[%s4] sm:$0x1]
      %v526 = vlaneseq
      %v527 = vshrl.u32 %v526, 7
      %v528 = vsub.s32 0, %v527
      %v529 = vrot.slane %v524, %v528
      %v531 = vadd.f32 %v522, %v529
      %v532 = vadd.f32 %v523, %v529
      %v533 = vld [vmem:[%s5] sm:$0xff]
      %v534 = vld [vmem:[%s5 + $0x8] sm:$0xff]
      %v535 = vld [vmem:[%s5 + $0x10] sm:$0xff]
      %v536 = vld [vmem:[%s5 + $0x18] sm:$0xff]
      %v537 = vld [vmem:[%s5 + $0x20] sm:$0xff]
      %v538 = vld [vmem:[%s5 + $0x28] sm:$0xff]
      %v539 = vld [vmem:[%s5 + $0x30] sm:$0xff]
      %v540 = vld [vmem:[%s5 + $0x38] sm:$0xff]
      %v542 = vsel %vm487, %v533, 0
      %v545 = vsel %vm487, %v534, 0
      %v548 = vsel %vm487, %v535, 0
      %v551 = vsel %vm487, %v536, 0
      %v554 = vsel %vm487, %v537, 0
      %v557 = vsel %vm487, %v538, 0
      %v560 = vsel %vm487, %v539, 0
      %v563 = vsel %vm487, %v540, 0
      %v566 = vsel %vm487, %v531, 0
      %v569 = vsel %vm487, %v532, 0
      %571 = vmatprep.subr.mxu0 0.0
      %572 = vmatpush1.xpose.msra.mxu0 %v566
      %573 = vmatprep.subr.mxu0 0.0
      %574 = vmatpush1.xpose.msra.mxu0 %v569
      %575 = vmatprep.subr.mxu0 0.0
      %576 = vmatpush1.xpose.msra.mxu0 0.0
      %577 = vmatprep.subr.mxu0 0.0
      %578 = vmatpush1.xpose.msra.mxu0 0.0
      %579 = vmatprep.subr.mxu0 0.0
      %580 = vmatpush1.xpose.msra.mxu0 0.0
      %581 = vmatprep.subr.mxu0 0.0
      %582 = vmatpush1.xpose.msra.mxu0 0.0
      %583 = vmatprep.subr.mxu0 0.0
      %584 = vmatpush1.xpose.msra.mxu0 0.0
      %585 = vmatprep.subr.mxu0 0.0
      %586 = vmatpush1.xpose.msra.mxu0 0.0
      %587 = vmatprep.subr.mxu0 0.0
      %588 = vmatpush1.xpose.msra.mxu0 0.0
      %589 = vmatprep.subr.mxu0 0.0
      %590 = vmatpush1.xpose.msra.mxu0 0.0
      %591 = vmatprep.subr.mxu0 0.0
      %592 = vmatpush1.xpose.msra.mxu0 0.0
      %593 = vmatprep.subr.mxu0 0.0
      %594 = vmatpush1.xpose.msra.mxu0 0.0
      %595 = vmatprep.subr.mxu0 0.0
      %596 = vmatpush1.xpose.msra.mxu0 0.0
      %597 = vmatprep.subr.mxu0 0.0
      %598 = vmatpush1.xpose.msra.mxu0 0.0
      %599 = vmatprep.subr.mxu0 0.0
      %600 = vmatpush1.xpose.msra.mxu0 0.0
      %601 = vmatprep.subr.mxu0 0.0
      %602 = vmatpush1.xpose.msra.mxu0 0.0
      %603 = vmatprep.subr.mxu0 0.0
      %604 = vmatpush1.xpose.msra.mxu0 0.0
      %605 = vmatprep.subr.mxu0 0.0
      %606 = vmatpush1.xpose.msra.mxu0 0.0
      %607 = vmatprep.subr.mxu0 0.0
      %608 = vmatpush1.xpose.msra.mxu0 0.0
      %609 = vmatprep.subr.mxu0 0.0
      %610 = vmatpush1.xpose.msra.mxu0 0.0
      %611 = vmatprep.subr.mxu0 0.0
      %612 = vmatpush1.xpose.msra.mxu0 0.0
      %613 = vmatprep.subr.mxu0 0.0
      %614 = vmatpush1.xpose.msra.mxu0 0.0
      %615 = vmatprep.subr.mxu0 0.0
      %616 = vmatpush1.xpose.msra.mxu0 0.0
      %617 = vmatprep.subr.mxu0 0.0
      %618 = vmatpush1.xpose.msra.mxu0 0.0
      %619 = vmatprep.subr.mxu0 0.0
      %620 = vmatpush1.xpose.msra.mxu0 0.0
      %621 = vmatprep.subr.mxu0 0.0
      %622 = vmatpush1.xpose.msra.mxu0 0.0
      %623 = vmatprep.subr.mxu0 0.0
      %624 = vmatpush1.xpose.msra.mxu0 0.0
      %625 = vmatprep.subr.mxu0 0.0
      %626 = vmatpush1.xpose.msra.mxu0 0.0
      %627 = vmatprep.subr.mxu0 0.0
      %628 = vmatpush1.xpose.msra.mxu0 0.0
      %629 = vmatprep.subr.mxu0 0.0
      %630 = vmatpush1.xpose.msra.mxu0 0.0
      %631 = vmatprep.subr.mxu0 0.0
      %632 = vmatpush1.xpose.msra.mxu0 0.0
      %633 = vmatprep.subr.mxu0 0.0
      %634 = vmatpush1.xpose.msra.mxu0 0.0
      %635 = vmatprep.mubr.f32.mxu0 0.0
      %636 = vmatmul.mubr.f32.gmra.mrb[0].mxu0 %v542
      %v637 = vpop.f32.mrb[0].mxu0
      %v638 = vadd.f32 0.0, %v637
      %v639 = vpop.f32.mrb[0].mxu0
      %640 = vmatprep.mubr.f32.mxu0 0.0
      %641 = vmatmul.mubr.f32.gmra.mrb[0].mxu0 %v545
      %v642 = vpop.f32.mrb[0].mxu0
      %v643 = vadd.f32 0.0, %v642
      %v644 = vpop.f32.mrb[0].mxu0
      %645 = vmatprep.mubr.f32.mxu0 0.0
      %646 = vmatmul.mubr.f32.gmra.mrb[0].mxu0 %v548
      %v647 = vpop.f32.mrb[0].mxu0
      %v648 = vadd.f32 0.0, %v647
      %v649 = vpop.f32.mrb[0].mxu0
      %650 = vmatprep.mubr.f32.mxu0 0.0
      %651 = vmatmul.mubr.f32.gmra.mrb[0].mxu0 %v551
      %v652 = vpop.f32.mrb[0].mxu0
      %v653 = vadd.f32 0.0, %v652
      %v654 = vpop.f32.mrb[0].mxu0
      %655 = vmatprep.mubr.f32.mxu0 0.0
      %656 = vmatmul.mubr.f32.gmra.mrb[0].mxu0 %v554
      %v657 = vpop.f32.mrb[0].mxu0
      %v658 = vadd.f32 0.0, %v657
      %v659 = vpop.f32.mrb[0].mxu0
      %660 = vmatprep.mubr.f32.mxu0 0.0
      %661 = vmatmul.mubr.f32.gmra.mrb[0].mxu0 %v557
      %v662 = vpop.f32.mrb[0].mxu0
      %v663 = vadd.f32 0.0, %v662
      %v664 = vpop.f32.mrb[0].mxu0
      %665 = vmatprep.mubr.f32.mxu0 0.0
      %666 = vmatmul.mubr.f32.gmra.mrb[0].mxu0 %v560
      %v667 = vpop.f32.mrb[0].mxu0
      %v668 = vadd.f32 0.0, %v667
      %v669 = vpop.f32.mrb[0].mxu0
      %670 = vmatprep.mubr.f32.mxu0 0.0
      %671 = vmatmul.mubr.f32.gmra.mrb[0].mxu0 %v563
      %v672 = vpop.f32.mrb[0].mxu0
      %v673 = vadd.f32 0.0, %v672
      %v674 = vpop.f32.mrb[0].mxu0
      %675 = vdwg.mxu0
      %v676 = vld [vmem:[%s6] sm:$0xff]
      %v677 = vld [vmem:[%s6 + $0x8] sm:$0xff]
      %v678 = vld [vmem:[%s6 + $0x10] sm:$0xff]
      %v679 = vld [vmem:[%s6 + $0x18] sm:$0xff]
      %v680 = vld [vmem:[%s6 + $0x20] sm:$0xff]
      %v681 = vld [vmem:[%s6 + $0x28] sm:$0xff]
      %v682 = vld [vmem:[%s6 + $0x30] sm:$0xff]
      %v683 = vld [vmem:[%s6 + $0x38] sm:$0xff]
      %684 = vmatprep.subr.mxu0 0.0
      %685 = vmatpush1.msra.mxu0 %v676
      %686 = vmatprep.subr.mxu0 0.0
      %687 = vmatpush1.msra.mxu0 %v677
      %688 = vmatprep.subr.mxu0 0.0
      %689 = vmatpush1.msra.mxu0 %v678
      %690 = vmatprep.subr.mxu0 0.0
      %691 = vmatpush1.msra.mxu0 %v679
      %692 = vmatprep.subr.mxu0 0.0
      %693 = vmatpush1.msra.mxu0 %v680
      %694 = vmatprep.subr.mxu0 0.0
      %695 = vmatpush1.msra.mxu0 %v681
      %696 = vmatprep.subr.mxu0 0.0
      %697 = vmatpush1.msra.mxu0 %v682
      %698 = vmatprep.subr.mxu0 0.0
      %699 = vmatpush1.msra.mxu0 %v683
      %700 = vmatprep.subr.mxu0 0.0
      %701 = vmatpush1.msra.mxu0 0.0
      %702 = vmatprep.subr.mxu0 0.0
      %703 = vmatpush1.msra.mxu0 0.0
      %704 = vmatprep.subr.mxu0 0.0
      %705 = vmatpush1.msra.mxu0 0.0
      %706 = vmatprep.subr.mxu0 0.0
      %707 = vmatpush1.msra.mxu0 0.0
      %708 = vmatprep.subr.mxu0 0.0
      %709 = vmatpush1.msra.mxu0 0.0
      %710 = vmatprep.subr.mxu0 0.0
      %711 = vmatpush1.msra.mxu0 0.0
      %712 = vmatprep.subr.mxu0 0.0
      %713 = vmatpush1.msra.mxu0 0.0
      %714 = vmatprep.subr.mxu0 0.0
      %715 = vmatpush1.msra.mxu0 0.0
      %716 = vmatprep.subr.mxu0 0.0
      %717 = vmatpush1.msra.mxu0 0.0
      %718 = vmatprep.subr.mxu0 0.0
      %719 = vmatpush1.msra.mxu0 0.0
      %720 = vmatprep.subr.mxu0 0.0
      %721 = vmatpush1.msra.mxu0 0.0
      %722 = vmatprep.subr.mxu0 0.0
      %723 = vmatpush1.msra.mxu0 0.0
      %724 = vmatprep.subr.mxu0 0.0
      %725 = vmatpush1.msra.mxu0 0.0
      %726 = vmatprep.subr.mxu0 0.0
      %727 = vmatpush1.msra.mxu0 0.0
      %728 = vmatprep.subr.mxu0 0.0
      %729 = vmatpush1.msra.mxu0 0.0
      %730 = vmatprep.subr.mxu0 0.0
      %731 = vmatpush1.msra.mxu0 0.0
      %732 = vmatprep.subr.mxu0 0.0
      %733 = vmatpush1.msra.mxu0 0.0
      %734 = vmatprep.subr.mxu0 0.0
      %735 = vmatpush1.msra.mxu0 0.0
      %736 = vmatprep.subr.mxu0 0.0
      %737 = vmatpush1.msra.mxu0 0.0
      %738 = vmatprep.subr.mxu0 0.0
      %739 = vmatpush1.msra.mxu0 0.0
      %740 = vmatprep.subr.mxu0 0.0
      %741 = vmatpush1.msra.mxu0 0.0
      %742 = vmatprep.subr.mxu0 0.0
      %743 = vmatpush1.msra.mxu0 0.0
      %744 = vmatprep.subr.mxu0 0.0
      %745 = vmatpush1.msra.mxu0 0.0
      %746 = vmatprep.subr.mxu0 0.0
      %747 = vmatpush1.msra.mxu0 0.0
      %748 = vmatprep.mubr.f32.mxu0 0.0
      %749 = vmatmul.mubr.f32.gmra.mrb[0].mxu0 %v566
      %v750 = vpop.f32.mrb[0].mxu0
      %v751 = vadd.f32 0.0, %v750
      %v752 = vpop.f32.mrb[0].mxu0
      %753 = vmatprep.mubr.f32.mxu0 0.0
      %754 = vmatmul.mubr.f32.gmra.mrb[0].mxu0 %v569
      %v755 = vpop.f32.mrb[0].mxu0
      %v756 = vadd.f32 0.0, %v755
      %v757 = vpop.f32.mrb[0].mxu0
      %758 = vdwg.mxu0
      %vm759 = vcmask 130048
      %760 = vst.msk [vmem:[%s358] sm:$0xff] %vm759, %v638
      %761 = vst.msk [vmem:[%s358 + $0x8] sm:$0xff] %vm759, %v643
      %762 = vst.msk [vmem:[%s358 + $0x10] sm:$0xff] %vm759, %v648
      %763 = vst.msk [vmem:[%s358 + $0x18] sm:$0xff] %vm759, %v653
      %764 = vst.msk [vmem:[%s358 + $0x20] sm:$0xff] %vm759, %v658
      %765 = vst.msk [vmem:[%s358 + $0x28] sm:$0xff] %vm759, %v663
      %766 = vst.msk [vmem:[%s358 + $0x30] sm:$0xff] %vm759, %v668
      %767 = vst.msk [vmem:[%s358 + $0x38] sm:$0xff] %vm759, %v673
      %768 = vst.msk [vmem:[%s367] sm:$0xff] %vm487, %v751
      %769 = vst.msk [vmem:[%s367 + $0x8] sm:$0xff] %vm487, %v756
      %p770 = scmp.lt.s32.totalorder %s24, 1
      %s771 = scalar_select %p770, %s24, 1
      %p772 = scmp.lt.s32.totalorder %s25, 0
      %s773 = scalar_select %p772, %s25, 0
      %s774 = smul.addr %s771, 8
      %s775 = sadd.s32 %s773, %s774
      %s776 = smul.addr %s775, 8
      %s777 = scalar_lea.vmem %s7, %s776
      %s778 = smul.u32 2, %s25
      %p779 = scmp.lt.s32.totalorder %s24, 1
      %s780 = scalar_select %p779, %s24, 1
      %p781 = scmp.lt.s32.totalorder %s778, 1
      %s782 = scalar_select %p781, %s778, 1
      %s783 = smul.addr %s780, 2
      %s784 = sadd.s32 %s782, %s783
      %s785 = smul.addr %s784, 8
      %s786 = scalar_lea.vmem %s8, %s785
      // Predicated region
      $region49: #{attention_forward.2} parent=47 // pred_check
        %p787 = pneg %p206
      $region50: #{attention_forward.2} parent=47 // pred_check_branch
        %789 = sbr.rel (%p787) target = $region52
      $region51: #{attention_forward.2} parent=47 // pred_region
        _
      $region52: #{attention_forward.2} parent=47 // pred_fallthru
        _
      // Predicated region
      $region53: #{attention_forward.2} parent=47 // pred_check
        %p790 = pneg %p234
      $region54: #{attention_forward.2} parent=47 // pred_check_branch
        %792 = sbr.rel (%p790) target = $region56
      $region55: #{attention_forward.2} parent=47 // pred_region
        %s793 = smul.u32 2, %s25
      $region56: #{attention_forward.2} parent=47 // pred_fallthru
        _
    $region48: #{attention_forward.2} parent=5 // pred_fallthru
      _
    %p794 = scmp.le.s32.totalorder 2, %s15
    // Predicated region
    $region57: #{attention_forward.2} parent=5 // pred_check
      %p795 = pneg %p794
    $region58: #{attention_forward.2} parent=5 // pred_check_branch
      %797 = sbr.rel (%p795) target = $region60
    $region59: #{attention_forward.2} parent=5 // pred_region
      %s798 = ssub.s32 %s15, 2
      // Predicated region
      $region61: #{attention_forward.2} parent=59 // pred_check
        %p799 = pneg %p212
      $region62: #{attention_forward.2} parent=59 // pred_check_branch
        %801 = sbr.rel (%p799) target = $region64
      $region63: #{attention_forward.2} parent=59 // pred_region
        %p802 = scmp.lt.s32.totalorder %s26, 1
        %s803 = scalar_select %p802, %s26, 1
        %p804 = scmp.lt.s32.totalorder %s27, 0
        %s805 = scalar_select %p804, %s27, 0
        %s806 = smul.addr %s803, 8
        %s807 = sadd.s32 %s805, %s806
        %s808 = smul.addr %s807, 8
        %s809 = scalar_lea.vmem %s7, %s808
      $region64: #{attention_forward.2} parent=59 // pred_fallthru
        _
      // Predicated region
      $region65: #{attention_forward.2} parent=59 // pred_check
        %p810 = pneg %p240
      $region66: #{attention_forward.2} parent=59 // pred_check_branch
        %812 = sbr.rel (%p810) target = $region68
      $region67: #{attention_forward.2} parent=59 // pred_region
        %s813 = smul.u32 2, %s27
        %p814 = scmp.lt.s32.totalorder %s26, 1
        %s815 = scalar_select %p814, %s26, 1
        %p816 = scmp.lt.s32.totalorder %s813, 1
        %s817 = scalar_select %p816, %s813, 1
        %s818 = smul.addr %s815, 2
        %s819 = sadd.s32 %s817, %s818
        %s820 = smul.addr %s819, 8
        %s821 = scalar_lea.vmem %s8, %s820
      $region68: #{attention_forward.2} parent=59 // pred_fallthru
        _
    $region60: #{attention_forward.2} parent=5 // pred_fallthru
      _
  $region6: #{attention_forward.2} parent=0 // loop_footer
    %s19 = sadd.s32 1, %s15
  $region7: #{attention_forward.2} parent=0 // loop_footer_branch
    %14 = sbr.rel target = $region3
  $region8: #{attention_forward.2} parent=0 // loop_exit
    _

// kernel: attention_forward.3
$region0: #{attention_forward.3}
  #allocation0 [shape = 'u32[]', space=smem, size = 0x4, offset = 0x4, fixed_abs, tag = 'smem constant byte address 0x4 - core index']
  #allocation1 [shape = 'u32[144,128]{1,0:T(1,128)}', space=vmem, size = 0x12000, scoped, tag = 'internal scratch']
  #allocation2 [shape = 'f32[64,64]{1,0:T(8,128)}', space=vmem, size = 0x8000, scoped, tag = 'scratch operand']
  #allocation3 [shape = 'f32[64,64]{1,0:T(8,128)}', space=vmem, size = 0x8000, scoped, tag = 'scratch operand']
  %s0 = inlined_call_operand.vmem [shape: f32[2,64,64], index: 0, kind: input, shape index: {}]
  %s1 = inlined_call_operand.vmem [shape: f32[2,64,16], index: 1, kind: input, shape index: {}]
  %s2 = inlined_call_operand.vmem [shape: f32[2,16,64], index: 2, kind: input, shape index: {}]
  %s3 = inlined_call_operand.vmem [shape: f32[64,64], index: 3, kind: input, shape index: {}]
  %s4 = inlined_call_operand.vmem [shape: f32[64,64], index: 4, kind: input, shape index: {}]
  %s5 = inlined_call_operand.vmem [shape: f32[1,64], index: 5, kind: input, shape index: {}]
  %s6 = inlined_call_operand.hbm [shape: f32[2,64,64], index: 6, kind: output, shape index: {}]
  %s7 = sld [smem:[#allocation0]]
  $region57: #{attention_forward.3} parent=0
    _
  %s9 = ssub.s32 1, %s7
  %s10 = scalar_select 0, %s9, %s7
  $region1: #{attention_forward.3} parent=0
    #allocation4 [shape = 'u8[65536]{0}', space=vmem, size = 0x10000, scoped, tag = 'output window, operand 0']
    #allocation5 [shape = 's32[2]{0}', space=sflag, size = 0x8, scoped, tag = 'scoped memory for attention_forward.3']
    %11 = vsyncpa [#allocation5], 0
    %s12 = scalar_lea.sflag [#allocation5], 1
    %13 = vsyncpa %s12, 0
    loop: start=0, step=1, limit=4
    $region2: #{attention_forward.3} parent=1 // loop_pre_header
      _
    $region3: #{attention_forward.3} parent=1 // loop_header
      %s15 = sphi 0, %s19
      %p16 = scmp.ge.s32.totalorder %s15, 4
      %s22 = sphi 0, %s34
      %s23 = sphi 0, %s30
      %s24 = sphi 0, %s22
      %s25 = sphi 0, %s23
      %s26 = sphi 0, %s24
      %s27 = sphi 0, %s25
      %s39 = sphi 0, %s41
      %s42 = sphi 0, %s39
      %s43 = sphi 0, %s42
      %s59 = sphi 0, %s43
      %s65 = sphi 0, %s67
      %s68 = sphi 0, %s65
      %s69 = sphi 0, %s68
      %s85 = sphi 0, %s69
      %s91 = sphi 0, %s93
      %s94 = sphi 0, %s91
      %s95 = sphi 0, %s94
      %s111 = sphi 0, %s95
      %s115 = sphi 0, %s115
      %s117 = sphi 0, %s115
      %s118 = sphi 0, %s117
      %s132 = sphi 0, %s118
      %s136 = sphi 0, %s136
      %s138 = sphi 0, %s136
      %s139 = sphi 0, %s138
      %s153 = sphi 0, %s139
      %s157 = sphi 0, %s157
      %s159 = sphi 0, %s157
      %s160 = sphi 0, %s159
      %s174 = sphi 0, %s160
      %s182 = sphi 0, %s184
      %s185 = sphi 0, %s182
      %s186 = sphi 0, %s185
      %s202 = sphi 0, %s186
    $region4: #{attention_forward.3} parent=1 // loop_header_branch
      %18 = sbr.rel (%p16) target = $region8
    $region5: #{attention_forward.3} parent=1 // loop_body
      %s20 = ssub.s32 %s15, 1
      %s21 = ssub.s32 %s15, 2
      %s28 = sadd.s32 1, %s23
      %p29 = scmp.ge.s32.totalorder %s28, 1
      %s30 = scalar_select %p29, 0, %s28
      %s31 = sadd.s32 1, %s22
      %s32 = scalar_select %p29, %s31, %s22
      %p33 = scmp.ge.s32.totalorder %s32, 2
      %s34 = scalar_select %p33, 0, %s32
      %s35 = ssub.s32 %s22, %s34
      %s36 = ssub.s32 %s23, %s30
      %s37 = sor.u32 %s35, %s36
      %p38 = scmp.eq.s32.totalorder %s37, 0
      %s40 = sadd.s32 %s39, 1
      %s41 = scalar_select %p38, %s39, %s40
      %p44 = pneg %p38
      %p45 = scmp.eq.s32.totalorder %s15, 1
      %p46 = por %p44, %p45
      %p47 = scmp.ne.s32.totalorder %s39, %s42
      %p48 = scmp.eq.s32.totalorder %s15, 0
      %p49 = por %p47, %p48
      %p50 = scmp.ne.s32.totalorder %s39, %s42
      %p51 = scmp.eq.s32.totalorder %s20, 1
      %p52 = por %p50, %p51
      %p53 = scmp.ne.s32.totalorder %s42, %s43
      %p54 = scmp.eq.s32.totalorder %s20, 0
      %p55 = por %p53, %p54
      %p56 = scmp.ne.s32.totalorder %s42, %s43
      %p57 = scmp.eq.s32.totalorder %s21, 1
      %p58 = por %p56, %p57
      %p60 = scmp.ne.s32.totalorder %s43, %s59
      %p61 = scmp.eq.s32.totalorder %s21, 0
      %p62 = por %p60, %p61
      %s63 = ssub.s32 %s22, %s34
      %p64 = scmp.eq.s32.totalorder %s63, 0
      %s66 = sadd.s32 %s65, 1
      %s67 = scalar_select %p64, %s65, %s66
      %p70 = pneg %p64
      %p71 = scmp.eq.s32.totalorder %s15, 1
      %p72 = por %p70, %p71
      %p73 = scmp.ne.s32.totalorder %s65, %s68
      %p74 = scmp.eq.s32.totalorder %s15, 0
      %p75 = por %p73, %p74
      %p76 = scmp.ne.s32.totalorder %s65, %s68
      %p77 = scmp.eq.s32.totalorder %s20, 1
      %p78 = por %p76, %p77
      %p79 = scmp.ne.s32.totalorder %s68, %s69
      %p80 = scmp.eq.s32.totalorder %s20, 0
      %p81 = por %p79, %p80
      %p82 = scmp.ne.s32.totalorder %s68, %s69
      %p83 = scmp.eq.s32.totalorder %s21, 1
      %p84 = por %p82, %p83
      %p86 = scmp.ne.s32.totalorder %s69, %s85
      %p87 = scmp.eq.s32.totalorder %s21, 0
      %p88 = por %p86, %p87
      %s89 = ssub.s32 %s22, %s34
      %p90 = scmp.eq.s32.totalorder %s89, 0
      %s92 = sadd.s32 %s91, 1
      %s93 = scalar_select %p90, %s91, %s92
      %p96 = pneg %p90
      %p97 = scmp.eq.s32.totalorder %s15, 1
      %p98 = por %p96, %p97
      %p99 = scmp.ne.s32.totalorder %s91, %s94
      %p100 = scmp.eq.s32.totalorder %s15, 0
      %p101 = por %p99, %p100
      %p102 = scmp.ne.s32.totalorder %s91, %s94
      %p103 = scmp.eq.s32.totalorder %s20, 1
      %p104 = por %p102, %p103
      %p105 = scmp.ne.s32.totalorder %s94, %s95
      %p106 = scmp.eq.s32.totalorder %s20, 0
      %p107 = por %p105, %p106
      %p108 = scmp.ne.s32.totalorder %s94, %s95
      %p109 = scmp.eq.s32.totalorder %s21, 1
      %p110 = por %p108, %p109
      %p112 = scmp.ne.s32.totalorder %s95, %s111
      %p113 = scmp.eq.s32.totalorder %s21, 0
      %p114 = por %p112, %p113
      %s116 = sadd.s32 %s115, 1
      %p119 = scmp.eq.s32.totalorder %s15, 1
      %p120 = scmp.ne.s32.totalorder %s115, %s117
      %p121 = scmp.eq.s32.totalorder %s15, 0
      %p122 = por %p120, %p121
      %p123 = scmp.ne.s32.totalorder %s115, %s117
      %p124 = scmp.eq.s32.totalorder %s20, 1
      %p125 = por %p123, %p124
      %p126 = scmp.ne.s32.totalorder %s117, %s118
      %p127 = scmp.eq.s32.totalorder %s20, 0
      %p128 = por %p126, %p127
      %p129 = scmp.ne.s32.totalorder %s117, %s118
      %p130 = scmp.eq.s32.totalorder %s21, 1
      %p131 = por %p129, %p130
      %p133 = scmp.ne.s32.totalorder %s118, %s132
      %p134 = scmp.eq.s32.totalorder %s21, 0
      %p135 = por %p133, %p134
      %s137 = sadd.s32 %s136, 1
      %p140 = scmp.eq.s32.totalorder %s15, 1
      %p141 = scmp.ne.s32.totalorder %s136, %s138
      %p142 = scmp.eq.s32.totalorder %s15, 0
      %p143 = por %p141, %p142
      %p144 = scmp.ne.s32.totalorder %s136, %s138
      %p145 = scmp.eq.s32.totalorder %s20, 1
      %p146 = por %p144, %p145
      %p147 = scmp.ne.s32.totalorder %s138, %s139
      %p148 = scmp.eq.s32.totalorder %s20, 0
      %p149 = por %p147, %p148
      %p150 = scmp.ne.s32.totalorder %s138, %s139
      %p151 = scmp.eq.s32.totalorder %s21, 1
      %p152 = por %p150, %p151
      %p154 = scmp.ne.s32.totalorder %s139, %s153
      %p155 = scmp.eq.s32.totalorder %s21, 0
      %p156 = por %p154, %p155
      %s158 = sadd.s32 %s157, 1
      %p161 = scmp.eq.s32.totalorder %s15, 1
      %p162 = scmp.ne.s32.totalorder %s157, %s159
      %p163 = scmp.eq.s32.totalorder %s15, 0
      %p164 = por %p162, %p163
      %p165 = scmp.ne.s32.totalorder %s157, %s159
      %p166 = scmp.eq.s32.totalorder %s20, 1
      %p167 = por %p165, %p166
      %p168 = scmp.ne.s32.totalorder %s159, %s160
      %p169 = scmp.eq.s32.totalorder %s20, 0
      %p170 = por %p168, %p169
      %p171 = scmp.ne.s32.totalorder %s159, %s160
      %p172 = scmp.eq.s32.totalorder %s21, 1
      %p173 = por %p171, %p172
      %p175 = scmp.ne.s32.totalorder %s160, %s174
      %p176 = scmp.eq.s32.totalorder %s21, 0
      %p177 = por %p175, %p176
      %s178 = ssub.s32 %s22, %s34
      %s179 = ssub.s32 %s23, %s30
      %s180 = sor.u32 %s178, %s179
      %p181 = scmp.eq.s32.totalorder %s180, 0
      %s183 = sadd.s32 %s182, 1
      %s184 = scalar_select %p181, %s182, %s183
      %p187 = pneg %p181
      %p188 = scmp.eq.s32.totalorder %s15, 1
      %p189 = por %p187, %p188
      %p190 = scmp.ne.s32.totalorder %s182, %s185
      %p191 = scmp.eq.s32.totalorder %s15, 0
      %p192 = por %p190, %p191
      %p193 = scmp.ne.s32.totalorder %s182, %s185
      %p194 = scmp.eq.s32.totalorder %s20, 1
      %p195 = por %p193, %p194
      %p196 = scmp.ne.s32.totalorder %s185, %s186
      %p197 = scmp.eq.s32.totalorder %s20, 0
      %p198 = por %p196, %p197
      %p199 = scmp.ne.s32.totalorder %s185, %s186
      %p200 = scmp.eq.s32.totalorder %s21, 1
      %p201 = por %p199, %p200
      %p203 = scmp.ne.s32.totalorder %s186, %s202
      %p204 = scmp.eq.s32.totalorder %s21, 0
      %p205 = por %p203, %p204
      %p206 = scmp.le.s32.totalorder 1, %s15
      %p207 = scmp.lt.s32.totalorder %s15, 3
      %p208 = pnand %p206, %p207
      %p209 = pneg %p208
      // Predicated region
      $region9: #{attention_forward.3} parent=5 // pred_check
        _
      $region10: #{attention_forward.3} parent=5 // pred_check_branch
        %211 = sbr.rel (%p208) target = $region12
      $region11: #{attention_forward.3} parent=5 // pred_region
        %s212 = ssub.s32 %s15, 1
        // Predicated region
        $region13: #{attention_forward.3} parent=11 // pred_check
          %p213 = pneg %p128
        $region14: #{attention_forward.3} parent=11 // pred_check_branch
          %215 = sbr.rel (%p213) target = $region16
        $region15: #{attention_forward.3} parent=11 // pred_region
          _
        $region16: #{attention_forward.3} parent=11 // pred_fallthru
          _
        // Predicated region
        $region17: #{attention_forward.3} parent=11 // pred_check
          %p216 = pneg %p149
        $region18: #{attention_forward.3} parent=11 // pred_check_branch
          %218 = sbr.rel (%p216) target = $region20
        $region19: #{attention_forward.3} parent=11 // pred_region
          _
        $region20: #{attention_forward.3} parent=11 // pred_fallthru
          _
        // Predicated region
        $region21: #{attention_forward.3} parent=11 // pred_check
          %p219 = pneg %p170
        $region22: #{attention_forward.3} parent=11 // pred_check_branch
          %221 = sbr.rel (%p219) target = $region24
        $region23: #{attention_forward.3} parent=11 // pred_region
          _
        $region24: #{attention_forward.3} parent=11 // pred_fallthru
          _
      $region12: #{attention_forward.3} parent=5 // pred_fallthru
        _
      %p222 = scmp.lt.s32.totalorder %s15, 2
      // Predicated region
      $region25: #{attention_forward.3} parent=5 // pred_check
        %p223 = pneg %p222
      $region26: #{attention_forward.3} parent=5 // pred_check_branch
        %225 = sbr.rel (%p223) target = $region28
      $region27: #{attention_forward.3} parent=5 // pred_region
        // Predicated region
        $region29: #{attention_forward.3} parent=27 // pred_check
          %p226 = pneg %p49
        $region30: #{attention_forward.3} parent=27 // pred_check_branch
          %228 = sbr.rel (%p226) target = $region32
        $region31: #{attention_forward.3} parent=27 // pred_region
          %s229 = smul.u32 8, %s23
          %p230 = scmp.lt.s32.totalorder %s22, 1
          %s231 = scalar_select %p230, %s22, 1
          %p232 = scmp.lt.s32.totalorder %s229, 7
          %s233 = scalar_select %p232, %s229, 7
          %s234 = smul.addr %s231, 8
          %s235 = sadd.s32 %s233, %s234
          %s236 = smul.addr %s235, 8
          %s237 = scalar_lea.vmem %s0, %s236
          %s238 = smul.u32 8, %s23
        $region32: #{attention_forward.3} parent=27 // pred_fallthru
          _
        // Predicated region
        $region33: #{attention_forward.3} parent=27 // pred_check
          %p239 = pneg %p75
        $region34: #{attention_forward.3} parent=27 // pred_check_branch
          %241 = sbr.rel (%p239) target = $region36
        $region35: #{attention_forward.3} parent=27 // pred_region
          %p242 = scmp.lt.s32.totalorder %s22, 1
          %s243 = scalar_select %p242, %s22, 1
          %s244 = smul.addr %s243, 8
          %s245 = smul.addr %s244, 8
          %s246 = scalar_lea.vmem %s1, %s245
        $region36: #{attention_forward.3} parent=27 // pred_fallthru
          _
        // Predicated region
        $region37: #{attention_forward.3} parent=27 // pred_check
          %p247 = pneg %p101
        $region38: #{attention_forward.3} parent=27 // pred_check_branch
          %249 = sbr.rel (%p247) target = $region40
        $region39: #{attention_forward.3} parent=27 // pred_region
          %p250 = scmp.lt.s32.totalorder %s22, 1
          %s251 = scalar_select %p250, %s22, 1
          %s252 = smul.addr %s251, 2
          %s253 = smul.addr %s252, 8
          %s254 = scalar_lea.vmem %s2, %s253
        $region40: #{attention_forward.3} parent=27 // pred_fallthru
          _
      $region28: #{attention_forward.3} parent=5 // pred_fallthru
        _
      %p255 = scmp.le.s32.totalorder 1, %s15
      %p256 = scmp.lt.s32.totalorder %s15, 3
      %p257 = pnand %p255, %p256
      %p258 = pneg %p257
      // Predicated region
      $region41: #{attention_forward.3} parent=5 // pred_check
        _
      $region42: #{attention_forward.3} parent=5 // pred_check_branch
        %260 = sbr.rel (%p257) target = $region44
      $region43: #{attention_forward.3} parent=5 // pred_region
        %s261 = ssub.s32 %s15, 1
        %s262 = smul.u32 8, %s25
        %p263 = scmp.lt.s32.totalorder %s24, 1
        %s264 = scalar_select %p263, %s24, 1
        %p265 = scmp.lt.s32.totalorder %s262, 7
        %s266 = scalar_select %p265, %s262, 7
        %s267 = smul.addr %s264, 8
        %s268 = sadd.s32 %s266, %s267
        %s269 = smul.addr %s268, 8
        %s270 = scalar_lea.vmem %s0, %s269
        %p271 = pneg %p55
        %p272 = pneg %p52
        %p273 = scmp.lt.s32.totalorder %s24, 1
        %s274 = scalar_select %p273, %s24, 1
        %s275 = smul.addr %s274, 8
        %s276 = smul.addr %s275, 8
        %s277 = scalar_lea.vmem %s1, %s276
        %p278 = pneg %p81
        %p279 = pneg %p78
        %p280 = scmp.lt.s32.totalorder %s24, 1
        %s281 = scalar_select %p280, %s24, 1
        %s282 = smul.addr %s281, 2
        %s283 = smul.addr %s282, 8
        %s284 = scalar_lea.vmem %s2, %s283
        %p285 = pneg %p107
        %p286 = pneg %p104
        %p287 = pneg %p128
        %p288 = pneg %p125
        %p289 = pneg %p149
        %p290 = pneg %p146
        %p291 = pneg %p170
        %p292 = pneg %p167
        %p293 = pneg %p198
        %p294 = pneg %p195
        %s295 = sand.u32 %s185, 1
        %s296 = scalar_lea.sflag [#allocation5], %s295
        %s297 = sand.u32 %s185, 1
        %s298 = smul.addr %s297, 64
        %s299 = scalar_lea.vmem [#allocation4], %s298
        %s300 = smul.u32 8, %s25
        %p301 = scmp.lt.s32.totalorder %s24, 1
        %s302 = scalar_select %p301, %s24, 1
        %p303 = scmp.lt.s32.totalorder %s300, 7
        %s304 = scalar_select %p303, %s300, 7
        %s305 = smul.addr %s302, 8
        %s306 = sadd.s32 %s304, %s305
        %s307 = smul.addr %s306, 8
        %s308 = scalar_lea.vmem %s0, %s307
        %s309 = smul.u32 8, %s25
        %p310 = scmp.lt.s32.totalorder %s24, 1
        %s311 = scalar_select %p310, %s24, 1
        %s312 = smul.addr %s311, 8
        %s313 = smul.addr %s312, 8
        %s314 = scalar_lea.vmem %s1, %s313
        %p315 = scmp.lt.s32.totalorder %s24, 1
        %s316 = scalar_select %p315, %s24, 1
        %s317 = smul.addr %s316, 2
        %s318 = smul.addr %s317, 8
        %s319 = scalar_lea.vmem %s2, %s318
        %s320 = smul.u32 8, %s25
        %v321 = vld [vmem:[%s308] sm:$0xff]
        %v322 = vld [vmem:[%s308 + $0x8] sm:$0xff]
        %v323 = vld [vmem:[%s308 + $0x10] sm:$0xff]
        %v324 = vld [vmem:[%s308 + $0x18] sm:$0xff]
        %v325 = vld [vmem:[%s308 + $0x20] sm:$0xff]
        %v326 = vld [vmem:[%s308 + $0x28] sm:$0xff]
        %v327 = vld [vmem:[%s308 + $0x30] sm:$0xff]
        %v328 = vld [vmem:[%s308 + $0x38] sm:$0xff]
        %v329 = vld [vmem:[%s3] sm:$0xff]
        %v330 = vld [vmem:[%s3 + $0x8] sm:$0xff]
        %v331 = vld [vmem:[%s3 + $0x10] sm:$0xff]
        %v332 = vld [vmem:[%s3 + $0x18] sm:$0xff]
        %v333 = vld [vmem:[%s3 + $0x20] sm:$0xff]
        %v334 = vld [vmem:[%s3 + $0x28] sm:$0xff]
        %v335 = vld [vmem:[%s3 + $0x30] sm:$0xff]
        %v336 = vld [vmem:[%s3 + $0x38] sm:$0xff]
        %vm337 = vcmask 523264
        %v339 = vsel %vm337, %v321, 0
        %v342 = vsel %vm337, %v322, 0
        %v345 = vsel %vm337, %v323, 0
        %v348 = vsel %vm337, %v324, 0
        %v351 = vsel %vm337, %v325, 0
        %v354 = vsel %vm337, %v326, 0
        %v357 = vsel %vm337, %v327, 0
        %v360 = vsel %vm337, %v328, 0
        %362 = vmatprep.subr.mxu0 0.0
        %363 = vmatpush1.msra.mxu0 %v329
        %364 = vmatprep.subr.mxu0 0.0
        %365 = vmatpush1.msra.mxu0 %v330
        %366 = vmatprep.subr.mxu0 0.0
        %367 = vmatpush1.msra.mxu0 %v331
        %368 = vmatprep.subr.mxu0 0.0
        %369 = vmatpush1.msra.mxu0 %v332
        %370 = vmatprep.subr.mxu0 0.0
        %371 = vmatpush1.msra.mxu0 %v333
        %372 = vmatprep.subr.mxu0 0.0
        %373 = vmatpush1.msra.mxu0 %v334
        %374 = vmatprep.subr.mxu0 0.0
        %375 = vmatpush1.msra.mxu0 %v335
        %376 = vmatprep.subr.mxu0 0.0
        %377 = vmatpush1.msra.mxu0 %v336
        %378 = vmatprep.subr.mxu0 0.0
        %379 = vmatpush1.msra.mxu0 0.0
        %380 = vmatprep.subr.mxu0 0.0
        %381 = vmatpush1.msra.mxu0 0.0
        %382 = vmatprep.subr.mxu0 0.0
        %383 = vmatpush1.msra.mxu0 0.0
        %384 = vmatprep.subr.mxu0 0.0
        %385 = vmatpush1.msra.mxu0 0.0
        %386 = vmatprep.subr.mxu0 0.0
        %387 = vmatpush1.msra.mxu0 0.0
        %388 = vmatprep.subr.mxu0 0.0
        %389 = vmatpush1.msra.mxu0 0.0
        %390 = vmatprep.subr.mxu0 0.0
        %391 = vmatpush1.msra.mxu0 0.0
        %392 = vmatprep.subr.mxu0 0.0
        %393 = vmatpush1.msra.mxu0 0.0
        %394 = vmatprep.subr.mxu0 0.0
        %395 = vmatpush1.msra.mxu0 0.0
        %396 = vmatprep.subr.mxu0 0.0
        %397 = vmatpush1.msra.mxu0 0.0
        %398 = vmatprep.subr.mxu0 0.0
        %399 = vmatpush1.msra.mxu0 0.0
        %400 = vmatprep.subr.mxu0 0.0
        %401 = vmatpush1.msra.mxu0 0.0
        %402 = vmatprep.subr.mxu0 0.0
        %403 = vmatpush1.msra.mxu0 0.0
        %404 = vmatprep.subr.mxu0 0.0
        %405 = vmatpush1.msra.mxu0 0.0
        %406 = vmatprep.subr.mxu0 0.0
        %407 = vmatpush1.msra.mxu0 0.0
        %408 = vmatprep.subr.mxu0 0.0
        %409 = vmatpush1.msra.mxu0 0.0
        %410 = vmatprep.subr.mxu0 0.0
        %411 = vmatpush1.msra.mxu0 0.0
        %412 = vmatprep.subr.mxu0 0.0
        %413 = vmatpush1.msra.mxu0 0.0
        %414 = vmatprep.subr.mxu0 0.0
        %415 = vmatpush1.msra.mxu0 0.0
        %416 = vmatprep.subr.mxu0 0.0
        %417 = vmatpush1.msra.mxu0 0.0
        %418 = vmatprep.subr.mxu0 0.0
        %419 = vmatpush1.msra.mxu0 0.0
        %420 = vmatprep.subr.mxu0 0.0
        %421 = vmatpush1.msra.mxu0 0.0
        %422 = vmatprep.subr.mxu0 0.0
        %423 = vmatpush1.msra.mxu0 0.0
        %424 = vmatprep.subr.mxu0 0.0
        %425 = vmatpush1.msra.mxu0 0.0
        %426 = vmatprep.mubr.f32.mxu0 0.0
        %427 = vmatmul.mubr.f32.gmra.mrb[0].mxu0 %v339
        %v428 = vpop.f32.mrb[0].mxu0
        %v429 = vadd.f32 0.0, %v428
        %v430 = vpop.f32.mrb[0].mxu0
        %431 = vmatprep.mubr.f32.mxu0 0.0
        %432 = vmatmul.mubr.f32.gmra.mrb[0].mxu0 %v342
        %v433 = vpop.f32.mrb[0].mxu0
        %v434 = vadd.f32 0.0, %v433
        %v435 = vpop.f32.mrb[0].mxu0
        %436 = vmatprep.mubr.f32.mxu0 0.0
        %437 = vmatmul.mubr.f32.gmra.mrb[0].mxu0 %v345
        %v438 = vpop.f32.mrb[0].mxu0
        %v439 = vadd.f32 0.0, %v438
        %v440 = vpop.f32.mrb[0].mxu0
        %441 = vmatprep.mubr.f32.mxu0 0.0
        %442 = vmatmul.mubr.f32.gmra.mrb[0].mxu0 %v348
        %v443 = vpop.f32.mrb[0].mxu0
        %v444 = vadd.f32 0.0, %v443
        %v445 = vpop.f32.mrb[0].mxu0
        %446 = vmatprep.mubr.f32.mxu0 0.0
        %447 = vmatmul.mubr.f32.gmra.mrb[0].mxu0 %v351
        %v448 = vpop.f32.mrb[0].mxu0
        %v449 = vadd.f32 0.0, %v448
        %v450 = vpop.f32.mrb[0].mxu0
        %451 = vmatprep.mubr.f32.mxu0 0.0
        %452 = vmatmul.mubr.f32.gmra.mrb[0].mxu0 %v354
        %v453 = vpop.f32.mrb[0].mxu0
        %v454 = vadd.f32 0.0, %v453
        %v455 = vpop.f32.mrb[0].mxu0
        %456 = vmatprep.mubr.f32.mxu0 0.0
        %457 = vmatmul.mubr.f32.gmra.mrb[0].mxu0 %v357
        %v458 = vpop.f32.mrb[0].mxu0
        %v459 = vadd.f32 0.0, %v458
        %v460 = vpop.f32.mrb[0].mxu0
        %461 = vmatprep.mubr.f32.mxu0 0.0
        %462 = vmatmul.mubr.f32.gmra.mrb[0].mxu0 %v360
        %v463 = vpop.f32.mrb[0].mxu0
        %v464 = vadd.f32 0.0, %v463
        %v465 = vpop.f32.mrb[0].mxu0
        %466 = vdwg.mxu0
        %467 = vst.msk [vmem:[#allocation2] sm:$0xff] %vm337, %v429
        %468 = vst.msk [vmem:[#allocation2 + $0x8] sm:$0xff] %vm337, %v434
        %469 = vst.msk [vmem:[#allocation2 + $0x10] sm:$0xff] %vm337, %v439
        %470 = vst.msk [vmem:[#allocation2 + $0x18] sm:$0xff] %vm337, %v444
        %471 = vst.msk [vmem:[#allocation2 + $0x20] sm:$0xff] %vm337, %v449
        %472 = vst.msk [vmem:[#allocation2 + $0x28] sm:$0xff] %vm337, %v454
        %473 = vst.msk [vmem:[#allocation2 + $0x30] sm:$0xff] %vm337, %v459
        %474 = vst.msk [vmem:[#allocation2 + $0x38] sm:$0xff] %vm337, %v464
        %v475 = vld [vmem:[#allocation2] sm:$0xff]
        %v476 = vld [vmem:[#allocation2 + $0x8] sm:$0xff]
        %v477 = vld [vmem:[#allocation2 + $0x10] sm:$0xff]
        %v478 = vld [vmem:[#allocation2 + $0x18] sm:$0xff]
        %v479 = vld [vmem:[#allocation2 + $0x20] sm:$0xff]
        %v480 = vld [vmem:[#allocation2 + $0x28] sm:$0xff]
        %v481 = vld [vmem:[#allocation2 + $0x30] sm:$0xff]
        %v482 = vld [vmem:[#allocation2 + $0x38] sm:$0xff]
        %v483 = vld [vmem:[%s314] sm:$0xff]
        %v484 = vld [vmem:[%s319] sm:$0xff]
        %v485 = vld [vmem:[%s319 + $0x8] sm:$0xff]
        %vm486 = vcmask 64512
        %v488 = vsel %vm486, %v475, 0
        %v491 = vsel %vm486, %v476, 0
        %v494 = vsel %vm486, %v477, 0
        %v497 = vsel %vm486, %v478, 0
        %v500 = vsel %vm486, %v479, 0
        %v503 = vsel %vm486, %v480, 0
        %v506 = vsel %vm486, %v481, 0
        %v509 = vsel %vm486, %v482, 0
        %511 = vmatprep.subr.mxu0 0.0
        %512 = vmatpush1.msra.mxu0 %v483
        %513 = vmatprep.subr.mxu0 0.0
        %514 = vmatpush1.msra.mxu0 0.0
        %515 = vmatprep.subr.mxu0 0.0
        %516 = vmatpush1.msra.mxu0 0.0
        %517 = vmatprep.subr.mxu0 0.0
        %518 = vmatpush1.msra.mxu0 0.0
        %519 = vmatprep.subr.mxu0 0.0
        %520 = vmatpush1.msra.mxu0 0.0
        %521 = vmatprep.subr.mxu0 0.0
        %522 = vmatpush1.msra.mxu0 0.0
        %523 = vmatprep.subr.mxu0 0.0
        %524 = vmatpush1.msra.mxu0 0.0
        %525 = vmatprep.subr.mxu0 0.0
        %526 = vmatpush1.msra.mxu0 0.0
        %527 = vmatprep.subr.mxu0 0.0
        %528 = vmatpush1.msra.mxu0 0.0
        %529 = vmatprep.subr.mxu0 0.0
        %530 = vmatpush1.msra.mxu0 0.0
        %531 = vmatprep.subr.mxu0 0.0
        %532 = vmatpush1.msra.mxu0 0.0
        %533 = vmatprep.subr.mxu0 0.0
        %534 = vmatpush1.msra.mxu0 0.0
        %535 = vmatprep.subr.mxu0 0.0
        %536 = vmatpush1.msra.mxu0 0.0
        %537 = vmatprep.subr.mxu0 0.0
        %538 = vmatpush1.msra.mxu0 0.0
        %539 = vmatprep.subr.mxu0 0.0
        %540 = vmatpush1.msra.mxu0 0.0
        %541 = vmatprep.subr.mxu0 0.0
        %542 = vmatpush1.msra.mxu0 0.0
        %543 = vmatprep.subr.mxu0 0.0
        %544 = vmatpush1.msra.mxu0 0.0
        %545 = vmatprep.subr.mxu0 0.0
        %546 = vmatpush1.msra.mxu0 0.0
        %547 = vmatprep.subr.mxu0 0.0
        %548 = vmatpush1.msra.mxu0 0.0
        %549 = vmatprep.subr.mxu0 0.0
        %550 = vmatpush1.msra.mxu0 0.0
        %551 = vmatprep.subr.mxu0 0.0
        %552 = vmatpush1.msra.mxu0 0.0
        %553 = vmatprep.subr.mxu0 0.0
        %554 = vmatpush1.msra.mxu0 0.0
        %555 = vmatprep.subr.mxu0 0.0
        %556 = vmatpush1.msra.mxu0 0.0
        %557 = vmatprep.subr.mxu0 0.0
        %558 = vmatpush1.msra.mxu0 0.0
        %559 = vmatprep.subr.mxu0 0.0
        %560 = vmatpush1.msra.mxu0 0.0
        %561 = vmatprep.subr.mxu0 0.0
        %562 = vmatpush1.msra.mxu0 0.0
        %563 = vmatprep.subr.mxu0 0.0
        %564 = vmatpush1.msra.mxu0 0.0
        %565 = vmatprep.subr.mxu0 0.0
        %566 = vmatpush1.msra.mxu0 0.0
        %567 = vmatprep.subr.mxu0 0.0
        %568 = vmatpush1.msra.mxu0 0.0
        %569 = vmatprep.subr.mxu0 0.0
        %570 = vmatpush1.msra.mxu0 0.0
        %571 = vmatprep.subr.mxu0 0.0
        %572 = vmatpush1.msra.mxu0 0.0
        %573 = vmatprep.subr.mxu0 0.0
        %574 = vmatpush1.msra.mxu0 0.0
        %575 = vmatprep.mubr.f32.mxu0 0.0
        %576 = vmatmul.mubr.f32.gmra.mrb[0].mxu0 %v488
        %v577 = vpop.f32.mrb[0].mxu0
        %v578 = vadd.f32 0.0, %v577
        %v579 = vpop.f32.mrb[0].mxu0
        %580 = vmatprep.mubr.f32.mxu0 0.0
        %581 = vmatmul.mubr.f32.gmra.mrb[0].mxu0 %v491
        %v582 = vpop.f32.mrb[0].mxu0
        %v583 = vadd.f32 0.0, %v582
        %v584 = vpop.f32.mrb[0].mxu0
        %585 = vmatprep.mubr.f32.mxu0 0.0
        %586 = vmatmul.mubr.f32.gmra.mrb[0].mxu0 %v494
        %v587 = vpop.f32.mrb[0].mxu0
        %v588 = vadd.f32 0.0, %v587
        %v589 = vpop.f32.mrb[0].mxu0
        %590 = vmatprep.mubr.f32.mxu0 0.0
        %591 = vmatmul.mubr.f32.gmra.mrb[0].mxu0 %v497
        %v592 = vpop.f32.mrb[0].mxu0
        %v593 = vadd.f32 0.0, %v592
        %v594 = vpop.f32.mrb[0].mxu0
        %595 = vmatprep.mubr.f32.mxu0 0.0
        %596 = vmatmul.mubr.f32.gmra.mrb[0].mxu0 %v500
        %v597 = vpop.f32.mrb[0].mxu0
        %v598 = vadd.f32 0.0, %v597
        %v599 = vpop.f32.mrb[0].mxu0
        %600 = vmatprep.mubr.f32.mxu0 0.0
        %601 = vmatmul.mubr.f32.gmra.mrb[0].mxu0 %v503
        %v602 = vpop.f32.mrb[0].mxu0
        %v603 = vadd.f32 0.0, %v602
        %v604 = vpop.f32.mrb[0].mxu0
        %605 = vmatprep.mubr.f32.mxu0 0.0
        %606 = vmatmul.mubr.f32.gmra.mrb[0].mxu0 %v506
        %v607 = vpop.f32.mrb[0].mxu0
        %v608 = vadd.f32 0.0, %v607
        %v609 = vpop.f32.mrb[0].mxu0
        %610 = vmatprep.mubr.f32.mxu0 0.0
        %611 = vmatmul.mubr.f32.gmra.mrb[0].mxu0 %v509
        %v612 = vpop.f32.mrb[0].mxu0
        %v613 = vadd.f32 0.0, %v612
        %v614 = vpop.f32.mrb[0].mxu0
        %615 = vdwg.mxu0
        %vm616 = vcmask 130048
        %v617 = vsel %vm616, %v578, -inf
        %618 = vmax.xlane.f32.xlu0 %v617
        %v619 = vpop.xlane.xlu0 %618
        %v620 = vsel %vm616, %v583, -inf
        %621 = vmax.xlane.f32.xlu0 %v620
        %v622 = vpop.xlane.xlu0 %621
        %v623 = vsel %vm616, %v588, -inf
        %624 = vmax.xlane.f32.xlu0 %v623
        %v625 = vpop.xlane.xlu0 %624
        %v626 = vsel %vm616, %v593, -inf
        %627 = vmax.xlane.f32.xlu0 %v626
        %v628 = vpop.xlane.xlu0 %627
        %v629 = vsel %vm616, %v598, -inf
        %630 = vmax.xlane.f32.xlu0 %v629
        %v631 = vpop.xlane.xlu0 %630
        %v632 = vsel %vm616, %v603, -inf
        %633 = vmax.xlane.f32.xlu0 %v632
        %v634 = vpop.xlane.xlu0 %633
        %v635 = vsel %vm616, %v608, -inf
        %636 = vmax.xlane.f32.xlu0 %v635
        %v637 = vpop.xlane.xlu0 %636
        %v638 = vsel %vm616, %v613, -inf
        %639 = vmax.xlane.f32.xlu0 %v638
        %v640 = vpop.xlane.xlu0 %639
        %v641 = vsub.f32 %v578, %v619
        %v642 = vsub.f32 %v583, %v622
        %v643 = vsub.f32 %v588, %v625
        %v644 = vsub.f32 %v593, %v628
        %v645 = vsub.f32 %v598, %v631
        %v646 = vsub.f32 %v603, %v634
        %v647 = vsub.f32 %v608, %v637
        %v648 = vsub.f32 %v613, %v640
        %v649 = vmul.f32 %v641, 1.442695
        %v650 = vpow.pop %v649
        %v651 = vmul.f32 %v642, 1.442695
        %v652 = vpow.pop %v651
        %v653 = vmul.f32 %v643, 1.442695
        %v654 = vpow.pop %v653
        %v655 = vmul.f32 %v644, 1.442695
        %v656 = vpow.pop %v655
        %v657 = vmul.f32 %v645, 1.442695
        %v658 = vpow.pop %v657
        %v659 = vmul.f32 %v646, 1.442695
        %v660 = vpow.pop %v659
        %v661 = vmul.f32 %v647, 1.442695
        %v662 = vpow.pop %v661
        %v663 = vmul.f32 %v648, 1.442695
        %v664 = vpow.pop %v663
        %v665 = vsel %vm616, %v650, 0.0
        %666 = vadd.xlane.f32.xlu0 %v665
        %v667 = vpop.xlane.xlu0 %666
        %v668 = vsel %vm616, %v652, 0.0
        %669 = vadd.xlane.f32.xlu0 %v668
        %v670 = vpop.xlane.xlu0 %669
        %v671 = vsel %vm616, %v654, 0.0
        %672 = vadd.xlane.f32.xlu0 %v671
        %v673 = vpop.xlane.xlu0 %672
        %v674 = vsel %vm616, %v656, 0.0
        %675 = vadd.xlane.f32.xlu0 %v674
        %v676 = vpop.xlane.xlu0 %675
        %v677 = vsel %vm616, %v658, 0.0
        %678 = vadd.xlane.f32.xlu0 %v677
        %v679 = vpop.xlane.xlu0 %678
        %v680 = vsel %vm616, %v660, 0.0
        %681 = vadd.xlane.f32.xlu0 %v680
        %v682 = vpop.xlane.xlu0 %681
        %v683 = vsel %vm616, %v662, 0.0
        %684 = vadd.xlane.f32.xlu0 %v683
        %v685 = vpop.xlane.xlu0 %684
        %v686 = vsel %vm616, %v664, 0.0
        %687 = vadd.xlane.f32.xlu0 %v686
        %v688 = vpop.xlane.xlu0 %687
        %v690 = vsel %vm616, %v650, 0
        %v693 = vsel %vm616, %v652, 0
        %v696 = vsel %vm616, %v654, 0
        %v699 = vsel %vm616, %v656, 0
        %v702 = vsel %vm616, %v658, 0
        %v705 = vsel %vm616, %v660, 0
        %v708 = vsel %vm616, %v662, 0
        %v711 = vsel %vm616, %v664, 0
        %713 = vmatprep.subr.mxu0 0.0
        %714 = vmatpush1.msra.mxu0 %v484
        %715 = vmatprep.subr.mxu0 0.0
        %716 = vmatpush1.msra.mxu0 %v485
        %717 = vmatprep.subr.mxu0 0.0
        %718 = vmatpush1.msra.mxu0 0.0
        %719 = vmatprep.subr.mxu0 0.0
        %720 = vmatpush1.msra.mxu0 0.0
        %721 = vmatprep.subr.mxu0 0.0
        %722 = vmatpush1.msra.mxu0 0.0
        %723 = vmatprep.subr.mxu0 0.0
        %724 = vmatpush1.msra.mxu0 0.0
        %725 = vmatprep.subr.mxu0 0.0
        %726 = vmatpush1.msra.mxu0 0.0
        %727 = vmatprep.subr.mxu0 0.0
        %728 = vmatpush1.msra.mxu0 0.0
        %729 = vmatprep.subr.mxu0 0.0
        %730 = vmatpush1.msra.mxu0 0.0
        %731 = vmatprep.subr.mxu0 0.0
        %732 = vmatpush1.msra.mxu0 0.0
        %733 = vmatprep.subr.mxu0 0.0
        %734 = vmatpush1.msra.mxu0 0.0
        %735 = vmatprep.subr.mxu0 0.0
        %736 = vmatpush1.msra.mxu0 0.0
        %737 = vmatprep.subr.mxu0 0.0
        %738 = vmatpush1.msra.mxu0 0.0
        %739 = vmatprep.subr.mxu0 0.0
        %740 = vmatpush1.msra.mxu0 0.0
        %741 = vmatprep.subr.mxu0 0.0
        %742 = vmatpush1.msra.mxu0 0.0
        %743 = vmatprep.subr.mxu0 0.0
        %744 = vmatpush1.msra.mxu0 0.0
        %745 = vmatprep.subr.mxu0 0.0
        %746 = vmatpush1.msra.mxu0 0.0
        %747 = vmatprep.subr.mxu0 0.0
        %748 = vmatpush1.msra.mxu0 0.0
        %749 = vmatprep.subr.mxu0 0.0
        %750 = vmatpush1.msra.mxu0 0.0
        %751 = vmatprep.subr.mxu0 0.0
        %752 = vmatpush1.msra.mxu0 0.0
        %753 = vmatprep.subr.mxu0 0.0
        %754 = vmatpush1.msra.mxu0 0.0
        %755 = vmatprep.subr.mxu0 0.0
        %756 = vmatpush1.msra.mxu0 0.0
        %757 = vmatprep.subr.mxu0 0.0
        %758 = vmatpush1.msra.mxu0 0.0
        %759 = vmatprep.subr.mxu0 0.0
        %760 = vmatpush1.msra.mxu0 0.0
        %761 = vmatprep.subr.mxu0 0.0
        %762 = vmatpush1.msra.mxu0 0.0
        %763 = vmatprep.subr.mxu0 0.0
        %764 = vmatpush1.msra.mxu0 0.0
        %765 = vmatprep.subr.mxu0 0.0
        %766 = vmatpush1.msra.mxu0 0.0
        %767 = vmatprep.subr.mxu0 0.0
        %768 = vmatpush1.msra.mxu0 0.0
        %769 = vmatprep.subr.mxu0 0.0
        %770 = vmatpush1.msra.mxu0 0.0
        %771 = vmatprep.subr.mxu0 0.0
        %772 = vmatpush1.msra.mxu0 0.0
        %773 = vmatprep.subr.mxu0 0.0
        %774 = vmatpush1.msra.mxu0 0.0
        %775 = vmatprep.subr.mxu0 0.0
        %776 = vmatpush1.msra.mxu0 0.0
        %777 = vmatprep.mubr.f32.mxu0 0.0
        %778 = vmatmul.mubr.f32.gmra.mrb[0].mxu0 %v690
        %v779 = vpop.f32.mrb[0].mxu0
        %v780 = vadd.f32 0.0, %v779
        %v781 = vpop.f32.mrb[0].mxu0
        %782 = vmatprep.mubr.f32.mxu0 0.0
        %783 = vmatmul.mubr.f32.gmra.mrb[0].mxu0 %v693
        %v784 = vpop.f32.mrb[0].mxu0
        %v785 = vadd.f32 0.0, %v784
        %v786 = vpop.f32.mrb[0].mxu0
        %787 = vmatprep.mubr.f32.mxu0 0.0
        %788 = vmatmul.mubr.f32.gmra.mrb[0].mxu0 %v696
        %v789 = vpop.f32.mrb[0].mxu0
        %v790 = vadd.f32 0.0, %v789
        %v791 = vpop.f32.mrb[0].mxu0
        %792 = vmatprep.mubr.f32.mxu0 0.0
        %793 = vmatmul.mubr.f32.gmra.mrb[0].mxu0 %v699
        %v794 = vpop.f32.mrb[0].mxu0
        %v795 = vadd.f32 0.0, %v794
        %v796 = vpop.f32.mrb[0].mxu0
        %797 = vmatprep.mubr.f32.mxu0 0.0
        %798 = vmatmul.mubr.f32.gmra.mrb[0].mxu0 %v702
        %v799 = vpop.f32.mrb[0].mxu0
        %v800 = vadd.f32 0.0, %v799
        %v801 = vpop.f32.mrb[0].mxu0
        %802 = vmatprep.mubr.f32.mxu0 0.0
        %803 = vmatmul.mubr.f32.gmra.mrb[0].mxu0 %v705
        %v804 = vpop.f32.mrb[0].mxu0
        %v805 = vadd.f32 0.0, %v804
        %v806 = vpop.f32.mrb[0].mxu0
        %807 = vmatprep.mubr.f32.mxu0 0.0
        %808 = vmatmul.mubr.f32.gmra.mrb[0].mxu0 %v708
        %v809 = vpop.f32.mrb[0].mxu0
        %v810 = vadd.f32 0.0, %v809
        %v811 = vpop.f32.mrb[0].mxu0
        %812 = vmatprep.mubr.f32.mxu0 0.0
        %813 = vmatmul.mubr.f32.gmra.mrb[0].mxu0 %v711
        %v814 = vpop.f32.mrb[0].mxu0
        %v815 = vadd.f32 0.0, %v814
        %v816 = vpop.f32.mrb[0].mxu0
        %817 = vdwg.mxu0
        %v818 = vrcp.pop %v667
        %v819 = vrcp.pop %v670
        %v820 = vrcp.pop %v673
        %v821 = vrcp.pop %v676
        %v822 = vrcp.pop %v679
        %v823 = vrcp.pop %v682
        %v824 = vrcp.pop %v685
        %v825 = vrcp.pop %v688
        %v826 = vmul.f32 %v780, %v818
        %v827 = vmul.f32 %v785, %v819
        %v828 = vmul.f32 %v790, %v820
        %v829 = vmul.f32 %v795, %v821
        %v830 = vmul.f32 %v800, %v822
        %v831 = vmul.f32 %v805, %v823
        %v832 = vmul.f32 %v810, %v824
        %v833 = vmul.f32 %v815, %v825
        %834 = vst.msk [vmem:[#allocation3] sm:$0xff] %vm486, %v826
        %835 = vst.msk [vmem:[#allocation3 + $0x8] sm:$0xff] %vm486, %v827
        %836 = vst.msk [vmem:[#allocation3 + $0x10] sm:$0xff] %vm486, %v828
        %837 = vst.msk [vmem:[#allocation3 + $0x18] sm:$0xff] %vm486, %v829
        %838 = vst.msk [vmem:[#allocation3 + $0x20] sm:$0xff] %vm486, %v830
        %839 = vst.msk [vmem:[#allocation3 + $0x28] sm:$0xff] %vm486, %v831
        %840 = vst.msk [vmem:[#allocation3 + $0x30] sm:$0xff] %vm486, %v832
        %841 = vst.msk [vmem:[#allocation3 + $0x38] sm:$0xff] %vm486, %v833
        %v842 = vld [vmem:[#allocation2] sm:$0xff]
        %v843 = vld [vmem:[#allocation2 + $0x8] sm:$0xff]
        %v844 = vld [vmem:[#allocation2 + $0x10] sm:$0xff]
        %v845 = vld [vmem:[#allocation2 + $0x18] sm:$0xff]
        %v846 = vld [vmem:[#allocation2 + $0x20] sm:$0xff]
        %v847 = vld [vmem:[#allocation2 + $0x28] sm:$0xff]
        %v848 = vld [vmem:[#allocation2 + $0x30] sm:$0xff]
        %v849 = vld [vmem:[#allocation2 + $0x38] sm:$0xff]
        %v850 = vld [vmem:[%s314 + $0x8] sm:$0xff]
        %v851 = vld [vmem:[%s319] sm:$0xff]
        %v852 = vld [vmem:[%s319 + $0x8] sm:$0xff]
        %861 = vrot.lane.b32.xlu0 %v842, 120
        %v862 = vpop.permute.xlu0 %861
        %863 = vrot.lane.b32.xlu0 %v843, 120
        %v864 = vpop.permute.xlu0 %863
        %865 = vrot.lane.b32.xlu0 %v844, 120
        %v866 = vpop.permute.xlu0 %865
        %867 = vrot.lane.b32.xlu0 %v845, 120
        %v868 = vpop.permute.xlu0 %867
        %869 = vrot.lane.b32.xlu0 %v846, 120
        %v870 = vpop.permute.xlu0 %869
        %871 = vrot.lane.b32.xlu0 %v847, 120
        %v872 = vpop.permute.xlu0 %871
        %873 = vrot.lane.b32.xlu0 %v848, 120
        %v874 = vpop.permute.xlu0 %873
        %875 = vrot.lane.b32.xlu0 %v849, 120
        %v876 = vpop.permute.xlu0 %875
        %v877 = vsel %vm486, %v862, 0
        %v879 = vsel %vm486, %v864, 0
        %v881 = vsel %vm486, %v866, 0
        %v883 = vsel %vm486, %v868, 0
        %v885 = vsel %vm486, %v870, 0
        %v887 = vsel %vm486, %v872, 0
        %v889 = vsel %vm486, %v874, 0
        %v891 = vsel %vm486, %v876, 0
        %893 = vmatprep.subr.mxu0 0.0
        %894 = vmatpush1.msra.mxu0 %v850
        %895 = vmatprep.subr.mxu0 0.0
        %896 = vmatpush1.msra.mxu0 0.0
        %897 = vmatprep.subr.mxu0 0.0
        %898 = vmatpush1.msra.mxu0 0.0
        %899 = vmatprep.subr.mxu0 0.0
        %900 = vmatpush1.msra.mxu0 0.0
        %901 = vmatprep.subr.mxu0 0.0
        %902 = vmatpush1.msra.mxu0 0.0
        %903 = vmatprep.subr.mxu0 0.0
        %904 = vmatpush1.msra.mxu0 0.0
        %905 = vmatprep.subr.mxu0 0.0
        %906 = vmatpush1.msra.mxu0 0.0
        %907 = vmatprep.subr.mxu0 0.0
        %908 = vmatpush1.msra.mxu0 0.0
        %909 = vmatprep.subr.mxu0 0.0
        %910 = vmatpush1.msra.mxu0 0.0
        %911 = vmatprep.subr.mxu0 0.0
        %912 = vmatpush1.msra.mxu0 0.0
        %913 = vmatprep.subr.mxu0 0.0
        %914 = vmatpush1.msra.mxu0 0.0
        %915 = vmatprep.subr.mxu0 0.0
        %916 = vmatpush1.msra.mxu0 0.0
        %917 = vmatprep.subr.mxu0 0.0
        %918 = vmatpush1.msra.mxu0 0.0
        %919 = vmatprep.subr.mxu0 0.0
        %920 = vmatpush1.msra.mxu0 0.0
        %921 = vmatprep.subr.mxu0 0.0
        %922 = vmatpush1.msra.mxu0 0.0
        %923 = vmatprep.subr.mxu0 0.0
        %924 = vmatpush1.msra.mxu0 0.0
        %925 = vmatprep.subr.mxu0 0.0
        %926 = vmatpush1.msra.mxu0 0.0
        %927 = vmatprep.subr.mxu0 0.0
        %928 = vmatpush1.msra.mxu0 0.0
        %929 = vmatprep.subr.mxu0 0.0
        %930 = vmatpush1.msra.mxu0 0.0
        %931 = vmatprep.subr.mxu0 0.0
        %932 = vmatpush1.msra.mxu0 0.0
        %933 = vmatprep.subr.mxu0 0.0
        %934 = vmatpush1.msra.mxu0 0.0
        %935 = vmatprep.subr.mxu0 0.0
        %936 = vmatpush1.msra.mxu0 0.0
        %937 = vmatprep.subr.mxu0 0.0
        %938 = vmatpush1.msra.mxu0 0.0
        %939 = vmatprep.subr.mxu0 0.0
        %940 = vmatpush1.msra.mxu0 0.0
        %941 = vmatprep.subr.mxu0 0.0
        %942 = vmatpush1.msra.mxu0 0.0
        %943 = vmatprep.subr.mxu0 0.0
        %944 = vmatpush1.msra.mxu0 0.0
        %945 = vmatprep.subr.mxu0 0.0
        %946 = vmatpush1.msra.mxu0 0.0
        %947 = vmatprep.subr.mxu0 0.0
        %948 = vmatpush1.msra.mxu0 0.0
        %949 = vmatprep.subr.mxu0 0.0
        %950 = vmatpush1.msra.mxu0 0.0
        %951 = vmatprep.subr.mxu0 0.0
        %952 = vmatpush1.msra.mxu0 0.0
        %953 = vmatprep.subr.mxu0 0.0
        %954 = vmatpush1.msra.mxu0 0.0
        %955 = vmatprep.subr.mxu0 0.0
        %956 = vmatpush1.msra.mxu0 0.0
        %957 = vmatprep.mubr.f32.mxu0 0.0
        %958 = vmatmul.mubr.f32.gmra.mrb[0].mxu0 %v877
        %v959 = vpop.f32.mrb[0].mxu0
        %v960 = vadd.f32 0.0, %v959
        %v961 = vpop.f32.mrb[0].mxu0
        %962 = vmatprep.mubr.f32.mxu0 0.0
        %963 = vmatmul.mubr.f32.gmra.mrb[0].mxu0 %v879
        %v964 = vpop.f32.mrb[0].mxu0
        %v965 = vadd.f32 0.0, %v964
        %v966 = vpop.f32.mrb[0].mxu0
        %967 = vmatprep.mubr.f32.mxu0 0.0
        %968 = vmatmul.mubr.f32.gmra.mrb[0].mxu0 %v881
        %v969 = vpop.f32.mrb[0].mxu0
        %v970 = vadd.f32 0.0, %v969
        %v971 = vpop.f32.mrb[0].mxu0
        %972 = vmatprep.mubr.f32.mxu0 0.0
        %973 = vmatmul.mubr.f32.gmra.mrb[0].mxu0 %v883
        %v974 = vpop.f32.mrb[0].mxu0
        %v975 = vadd.f32 0.0, %v974
        %v976 = vpop.f32.mrb[0].mxu0
        %977 = vmatprep.mubr.f32.mxu0 0.0
        %978 = vmatmul.mubr.f32.gmra.mrb[0].mxu0 %v885
        %v979 = vpop.f32.mrb[0].mxu0
        %v980 = vadd.f32 0.0, %v979
        %v981 = vpop.f32.mrb[0].mxu0
        %982 = vmatprep.mubr.f32.mxu0 0.0
        %983 = vmatmul.mubr.f32.gmra.mrb[0].mxu0 %v887
        %v984 = vpop.f32.mrb[0].mxu0
        %v985 = vadd.f32 0.0, %v984
        %v986 = vpop.f32.mrb[0].mxu0
        %987 = vmatprep.mubr.f32.mxu0 0.0
        %988 = vmatmul.mubr.f32.gmra.mrb[0].mxu0 %v889
        %v989 = vpop.f32.mrb[0].mxu0
        %v990 = vadd.f32 0.0, %v989
        %v991 = vpop.f32.mrb[0].mxu0
        %992 = vmatprep.mubr.f32.mxu0 0.0
        %993 = vmatmul.mubr.f32.gmra.mrb[0].mxu0 %v891
        %v994 = vpop.f32.mrb[0].mxu0
        %v995 = vadd.f32 0.0, %v994
        %v996 = vpop.f32.mrb[0].mxu0
        %997 = vdwg.mxu0
        %v998 = vsel %vm616, %v960, -inf
        %999 = vmax.xlane.f32.xlu0 %v998
        %v1000 = vpop.xlane.xlu0 %999
        %v1001 = vsel %vm616, %v965, -inf
        %1002 = vmax.xlane.f32.xlu0 %v1001
        %v1003 = vpop.xlane.xlu0 %1002
        %v1004 = vsel %vm616, %v970, -inf
        %1005 = vmax.xlane.f32.xlu0 %v1004
        %v1006 = vpop.xlane.xlu0 %1005
        %v1007 = vsel %vm616, %v975, -inf
        %1008 = vmax.xlane.f32.xlu0 %v1007
        %v1009 = vpop.xlane.xlu0 %1008
        %v1010 = vsel %vm616, %v980, -inf
        %1011 = vmax.xlane.f32.xlu0 %v1010
        %v1012 = vpop.xlane.xlu0 %1011
        %v1013 = vsel %vm616, %v985, -inf
        %1014 = vmax.xlane.f32.xlu0 %v1013
        %v1015 = vpop.xlane.xlu0 %1014
        %v1016 = vsel %vm616, %v990, -inf
        %1017 = vmax.xlane.f32.xlu0 %v1016
        %v1018 = vpop.xlane.xlu0 %1017
        %v1019 = vsel %vm616, %v995, -inf
        %1020 = vmax.xlane.f32.xlu0 %v1019
        %v1021 = vpop.xlane.xlu0 %1020
        %v1022 = vsub.f32 %v960, %v1000
        %v1023 = vsub.f32 %v965, %v1003
        %v1024 = vsub.f32 %v970, %v1006
        %v1025 = vsub.f32 %v975, %v1009
        %v1026 = vsub.f32 %v980, %v1012
        %v1027 = vsub.f32 %v985, %v1015
        %v1028 = vsub.f32 %v990, %v1018
        %v1029 = vsub.f32 %v995, %v1021
        %v1030 = vmul.f32 %v1022, 1.442695
        %v1031 = vpow.pop %v1030
        %v1032 = vmul.f32 %v1023, 1.442695
        %v1033 = vpow.pop %v1032
        %v1034 = vmul.f32 %v1024, 1.442695
        %v1035 = vpow.pop %v1034
        %v1036 = vmul.f32 %v1025, 1.442695
        %v1037 = vpow.pop %v1036
        %v1038 = vmul.f32 %v1026, 1.442695
        %v1039 = vpow.pop %v1038
        %v1040 = vmul.f32 %v1027, 1.442695
        %v1041 = vpow.pop %v1040
        %v1042 = vmul.f32 %v1028, 1.442695
        %v1043 = vpow.pop %v1042
        %v1044 = vmul.f32 %v1029, 1.442695
        %v1045 = vpow.pop %v1044
        %v1046 = vsel %vm616, %v1031, 0.0
        %1047 = vadd.xlane.f32.xlu0 %v1046
        %v1048 = vpop.xlane.xlu0 %1047
        %v1049 = vsel %vm616, %v1033, 0.0
        %1050 = vadd.xlane.f32.xlu0 %v1049
        %v1051 = vpop.xlane.xlu0 %1050
        %v1052 = vsel %vm616, %v1035, 0.0
        %1053 = vadd.xlane.f32.xlu0 %v1052
        %v1054 = vpop.xlane.xlu0 %1053
        %v1055 = vsel %vm616, %v1037, 0.0
        %1056 = vadd.xlane.f32.xlu0 %v1055
        %v1057 = vpop.xlane.xlu0 %1056
        %v1058 = vsel %vm616, %v1039, 0.0
        %1059 = vadd.xlane.f32.xlu0 %v1058
        %v1060 = vpop.xlane.xlu0 %1059
        %v1061 = vsel %vm616, %v1041, 0.0
        %1062 = vadd.xlane.f32.xlu0 %v1061
        %v1063 = vpop.xlane.xlu0 %1062
        %v1064 = vsel %vm616, %v1043, 0.0
        %1065 = vadd.xlane.f32.xlu0 %v1064
        %v1066 = vpop.xlane.xlu0 %1065
        %v1067 = vsel %vm616, %v1045, 0.0
        %1068 = vadd.xlane.f32.xlu0 %v1067
        %v1069 = vpop.xlane.xlu0 %1068
        %1072 = vrot.lane.b32.xlu0 %v851, 120
        %v1073 = vpop.permute.xlu0 %1072
        %1074 = vrot.lane.b32.xlu0 %v852, 120
        %v1075 = vpop.permute.xlu0 %1074
        %v1079 = vsel %vm616, %v1031, 0
        %v1082 = vsel %vm616, %v1033, 0
        %v1085 = vsel %vm616, %v1035, 0
        %v1088 = vsel %vm616, %v1037, 0
        %v1091 = vsel %vm616, %v1039, 0
        %v1094 = vsel %vm616, %v1041, 0
        %v1097 = vsel %vm616, %v1043, 0
        %v1100 = vsel %vm616, %v1045, 0
        %1102 = vmatprep.subr.mxu0 0.0
        %1103 = vmatpush1.msra.mxu0 %v1073
        %1104 = vmatprep.subr.mxu0 0.0
        %1105 = vmatpush1.msra.mxu0 %v1075
        %1106 = vmatprep.subr.mxu0 0.0
        %1107 = vmatpush1.msra.mxu0 0.0
        %1108 = vmatprep.subr.mxu0 0.0
        %1109 = vmatpush1.msra.mxu0 0.0
        %1110 = vmatprep.subr.mxu0 0.0
        %1111 = vmatpush1.msra.mxu0 0.0
        %1112 = vmatprep.subr.mxu0 0.0
        %1113 = vmatpush1.msra.mxu0 0.0
        %1114 = vmatprep.subr.mxu0 0.0
        %1115 = vmatpush1.msra.mxu0 0.0
        %1116 = vmatprep.subr.mxu0 0.0
        %1117 = vmatpush1.msra.mxu0 0.0
        %1118 = vmatprep.subr.mxu0 0.0
        %1119 = vmatpush1.msra.mxu0 0.0
        %1120 = vmatprep.subr.mxu0 0.0
        %1121 = vmatpush1.msra.mxu0 0.0
        %1122 = vmatprep.subr.mxu0 0.0
        %1123 = vmatpush1.msra.mxu0 0.0
        %1124 = vmatprep.subr.mxu0 0.0
        %1125 = vmatpush1.msra.mxu0 0.0
        %1126 = vmatprep.subr.mxu0 0.0
        %1127 = vmatpush1.msra.mxu0 0.0
        %1128 = vmatprep.subr.mxu0 0.0
        %1129 = vmatpush1.msra.mxu0 0.0
        %1130 = vmatprep.subr.mxu0 0.0
        %1131 = vmatpush1.msra.mxu0 0.0
        %1132 = vmatprep.subr.mxu0 0.0
        %1133 = vmatpush1.msra.mxu0 0.0
        %1134 = vmatprep.subr.mxu0 0.0
        %1135 = vmatpush1.msra.mxu0 0.0
        %1136 = vmatprep.subr.mxu0 0.0
        %1137 = vmatpush1.msra.mxu0 0.0
        %1138 = vmatprep.subr.mxu0 0.0
        %1139 = vmatpush1.msra.mxu0 0.0
        %1140 = vmatprep.subr.mxu0 0.0
        %1141 = vmatpush1.msra.mxu0 0.0
        %1142 = vmatprep.subr.mxu0 0.0
        %1143 = vmatpush1.msra.mxu0 0.0
        %1144 = vmatprep.subr.mxu0 0.0
        %1145 = vmatpush1.msra.mxu0 0.0
        %1146 = vmatprep.subr.mxu0 0.0
        %1147 = vmatpush1.msra.mxu0 0.0
        %1148 = vmatprep.subr.mxu0 0.0
        %1149 = vmatpush1.msra.mxu0 0.0
        %1150 = vmatprep.subr.mxu0 0.0
        %1151 = vmatpush1.msra.mxu0 0.0
        %1152 = vmatprep.subr.mxu0 0.0
        %1153 = vmatpush1.msra.mxu0 0.0
        %1154 = vmatprep.subr.mxu0 0.0
        %1155 = vmatpush1.msra.mxu0 0.0
        %1156 = vmatprep.subr.mxu0 0.0
        %1157 = vmatpush1.msra.mxu0 0.0
        %1158 = vmatprep.subr.mxu0 0.0
        %1159 = vmatpush1.msra.mxu0 0.0
        %1160 = vmatprep.subr.mxu0 0.0
        %1161 = vmatpush1.msra.mxu0 0.0
        %1162 = vmatprep.subr.mxu0 0.0
        %1163 = vmatpush1.msra.mxu0 0.0
        %1164 = vmatprep.subr.mxu0 0.0
        %1165 = vmatpush1.msra.mxu0 0.0
        %1166 = vmatprep.mubr.f32.mxu0 0.0
        %1167 = vmatmul.mubr.f32.gmra.mrb[0].mxu0 %v1079
        %v1168 = vpop.f32.mrb[0].mxu0
        %v1169 = vadd.f32 0.0, %v1168
        %v1170 = vpop.f32.mrb[0].mxu0
        %1171 = vmatprep.mubr.f32.mxu0 0.0
        %1172 = vmatmul.mubr.f32.gmra.mrb[0].mxu0 %v1082
        %v1173 = vpop.f32.mrb[0].mxu0
        %v1174 = vadd.f32 0.0, %v1173
        %v1175 = vpop.f32.mrb[0].mxu0
        %1176 = vmatprep.mubr.f32.mxu0 0.0
        %1177 = vmatmul.mubr.f32.gmra.mrb[0].mxu0 %v1085
        %v1178 = vpop.f32.mrb[0].mxu0
        %v1179 = vadd.f32 0.0, %v1178
        %v1180 = vpop.f32.mrb[0].mxu0
        %1181 = vmatprep.mubr.f32.mxu0 0.0
        %1182 = vmatmul.mubr.f32.gmra.mrb[0].mxu0 %v1088
        %v1183 = vpop.f32.mrb[0].mxu0
        %v1184 = vadd.f32 0.0, %v1183
        %v1185 = vpop.f32.mrb[0].mxu0
        %1186 = vmatprep.mubr.f32.mxu0 0.0
        %1187 = vmatmul.mubr.f32.gmra.mrb[0].mxu0 %v1091
        %v1188 = vpop.f32.mrb[0].mxu0
        %v1189 = vadd.f32 0.0, %v1188
        %v1190 = vpop.f32.mrb[0].mxu0
        %1191 = vmatprep.mubr.f32.mxu0 0.0
        %1192 = vmatmul.mubr.f32.gmra.mrb[0].mxu0 %v1094
        %v1193 = vpop.f32.mrb[0].mxu0
        %v1194 = vadd.f32 0.0, %v1193
        %v1195 = vpop.f32.mrb[0].mxu0
        %1196 = vmatprep.mubr.f32.mxu0 0.0
        %1197 = vmatmul.mubr.f32.gmra.mrb[0].mxu0 %v1097
        %v1198 = vpop.f32.mrb[0].mxu0
        %v1199 = vadd.f32 0.0, %v1198
        %v1200 = vpop.f32.mrb[0].mxu0
        %1201 = vmatprep.mubr.f32.mxu0 0.0
        %1202 = vmatmul.mubr.f32.gmra.mrb[0].mxu0 %v1100
        %v1203 = vpop.f32.mrb[0].mxu0
        %v1204 = vadd.f32 0.0, %v1203
        %v1205 = vpop.f32.mrb[0].mxu0
        %1206 = vdwg.mxu0
        %v1207 = vrcp.pop %v1048
        %v1208 = vrcp.pop %v1051
        %v1209 = vrcp.pop %v1054
        %v1210 = vrcp.pop %v1057
        %v1211 = vrcp.pop %v1060
        %v1212 = vrcp.pop %v1063
        %v1213 = vrcp.pop %v1066
        %v1214 = vrcp.pop %v1069
        %v1215 = vmul.f32 %v1169, %v1207
        %v1216 = vmul.f32 %v1174, %v1208
        %v1217 = vmul.f32 %v1179, %v1209
        %v1218 = vmul.f32 %v1184, %v1210
        %v1219 = vmul.f32 %v1189, %v1211
        %v1220 = vmul.f32 %v1194, %v1212
        %v1221 = vmul.f32 %v1199, %v1213
        %v1222 = vmul.f32 %v1204, %v1214
        %1231 = vrot.lane.b32.xlu0 %v1215, 8
        %v1232 = vpop.permute.xlu0 %1231
        %1233 = vrot.lane.b32.xlu0 %v1216, 8
        %v1234 = vpop.permute.xlu0 %1233
        %1235 = vrot.lane.b32.xlu0 %v1217, 8
        %v1236 = vpop.permute.xlu0 %1235
        %1237 = vrot.lane.b32.xlu0 %v1218, 8
        %v1238 = vpop.permute.xlu0 %1237
        %1239 = vrot.lane.b32.xlu0 %v1219, 8
        %v1240 = vpop.permute.xlu0 %1239
        %1241 = vrot.lane.b32.xlu0 %v1220, 8
        %v1242 = vpop.permute.xlu0 %1241
        %1243 = vrot.lane.b32.xlu0 %v1221, 8
        %v1244 = vpop.permute.xlu0 %1243
        %1245 = vrot.lane.b32.xlu0 %v1222, 8
        %v1246 = vpop.permute.xlu0 %1245
        %vm1255 = vcmask 130112
        %1256 = vst.msk [vmem:[#allocation3] sm:$0xff] %vm1255, %v1232
        %1257 = vst.msk [vmem:[#allocation3 + $0x8] sm:$0xff] %vm1255, %v1234
        %1258 = vst.msk [vmem:[#allocation3 + $0x10] sm:$0xff] %vm1255, %v1236
        %1259 = vst.msk [vmem:[#allocation3 + $0x18] sm:$0xff] %vm1255, %v1238
        %1260 = vst.msk [vmem:[#allocation3 + $0x20] sm:$0xff] %vm1255, %v1240
        %1261 = vst.msk [vmem:[#allocation3 + $0x28] sm:$0xff] %vm1255, %v1242
        %1262 = vst.msk [vmem:[#allocation3 + $0x30] sm:$0xff] %vm1255, %v1244
        %1263 = vst.msk [vmem:[#allocation3 + $0x38] sm:$0xff] %vm1255, %v1246
        %v1264 = vld [vmem:[#allocation2] sm:$0xff]
        %v1265 = vld [vmem:[#allocation2 + $0x8] sm:$0xff]
        %v1266 = vld [vmem:[#allocation2 + $0x10] sm:$0xff]
        %v1267 = vld [vmem:[#allocation2 + $0x18] sm:$0xff]
        %v1268 = vld [vmem:[#allocation2 + $0x20] sm:$0xff]
        %v1269 = vld [vmem:[#allocation2 + $0x28] sm:$0xff]
        %v1270 = vld [vmem:[#allocation2 + $0x30] sm:$0xff]
        %v1271 = vld [vmem:[#allocation2 + $0x38] sm:$0xff]
        %v1272 = vld [vmem:[%s314 + $0x10] sm:$0xff]
        %v1273 = vld [vmem:[%s319] sm:$0xff]
        %v1274 = vld [vmem:[%s319 + $0x8] sm:$0xff]
        %1283 = vrot.lane.b32.xlu0 %v1264, 112
        %v1284 = vpop.permute.xlu0 %1283
        %1285 = vrot.lane.b32.xlu0 %v1265, 112
        %v1286 = vpop.permute.xlu0 %1285
        %1287 = vrot.lane.b32.xlu0 %v1266, 112
        %v1288 = vpop.permute.xlu0 %1287
        %1289 = vrot.lane.b32.xlu0 %v1267, 112
        %v1290 = vpop.permute.xlu0 %1289
        %1291 = vrot.lane.b32.xlu0 %v1268, 112
        %v1292 = vpop.permute.xlu0 %1291
        %1293 = vrot.lane.b32.xlu0 %v1269, 112
        %v1294 = vpop.permute.xlu0 %1293
        %1295 = vrot.lane.b32.xlu0 %v1270, 112
        %v1296 = vpop.permute.xlu0 %1295
        %1297 = vrot.lane.b32.xlu0 %v1271, 112
        %v1298 = vpop.permute.xlu0 %1297
        %v1299 = vsel %vm486, %v1284, 0
        %v1301 = vsel %vm486, %v1286, 0
        %v1303 = vsel %vm486, %v1288, 0
        %v1305 = vsel %vm486, %v1290, 0
        %v1307 = vsel %vm486, %v1292, 0
        %v1309 = vsel %vm486, %v1294, 0
        %v1311 = vsel %vm486, %v1296, 0
        %v1313 = vsel %vm486, %v1298, 0
        %1315 = vmatprep.subr.mxu0 0.0
        %1316 = vmatpush1.msra.mxu0 %v1272
        %1317 = vmatprep.subr.mxu0 0.0
        %1318 = vmatpush1.msra.mxu0 0.0
        %1319 = vmatprep.subr.mxu0 0.0
        %1320 = vmatpush1.msra.mxu0 0.0
        %1321 = vmatprep.subr.mxu0 0.0
        %1322 = vmatpush1.msra.mxu0 0.0
        %1323 = vmatprep.subr.mxu0 0.0
        %1324 = vmatpush1.msra.mxu0 0.0
        %1325 = vmatprep.subr.mxu0 0.0
        %1326 = vmatpush1.msra.mxu0 0.0
        %1327 = vmatprep.subr.mxu0 0.0
        %1328 = vmatpush1.msra.mxu0 0.0
        %1329 = vmatprep.subr.mxu0 0.0
        %1330 = vmatpush1.msra.mxu0 0.0
        %1331 = vmatprep.subr.mxu0 0.0
        %1332 = vmatpush1.msra.mxu0 0.0
        %1333 = vmatprep.subr.mxu0 0.0
        %1334 = vmatpush1.msra.mxu0 0.0
        %1335 = vmatprep.subr.mxu0 0.0
        %1336 = vmatpush1.msra.mxu0 0.0
        %1337 = vmatprep.subr.mxu0 0.0
        %1338 = vmatpush1.msra.mxu0 0.0
        %1339 = vmatprep.subr.mxu0 0.0
        %1340 = vmatpush1.msra.mxu0 0.0
        %1341 = vmatprep.subr.mxu0 0.0
        %1342 = vmatpush1.msra.mxu0 0.0
        %1343 = vmatprep.subr.mxu0 0.0
        %1344 = vmatpush1.msra.mxu0 0.0
        %1345 = vmatprep.subr.mxu0 0.0
        %1346 = vmatpush1.msra.mxu0 0.0
        %1347 = vmatprep.subr.mxu0 0.0
        %1348 = vmatpush1.msra.mxu0 0.0
        %1349 = vmatprep.subr.mxu0 0.0
        %1350 = vmatpush1.msra.mxu0 0.0
        %1351 = vmatprep.subr.mxu0 0.0
        %1352 = vmatpush1.msra.mxu0 0.0
        %1353 = vmatprep.subr.mxu0 0.0
        %1354 = vmatpush1.msra.mxu0 0.0
        %1355 = vmatprep.subr.mxu0 0.0
        %1356 = vmatpush1.msra.mxu0 0.0
        %1357 = vmatprep.subr.mxu0 0.0
        %1358 = vmatpush1.msra.mxu0 0.0
        %1359 = vmatprep.subr.mxu0 0.0
        %1360 = vmatpush1.msra.mxu0 0.0
        %1361 = vmatprep.subr.mxu0 0.0
        %1362 = vmatpush1.msra.mxu0 0.0
        %1363 = vmatprep.subr.mxu0 0.0
        %1364 = vmatpush1.msra.mxu0 0.0
        %1365 = vmatprep.subr.mxu0 0.0
        %1366 = vmatpush1.msra.mxu0 0.0
        %1367 = vmatprep.subr.mxu0 0.0
        %1368 = vmatpush1.msra.mxu0 0.0
        %1369 = vmatprep.subr.mxu0 0.0
        %1370 = vmatpush1.msra.mxu0 0.0
        %1371 = vmatprep.subr.mxu0 0.0
        %1372 = vmatpush1.msra.mxu0 0.0
        %1373 = vmatprep.subr.mxu0 0.0
        %1374 = vmatpush1.msra.mxu0 0.0
        %1375 = vmatprep.subr.mxu0 0.0
        %1376 = vmatpush1.msra.mxu0 0.0
        %1377 = vmatprep.subr.mxu0 0.0
        %1378 = vmatpush1.msra.mxu0 0.0
        %1379 = vmatprep.mubr.f32.mxu0 0.0
        %1380 = vmatmul.mubr.f32.gmra.mrb[0].mxu0 %v1299
        %v1381 = vpop.f32.mrb[0].mxu0
        %v1382 = vadd.f32 0.0, %v1381
        %v1383 = vpop.f32.mrb[0].mxu0
        %1384 = vmatprep.mubr.f32.mxu0 0.0
        %1385 = vmatmul.mubr.f32.gmra.mrb[0].mxu0 %v1301
        %v1386 = vpop.f32.mrb[0].mxu0
        %v1387 = vadd.f32 0.0, %v1386
        %v1388 = vpop.f32.mrb[0].mxu0
        %1389 = vmatprep.mubr.f32.mxu0 0.0
        %1390 = vmatmul.mubr.f32.gmra.mrb[0].mxu0 %v1303
        %v1391 = vpop.f32.mrb[0].mxu0
        %v1392 = vadd.f32 0.0, %v1391
        %v1393 = vpop.f32.mrb[0].mxu0
        %1394 = vmatprep.mubr.f32.mxu0 0.0
        %1395 = vmatmul.mubr.f32.gmra.mrb[0].mxu0 %v1305
        %v1396 = vpop.f32.mrb[0].mxu0
        %v1397 = vadd.f32 0.0, %v1396
        %v1398 = vpop.f32.mrb[0].mxu0
        %1399 = vmatprep.mubr.f32.mxu0 0.0
        %1400 = vmatmul.mubr.f32.gmra.mrb[0].mxu0 %v1307
        %v1401 = vpop.f32.mrb[0].mxu0
        %v1402 = vadd.f32 0.0, %v1401
        %v1403 = vpop.f32.mrb[0].mxu0
        %1404 = vmatprep.mubr.f32.mxu0 0.0
        %1405 = vmatmul.mubr.f32.gmra.mrb[0].mxu0 %v1309
        %v1406 = vpop.f32.mrb[0].mxu0
        %v1407 = vadd.f32 0.0, %v1406
        %v1408 = vpop.f32.mrb[0].mxu0
        %1409 = vmatprep.mubr.f32.mxu0 0.0
        %1410 = vmatmul.mubr.f32.gmra.mrb[0].mxu0 %v1311
        %v1411 = vpop.f32.mrb[0].mxu0
        %v1412 = vadd.f32 0.0, %v1411
        %v1413 = vpop.f32.mrb[0].mxu0
        %1414 = vmatprep.mubr.f32.mxu0 0.0
        %1415 = vmatmul.mubr.f32.gmra.mrb[0].mxu0 %v1313
        %v1416 = vpop.f32.mrb[0].mxu0
        %v1417 = vadd.f32 0.0, %v1416
        %v1418 = vpop.f32.mrb[0].mxu0
        %1419 = vdwg.mxu0
        %v1420 = vsel %vm616, %v1382, -inf
        %1421 = vmax.xlane.f32.xlu0 %v1420
        %v1422 = vpop.xlane.xlu0 %1421
        %v1423 = vsel %vm616, %v1387, -inf
        %1424 = vmax.xlane.f32.xlu0 %v1423
        %v1425 = vpop.xlane.xlu0 %1424
        %v1426 = vsel %vm616, %v1392, -inf
        %1427 = vmax.xlane.f32.xlu0 %v1426
        %v1428 = vpop.xlane.xlu0 %1427
        %v1429 = vsel %vm616, %v1397, -inf
        %1430 = vmax.xlane.f32.xlu0 %v1429
        %v1431 = vpop.xlane.xlu0 %1430
        %v1432 = vsel %vm616, %v1402, -inf
        %1433 = vmax.xlane.f32.xlu0 %v1432
        %v1434 = vpop.xlane.xlu0 %1433
        %v1435 = vsel %vm616, %v1407, -inf
        %1436 = vmax.xlane.f32.xlu0 %v1435
        %v1437 = vpop.xlane.xlu0 %1436
        %v1438 = vsel %vm616, %v1412, -inf
        %1439 = vmax.xlane.f32.xlu0 %v1438
        %v1440 = vpop.xlane.xlu0 %1439
        %v1441 = vsel %vm616, %v1417, -inf
        %1442 = vmax.xlane.f32.xlu0 %v1441
        %v1443 = vpop.xlane.xlu0 %1442
        %v1444 = vsub.f32 %v1382, %v1422
        %v1445 = vsub.f32 %v1387, %v1425
        %v1446 = vsub.f32 %v1392, %v1428
        %v1447 = vsub.f32 %v1397, %v1431
        %v1448 = vsub.f32 %v1402, %v1434
        %v1449 = vsub.f32 %v1407, %v1437
        %v1450 = vsub.f32 %v1412, %v1440
        %v1451 = vsub.f32 %v1417, %v1443
        %v1452 = vmul.f32 %v1444, 1.442695
        %v1453 = vpow.pop %v1452
        %v1454 = vmul.f32 %v1445, 1.442695
        %v1455 = vpow.pop %v1454
        %v1456 = vmul.f32 %v1446, 1.442695
        %v1457 = vpow.pop %v1456
        %v1458 = vmul.f32 %v1447, 1.442695
        %v1459 = vpow.pop %v1458
        %v1460 = vmul.f32 %v1448, 1.442695
        %v1461 = vpow.pop %v1460
        %v1462 = vmul.f32 %v1449, 1.442695
        %v1463 = vpow.pop %v1462
        %v1464 = vmul.f32 %v1450, 1.442695
        %v1465 = vpow.pop %v1464
        %v1466 = vmul.f32 %v1451, 1.442695
        %v1467 = vpow.pop %v1466
        %v1468 = vsel %vm616, %v1453, 0.0
        %1469 = vadd.xlane.f32.xlu0 %v1468
        %v1470 = vpop.xlane.xlu0 %1469
        %v1471 = vsel %vm616, %v1455, 0.0
        %1472 = vadd.xlane.f32.xlu0 %v1471
        %v1473 = vpop.xlane.xlu0 %1472
        %v1474 = vsel %vm616, %v1457, 0.0
        %1475 = vadd.xlane.f32.xlu0 %v1474
        %v1476 = vpop.xlane.xlu0 %1475
        %v1477 = vsel %vm616, %v1459, 0.0
        %1478 = vadd.xlane.f32.xlu0 %v1477
        %v1479 = vpop.xlane.xlu0 %1478
        %v1480 = vsel %vm616, %v1461, 0.0
        %1481 = vadd.xlane.f32.xlu0 %v1480
        %v1482 = vpop.xlane.xlu0 %1481
        %v1483 = vsel %vm616, %v1463, 0.0
        %1484 = vadd.xlane.f32.xlu0 %v1483
        %v1485 = vpop.xlane.xlu0 %1484
        %v1486 = vsel %vm616, %v1465, 0.0
        %1487 = vadd.xlane.f32.xlu0 %v1486
        %v1488 = vpop.xlane.xlu0 %1487
        %v1489 = vsel %vm616, %v1467, 0.0
        %1490 = vadd.xlane.f32.xlu0 %v1489
        %v1491 = vpop.xlane.xlu0 %1490
        %1494 = vrot.lane.b32.xlu0 %v1273, 112
        %v1495 = vpop.permute.xlu0 %1494
        %1496 = vrot.lane.b32.xlu0 %v1274, 112
        %v1497 = vpop.permute.xlu0 %1496
        %v1501 = vsel %vm616, %v1453, 0
        %v1504 = vsel %vm616, %v1455, 0
        %v1507 = vsel %vm616, %v1457, 0
        %v1510 = vsel %vm616, %v1459, 0
        %v1513 = vsel %vm616, %v1461, 0
        %v1516 = vsel %vm616, %v1463, 0
        %v1519 = vsel %vm616, %v1465, 0
        %v1522 = vsel %vm616, %v1467, 0
        %1524 = vmatprep.subr.mxu0 0.0
        %1525 = vmatpush1.msra.mxu0 %v1495
        %1526 = vmatprep.subr.mxu0 0.0
        %1527 = vmatpush1.msra.mxu0 %v1497
        %1528 = vmatprep.subr.mxu0 0.0
        %1529 = vmatpush1.msra.mxu0 0.0
        %1530 = vmatprep.subr.mxu0 0.0
        %1531 = vmatpush1.msra.mxu0 0.0
        %1532 = vmatprep.subr.mxu0 0.0
        %1533 = vmatpush1.msra.mxu0 0.0
        %1534 = vmatprep.subr.mxu0 0.0
        %1535 = vmatpush1.msra.mxu0 0.0
        %1536 = vmatprep.subr.mxu0 0.0
        %1537 = vmatpush1.msra.mxu0 0.0
        %1538 = vmatprep.subr.mxu0 0.0
        %1539 = vmatpush1.msra.mxu0 0.0
        %1540 = vmatprep.subr.mxu0 0.0
        %1541 = vmatpush1.msra.mxu0 0.0
        %1542 = vmatprep.subr.mxu0 0.0
        %1543 = vmatpush1.msra.mxu0 0.0
        %1544 = vmatprep.subr.mxu0 0.0
        %1545 = vmatpush1.msra.mxu0 0.0
        %1546 = vmatprep.subr.mxu0 0.0
        %1547 = vmatpush1.msra.mxu0 0.0
        %1548 = vmatprep.subr.mxu0 0.0
        %1549 = vmatpush1.msra.mxu0 0.0
        %1550 = vmatprep.subr.mxu0 0.0
        %1551 = vmatpush1.msra.mxu0 0.0
        %1552 = vmatprep.subr.mxu0 0.0
        %1553 = vmatpush1.msra.mxu0 0.0
        %1554 = vmatprep.subr.mxu0 0.0
        %1555 = vmatpush1.msra.mxu0 0.0
        %1556 = vmatprep.subr.mxu0 0.0
        %1557 = vmatpush1.msra.mxu0 0.0
        %1558 = vmatprep.subr.mxu0 0.0
        %1559 = vmatpush1.msra.mxu0 0.0
        %1560 = vmatprep.subr.mxu0 0.0
        %1561 = vmatpush1.msra.mxu0 0.0
        %1562 = vmatprep.subr.mxu0 0.0
        %1563 = vmatpush1.msra.mxu0 0.0
        %1564 = vmatprep.subr.mxu0 0.0
        %1565 = vmatpush1.msra.mxu0 0.0
        %1566 = vmatprep.subr.mxu0 0.0
        %1567 = vmatpush1.msra.mxu0 0.0
        %1568 = vmatprep.subr.mxu0 0.0
        %1569 = vmatpush1.msra.mxu0 0.0
        %1570 = vmatprep.subr.mxu0 0.0
        %1571 = vmatpush1.msra.mxu0 0.0
        %1572 = vmatprep.subr.mxu0 0.0
        %1573 = vmatpush1.msra.mxu0 0.0
        %1574 = vmatprep.subr.mxu0 0.0
        %1575 = vmatpush1.msra.mxu0 0.0
        %1576 = vmatprep.subr.mxu0 0.0
        %1577 = vmatpush1.msra.mxu0 0.0
        %1578 = vmatprep.subr.mxu0 0.0
        %1579 = vmatpush1.msra.mxu0 0.0
        %1580 = vmatprep.subr.mxu0 0.0
        %1581 = vmatpush1.msra.mxu0 0.0
        %1582 = vmatprep.subr.mxu0 0.0
        %1583 = vmatpush1.msra.mxu0 0.0
        %1584 = vmatprep.subr.mxu0 0.0
        %1585 = vmatpush1.msra.mxu0 0.0
        %1586 = vmatprep.subr.mxu0 0.0
        %1587 = vmatpush1.msra.mxu0 0.0
        %1588 = vmatprep.mubr.f32.mxu0 0.0
        %1589 = vmatmul.mubr.f32.gmra.mrb[0].mxu0 %v1501
        %v1590 = vpop.f32.mrb[0].mxu0
        %v1591 = vadd.f32 0.0, %v1590
        %v1592 = vpop.f32.mrb[0].mxu0
        %1593 = vmatprep.mubr.f32.mxu0 0.0
        %1594 = vmatmul.mubr.f32.gmra.mrb[0].mxu0 %v1504
        %v1595 = vpop.f32.mrb[0].mxu0
        %v1596 = vadd.f32 0.0, %v1595
        %v1597 = vpop.f32.mrb[0].mxu0
        %1598 = vmatprep.mubr.f32.mxu0 0.0
        %1599 = vmatmul.mubr.f32.gmra.mrb[0].mxu0 %v1507
        %v1600 = vpop.f32.mrb[0].mxu0
        %v1601 = vadd.f32 0.0, %v1600
        %v1602 = vpop.f32.mrb[0].mxu0
        %1603 = vmatprep.mubr.f32.mxu0 0.0
        %1604 = vmatmul.mubr.f32.gmra.mrb[0].mxu0 %v1510
        %v1605 = vpop.f32.mrb[0].mxu0
        %v1606 = vadd.f32 0.0, %v1605
        %v1607 = vpop.f32.mrb[0].mxu0
        %1608 = vmatprep.mubr.f32.mxu0 0.0
        %1609 = vmatmul.mubr.f32.gmra.mrb[0].mxu0 %v1513
        %v1610 = vpop.f32.mrb[0].mxu0
        %v1611 = vadd.f32 0.0, %v1610
        %v1612 = vpop.f32.mrb[0].mxu0
        %1613 = vmatprep.mubr.f32.mxu0 0.0
        %1614 = vmatmul.mubr.f32.gmra.mrb[0].mxu0 %v1516
        %v1615 = vpop.f32.mrb[0].mxu0
        %v1616 = vadd.f32 0.0, %v1615
        %v1617 = vpop.f32.mrb[0].mxu0
        %1618 = vmatprep.mubr.f32.mxu0 0.0
        %1619 = vmatmul.mubr.f32.gmra.mrb[0].mxu0 %v1519
        %v1620 = vpop.f32.mrb[0].mxu0
        %v1621 = vadd.f32 0.0, %v1620
        %v1622 = vpop.f32.mrb[0].mxu0
        %1623 = vmatprep.mubr.f32.mxu0 0.0
        %1624 = vmatmul.mubr.f32.gmra.mrb[0].mxu0 %v1522
        %v1625 = vpop.f32.mrb[0].mxu0
        %v1626 = vadd.f32 0.0, %v1625
        %v1627 = vpop.f32.mrb[0].mxu0
        %1628 = vdwg.mxu0
        %v1629 = vrcp.pop %v1470
        %v1630 = vrcp.pop %v1473
        %v1631 = vrcp.pop %v1476
        %v1632 = vrcp.pop %v1479
        %v1633 = vrcp.pop %v1482
        %v1634 = vrcp.pop %v1485
        %v1635 = vrcp.pop %v1488
        %v1636 = vrcp.pop %v1491
        %v1637 = vmul.f32 %v1591, %v1629
        %v1638 = vmul.f32 %v1596, %v1630
        %v1639 = vmul.f32 %v1601, %v1631
        %v1640 = vmul.f32 %v1606, %v1632
        %v1641 = vmul.f32 %v1611, %v1633
        %v1642 = vmul.f32 %v1616, %v1634
        %v1643 = vmul.f32 %v1621, %v1635
        %v1644 = vmul.f32 %v1626, %v1636
        %1653 = vrot.lane.b32.xlu0 %v1637, 16
        %v1654 = vpop.permute.xlu0 %1653
        %1655 = vrot.lane.b32.xlu0 %v1638, 16
        %v1656 = vpop.permute.xlu0 %1655
        %1657 = vrot.lane.b32.xlu0 %v1639, 16
        %v1658 = vpop.permute.xlu0 %1657
        %1659 = vrot.lane.b32.xlu0 %v1640, 16
        %v1660 = vpop.permute.xlu0 %1659
        %1661 = vrot.lane.b32.xlu0 %v1641, 16
        %v1662 = vpop.permute.xlu0 %1661
        %1663 = vrot.lane.b32.xlu0 %v1642, 16
        %v1664 = vpop.permute.xlu0 %1663
        %1665 = vrot.lane.b32.xlu0 %v1643, 16
        %v1666 = vpop.permute.xlu0 %1665
        %1667 = vrot.lane.b32.xlu0 %v1644, 16
        %v1668 = vpop.permute.xlu0 %1667
        %vm1677 = vcmask 195712
        %1678 = vst.msk [vmem:[#allocation3] sm:$0xff] %vm1677, %v1654
        %1679 = vst.msk [vmem:[#allocation3 + $0x8] sm:$0xff] %vm1677, %v1656
        %1680 = vst.msk [vmem:[#allocation3 + $0x10] sm:$0xff] %vm1677, %v1658
        %1681 = vst.msk [vmem:[#allocation3 + $0x18] sm:$0xff] %vm1677, %v1660
        %1682 = vst.msk [vmem:[#allocation3 + $0x20] sm:$0xff] %vm1677, %v1662
        %1683 = vst.msk [vmem:[#allocation3 + $0x28] sm:$0xff] %vm1677, %v1664
        %1684 = vst.msk [vmem:[#allocation3 + $0x30] sm:$0xff] %vm1677, %v1666
        %1685 = vst.msk [vmem:[#allocation3 + $0x38] sm:$0xff] %vm1677, %v1668
        %v1686 = vld [vmem:[#allocation2] sm:$0xff]
        %v1687 = vld [vmem:[#allocation2 + $0x8] sm:$0xff]
        %v1688 = vld [vmem:[#allocation2 + $0x10] sm:$0xff]
        %v1689 = vld [vmem:[#allocation2 + $0x18] sm:$0xff]
        %v1690 = vld [vmem:[#allocation2 + $0x20] sm:$0xff]
        %v1691 = vld [vmem:[#allocation2 + $0x28] sm:$0xff]
        %v1692 = vld [vmem:[#allocation2 + $0x30] sm:$0xff]
        %v1693 = vld [vmem:[#allocation2 + $0x38] sm:$0xff]
        %v1694 = vld [vmem:[%s314 + $0x18] sm:$0xff]
        %v1695 = vld [vmem:[%s319] sm:$0xff]
        %v1696 = vld [vmem:[%s319 + $0x8] sm:$0xff]
        %1705 = vrot.lane.b32.xlu0 %v1686, 104
        %v1706 = vpop.permute.xlu0 %1705
        %1707 = vrot.lane.b32.xlu0 %v1687, 104
        %v1708 = vpop.permute.xlu0 %1707
        %1709 = vrot.lane.b32.xlu0 %v1688, 104
        %v1710 = vpop.permute.xlu0 %1709
        %1711 = vrot.lane.b32.xlu0 %v1689, 104
        %v1712 = vpop.permute.xlu0 %1711
        %1713 = vrot.lane.b32.xlu0 %v1690, 104
        %v1714 = vpop.permute.xlu0 %1713
        %1715 = vrot.lane.b32.xlu0 %v1691, 104
        %v1716 = vpop.permute.xlu0 %1715
        %1717 = vrot.lane.b32.xlu0 %v1692, 104
        %v1718 = vpop.permute.xlu0 %1717
        %1719 = vrot.lane.b32.xlu0 %v1693, 104
        %v1720 = vpop.permute.xlu0 %1719
        %v1721 = vsel %vm486, %v1706, 0
        %v1723 = vsel %vm486, %v1708, 0
        %v1725 = vsel %vm486, %v1710, 0
        %v1727 = vsel %vm486, %v1712, 0
        %v1729 = vsel %vm486, %v1714, 0
        %v1731 = vsel %vm486, %v1716, 0
        %v1733 = vsel %vm486, %v1718, 0
        %v1735 = vsel %vm486, %v1720, 0
        %1737 = vmatprep.subr.mxu0 0.0
        %1738 = vmatpush1.msra.mxu0 %v1694
        %1739 = vmatprep.subr.mxu0 0.0
        %1740 = vmatpush1.msra.mxu0 0.0
        %1741 = vmatprep.subr.mxu0 0.0
        %1742 = vmatpush1.msra.mxu0 0.0
        %1743 = vmatprep.subr.mxu0 0.0
        %1744 = vmatpush1.msra.mxu0 0.0
        %1745 = vmatprep.subr.mxu0 0.0
        %1746 = vmatpush1.msra.mxu0 0.0
        %1747 = vmatprep.subr.mxu0 0.0
        %1748 = vmatpush1.msra.mxu0 0.0
        %1749 = vmatprep.subr.mxu0 0.0
        %1750 = vmatpush1.msra.mxu0 0.0
        %1751 = vmatprep.subr.mxu0 0.0
        %1752 = vmatpush1.msra.mxu0 0.0
        %1753 = vmatprep.subr.mxu0 0.0
        %1754 = vmatpush1.msra.mxu0 0.0
        %1755 = vmatprep.subr.mxu0 0.0
        %1756 = vmatpush1.msra.mxu0 0.0
        %1757 = vmatprep.subr.mxu0 0.0
        %1758 = vmatpush1.msra.mxu0 0.0
        %1759 = vmatprep.subr.mxu0 0.0
        %1760 = vmatpush1.msra.mxu0 0.0
        %1761 = vmatprep.subr.mxu0 0.0
        %1762 = vmatpush1.msra.mxu0 0.0
        %1763 = vmatprep.subr.mxu0 0.0
        %1764 = vmatpush1.msra.mxu0 0.0
        %1765 = vmatprep.subr.mxu0 0.0
        %1766 = vmatpush1.msra.mxu0 0.0
        %1767 = vmatprep.subr.mxu0 0.0
        %1768 = vmatpush1.msra.mxu0 0.0
        %1769 = vmatprep.subr.mxu0 0.0
        %1770 = vmatpush1.msra.mxu0 0.0
        %1771 = vmatprep.subr.mxu0 0.0
        %1772 = vmatpush1.msra.mxu0 0.0
        %1773 = vmatprep.subr.mxu0 0.0
        %1774 = vmatpush1.msra.mxu0 0.0
        %1775 = vmatprep.subr.mxu0 0.0
        %1776 = vmatpush1.msra.mxu0 0.0
        %1777 = vmatprep.subr.mxu0 0.0
        %1778 = vmatpush1.msra.mxu0 0.0
        %1779 = vmatprep.subr.mxu0 0.0
        %1780 = vmatpush1.msra.mxu0 0.0
        %1781 = vmatprep.subr.mxu0 0.0
        %1782 = vmatpush1.msra.mxu0 0.0
        %1783 = vmatprep.subr.mxu0 0.0
        %1784 = vmatpush1.msra.mxu0 0.0
        %1785 = vmatprep.subr.mxu0 0.0
        %1786 = vmatpush1.msra.mxu0 0.0
        %1787 = vmatprep.subr.mxu0 0.0
        %1788 = vmatpush1.msra.mxu0 0.0
        %1789 = vmatprep.subr.mxu0 0.0
        %1790 = vmatpush1.msra.mxu0 0.0
        %1791 = vmatprep.subr.mxu0 0.0
        %1792 = vmatpush1.msra.mxu0 0.0
        %1793 = vmatprep.subr.mxu0 0.0
        %1794 = vmatpush1.msra.mxu0 0.0
        %1795 = vmatprep.subr.mxu0 0.0
        %1796 = vmatpush1.msra.mxu0 0.0
        %1797 = vmatprep.subr.mxu0 0.0
        %1798 = vmatpush1.msra.mxu0 0.0
        %1799 = vmatprep.subr.mxu0 0.0
        %1800 = vmatpush1.msra.mxu0 0.0
        %1801 = vmatprep.mubr.f32.mxu0 0.0
        %1802 = vmatmul.mubr.f32.gmra.mrb[0].mxu0 %v1721
        %v1803 = vpop.f32.mrb[0].mxu0
        %v1804 = vadd.f32 0.0, %v1803
        %v1805 = vpop.f32.mrb[0].mxu0
        %1806 = vmatprep.mubr.f32.mxu0 0.0
        %1807 = vmatmul.mubr.f32.gmra.mrb[0].mxu0 %v1723
        %v1808 = vpop.f32.mrb[0].mxu0
        %v1809 = vadd.f32 0.0, %v1808
        %v1810 = vpop.f32.mrb[0].mxu0
        %1811 = vmatprep.mubr.f32.mxu0 0.0
        %1812 = vmatmul.mubr.f32.gmra.mrb[0].mxu0 %v1725
        %v1813 = vpop.f32.mrb[0].mxu0
        %v1814 = vadd.f32 0.0, %v1813
        %v1815 = vpop.f32.mrb[0].mxu0
        %1816 = vmatprep.mubr.f32.mxu0 0.0
        %1817 = vmatmul.mubr.f32.gmra.mrb[0].mxu0 %v1727
        %v1818 = vpop.f32.mrb[0].mxu0
        %v1819 = vadd.f32 0.0, %v1818
        %v1820 = vpop.f32.mrb[0].mxu0
        %1821 = vmatprep.mubr.f32.mxu0 0.0
        %1822 = vmatmul.mubr.f32.gmra.mrb[0].mxu0 %v1729
        %v1823 = vpop.f32.mrb[0].mxu0
        %v1824 = vadd.f32 0.0, %v1823
        %v1825 = vpop.f32.mrb[0].mxu0
        %1826 = vmatprep.mubr.f32.mxu0 0.0
        %1827 = vmatmul.mubr.f32.gmra.mrb[0].mxu0 %v1731
        %v1828 = vpop.f32.mrb[0].mxu0
        %v1829 = vadd.f32 0.0, %v1828
        %v1830 = vpop.f32.mrb[0].mxu0
        %1831 = vmatprep.mubr.f32.mxu0 0.0
        %1832 = vmatmul.mubr.f32.gmra.mrb[0].mxu0 %v1733
        %v1833 = vpop.f32.mrb[0].mxu0
        %v1834 = vadd.f32 0.0, %v1833
        %v1835 = vpop.f32.mrb[0].mxu0
        %1836 = vmatprep.mubr.f32.mxu0 0.0
        %1837 = vmatmul.mubr.f32.gmra.mrb[0].mxu0 %v1735
        %v1838 = vpop.f32.mrb[0].mxu0
        %v1839 = vadd.f32 0.0, %v1838
        %v1840 = vpop.f32.mrb[0].mxu0
        %1841 = vdwg.mxu0
        %v1842 = vsel %vm616, %v1804, -inf
        %1843 = vmax.xlane.f32.xlu0 %v1842
        %v1844 = vpop.xlane.xlu0 %1843
        %v1845 = vsel %vm616, %v1809, -inf
        %1846 = vmax.xlane.f32.xlu0 %v1845
        %v1847 = vpop.xlane.xlu0 %1846
        %v1848 = vsel %vm616, %v1814, -inf
        %1849 = vmax.xlane.f32.xlu0 %v1848
        %v1850 = vpop.xlane.xlu0 %1849
        %v1851 = vsel %vm616, %v1819, -inf
        %1852 = vmax.xlane.f32.xlu0 %v1851
        %v1853 = vpop.xlane.xlu0 %1852
        %v1854 = vsel %vm616, %v1824, -inf
        %1855 = vmax.xlane.f32.xlu0 %v1854
        %v1856 = vpop.xlane.xlu0 %1855
        %v1857 = vsel %vm616, %v1829, -inf
        %1858 = vmax.xlane.f32.xlu0 %v1857
        %v1859 = vpop.xlane.xlu0 %1858
        %v1860 = vsel %vm616, %v1834, -inf
        %1861 = vmax.xlane.f32.xlu0 %v1860
        %v1862 = vpop.xlane.xlu0 %1861
        %v1863 = vsel %vm616, %v1839, -inf
        %1864 = vmax.xlane.f32.xlu0 %v1863
        %v1865 = vpop.xlane.xlu0 %1864
        %v1866 = vsub.f32 %v1804, %v1844
        %v1867 = vsub.f32 %v1809, %v1847
        %v1868 = vsub.f32 %v1814, %v1850
        %v1869 = vsub.f32 %v1819, %v1853
        %v1870 = vsub.f32 %v1824, %v1856
        %v1871 = vsub.f32 %v1829, %v1859
        %v1872 = vsub.f32 %v1834, %v1862
        %v1873 = vsub.f32 %v1839, %v1865
        %v1874 = vmul.f32 %v1866, 1.442695
        %v1875 = vpow.pop %v1874
        %v1876 = vmul.f32 %v1867, 1.442695
        %v1877 = vpow.pop %v1876
        %v1878 = vmul.f32 %v1868, 1.442695
        %v1879 = vpow.pop %v1878
        %v1880 = vmul.f32 %v1869, 1.442695
        %v1881 = vpow.pop %v1880
        %v1882 = vmul.f32 %v1870, 1.442695
        %v1883 = vpow.pop %v1882
        %v1884 = vmul.f32 %v1871, 1.442695
        %v1885 = vpow.pop %v1884
        %v1886 = vmul.f32 %v1872, 1.442695
        %v1887 = vpow.pop %v1886
        %v1888 = vmul.f32 %v1873, 1.442695
        %v1889 = vpow.pop %v1888
        %v1890 = vsel %vm616, %v1875, 0.0
        %1891 = vadd.xlane.f32.xlu0 %v1890
        %v1892 = vpop.xlane.xlu0 %1891
        %v1893 = vsel %vm616, %v1877, 0.0
        %1894 = vadd.xlane.f32.xlu0 %v1893
        %v1895 = vpop.xlane.xlu0 %1894
        %v1896 = vsel %vm616, %v1879, 0.0
        %1897 = vadd.xlane.f32.xlu0 %v1896
        %v1898 = vpop.xlane.xlu0 %1897
        %v1899 = vsel %vm616, %v1881, 0.0
        %1900 = vadd.xlane.f32.xlu0 %v1899
        %v1901 = vpop.xlane.xlu0 %1900
        %v1902 = vsel %vm616, %v1883, 0.0
        %1903 = vadd.xlane.f32.xlu0 %v1902
        %v1904 = vpop.xlane.xlu0 %1903
        %v1905 = vsel %vm616, %v1885, 0.0
        %1906 = vadd.xlane.f32.xlu0 %v1905
        %v1907 = vpop.xlane.xlu0 %1906
        %v1908 = vsel %vm616, %v1887, 0.0
        %1909 = vadd.xlane.f32.xlu0 %v1908
        %v1910 = vpop.xlane.xlu0 %1909
        %v1911 = vsel %vm616, %v1889, 0.0
        %1912 = vadd.xlane.f32.xlu0 %v1911
        %v1913 = vpop.xlane.xlu0 %1912
        %1916 = vrot.lane.b32.xlu0 %v1695, 104
        %v1917 = vpop.permute.xlu0 %1916
        %1918 = vrot.lane.b32.xlu0 %v1696, 104
        %v1919 = vpop.permute.xlu0 %1918
        %v1923 = vsel %vm616, %v1875, 0
        %v1926 = vsel %vm616, %v1877, 0
        %v1929 = vsel %vm616, %v1879, 0
        %v1932 = vsel %vm616, %v1881, 0
        %v1935 = vsel %vm616, %v1883, 0
        %v1938 = vsel %vm616, %v1885, 0
        %v1941 = vsel %vm616, %v1887, 0
        %v1944 = vsel %vm616, %v1889, 0
        %1946 = vmatprep.subr.mxu0 0.0
        %1947 = vmatpush1.msra.mxu0 %v1917
        %1948 = vmatprep.subr.mxu0 0.0
        %1949 = vmatpush1.msra.mxu0 %v1919
        %1950 = vmatprep.subr.mxu0 0.0
        %1951 = vmatpush1.msra.mxu0 0.0
        %1952 = vmatprep.subr.mxu0 0.0
        %1953 = vmatpush1.msra.mxu0 0.0
        %1954 = vmatprep.subr.mxu0 0.0
        %1955 = vmatpush1.msra.mxu0 0.0
        %1956 = vmatprep.subr.mxu0 0.0
        %1957 = vmatpush1.msra.mxu0 0.0
        %1958 = vmatprep.subr.mxu0 0.0
        %1959 = vmatpush1.msra.mxu0 0.0
        %1960 = vmatprep.subr.mxu0 0.0
        %1961 = vmatpush1.msra.mxu0 0.0
        %1962 = vmatprep.subr.mxu0 0.0
        %1963 = vmatpush1.msra.mxu0 0.0
        %1964 = vmatprep.subr.mxu0 0.0
        %1965 = vmatpush1.msra.mxu0 0.0
        %1966 = vmatprep.subr.mxu0 0.0
        %1967 = vmatpush1.msra.mxu0 0.0
        %1968 = vmatprep.subr.mxu0 0.0
        %1969 = vmatpush1.msra.mxu0 0.0
        %1970 = vmatprep.subr.mxu0 0.0
        %1971 = vmatpush1.msra.mxu0 0.0
        %1972 = vmatprep.subr.mxu0 0.0
        %1973 = vmatpush1.msra.mxu0 0.0
        %1974 = vmatprep.subr.mxu0 0.0
        %1975 = vmatpush1.msra.mxu0 0.0
        %1976 = vmatprep.subr.mxu0 0.0
        %1977 = vmatpush1.msra.mxu0 0.0
        %1978 = vmatprep.subr.mxu0 0.0
        %1979 = vmatpush1.msra.mxu0 0.0
        %1980 = vmatprep.subr.mxu0 0.0
        %1981 = vmatpush1.msra.mxu0 0.0
        %1982 = vmatprep.subr.mxu0 0.0
        %1983 = vmatpush1.msra.mxu0 0.0
        %1984 = vmatprep.subr.mxu0 0.0
        %1985 = vmatpush1.msra.mxu0 0.0
        %1986 = vmatprep.subr.mxu0 0.0
        %1987 = vmatpush1.msra.mxu0 0.0
        %1988 = vmatprep.subr.mxu0 0.0
        %1989 = vmatpush1.msra.mxu0 0.0
        %1990 = vmatprep.subr.mxu0 0.0
        %1991 = vmatpush1.msra.mxu0 0.0
        %1992 = vmatprep.subr.mxu0 0.0
        %1993 = vmatpush1.msra.mxu0 0.0
        %1994 = vmatprep.subr.mxu0 0.0
        %1995 = vmatpush1.msra.mxu0 0.0
        %1996 = vmatprep.subr.mxu0 0.0
        %1997 = vmatpush1.msra.mxu0 0.0
        %1998 = vmatprep.subr.mxu0 0.0
        %1999 = vmatpush1.msra.mxu0 0.0
        %2000 = vmatprep.subr.mxu0 0.0
        %2001 = vmatpush1.msra.mxu0 0.0
        %2002 = vmatprep.subr.mxu0 0.0
        %2003 = vmatpush1.msra.mxu0 0.0
        %2004 = vmatprep.subr.mxu0 0.0
        %2005 = vmatpush1.msra.mxu0 0.0
        %2006 = vmatprep.subr.mxu0 0.0
        %2007 = vmatpush1.msra.mxu0 0.0
        %2008 = vmatprep.subr.mxu0 0.0
        %2009 = vmatpush1.msra.mxu0 0.0
        %2010 = vmatprep.mubr.f32.mxu0 0.0
        %2011 = vmatmul.mubr.f32.gmra.mrb[0].mxu0 %v1923
        %v2012 = vpop.f32.mrb[0].mxu0
        %v2013 = vadd.f32 0.0, %v2012
        %v2014 = vpop.f32.mrb[0].mxu0
        %2015 = vmatprep.mubr.f32.mxu0 0.0
        %2016 = vmatmul.mubr.f32.gmra.mrb[0].mxu0 %v1926
        %v2017 = vpop.f32.mrb[0].mxu0
        %v2018 = vadd.f32 0.0, %v2017
        %v2019 = vpop.f32.mrb[0].mxu0
        %2020 = vmatprep.mubr.f32.mxu0 0.0
        %2021 = vmatmul.mubr.f32.gmra.mrb[0].mxu0 %v1929
        %v2022 = vpop.f32.mrb[0].mxu0
        %v2023 = vadd.f32 0.0, %v2022
        %v2024 = vpop.f32.mrb[0].mxu0
        %2025 = vmatprep.mubr.f32.mxu0 0.0
        %2026 = vmatmul.mubr.f32.gmra.mrb[0].mxu0 %v1932
        %v2027 = vpop.f32.mrb[0].mxu0
        %v2028 = vadd.f32 0.0, %v2027
        %v2029 = vpop.f32.mrb[0].mxu0
        %2030 = vmatprep.mubr.f32.mxu0 0.0
        %2031 = vmatmul.mubr.f32.gmra.mrb[0].mxu0 %v1935
        %v2032 = vpop.f32.mrb[0].mxu0
        %v2033 = vadd.f32 0.0, %v2032
        %v2034 = vpop.f32.mrb[0].mxu0
        %2035 = vmatprep.mubr.f32.mxu0 0.0
        %2036 = vmatmul.mubr.f32.gmra.mrb[0].mxu0 %v1938
        %v2037 = vpop.f32.mrb[0].mxu0
        %v2038 = vadd.f32 0.0, %v2037
        %v2039 = vpop.f32.mrb[0].mxu0
        %2040 = vmatprep.mubr.f32.mxu0 0.0
        %2041 = vmatmul.mubr.f32.gmra.mrb[0].mxu0 %v1941
        %v2042 = vpop.f32.mrb[0].mxu0
        %v2043 = vadd.f32 0.0, %v2042
        %v2044 = vpop.f32.mrb[0].mxu0
        %2045 = vmatprep.mubr.f32.mxu0 0.0
        %2046 = vmatmul.mubr.f32.gmra.mrb[0].mxu0 %v1944
        %v2047 = vpop.f32.mrb[0].mxu0
        %v2048 = vadd.f32 0.0, %v2047
        %v2049 = vpop.f32.mrb[0].mxu0
        %2050 = vdwg.mxu0
        %v2051 = vrcp.pop %v1892
        %v2052 = vrcp.pop %v1895
        %v2053 = vrcp.pop %v1898
        %v2054 = vrcp.pop %v1901
        %v2055 = vrcp.pop %v1904
        %v2056 = vrcp.pop %v1907
        %v2057 = vrcp.pop %v1910
        %v2058 = vrcp.pop %v1913
        %v2059 = vmul.f32 %v2013, %v2051
        %v2060 = vmul.f32 %v2018, %v2052
        %v2061 = vmul.f32 %v2023, %v2053
        %v2062 = vmul.f32 %v2028, %v2054
        %v2063 = vmul.f32 %v2033, %v2055
        %v2064 = vmul.f32 %v2038, %v2056
        %v2065 = vmul.f32 %v2043, %v2057
        %v2066 = vmul.f32 %v2048, %v2058
        %2075 = vrot.lane.b32.xlu0 %v2059, 24
        %v2076 = vpop.permute.xlu0 %2075
        %2077 = vrot.lane.b32.xlu0 %v2060, 24
        %v2078 = vpop.permute.xlu0 %2077
        %2079 = vrot.lane.b32.xlu0 %v2061, 24
        %v2080 = vpop.permute.xlu0 %2079
        %2081 = vrot.lane.b32.xlu0 %v2062, 24
        %v2082 = vpop.permute.xlu0 %2081
        %2083 = vrot.lane.b32.xlu0 %v2063, 24
        %v2084 = vpop.permute.xlu0 %2083
        %2085 = vrot.lane.b32.xlu0 %v2064, 24
        %v2086 = vpop.permute.xlu0 %2085
        %2087 = vrot.lane.b32.xlu0 %v2065, 24
        %v2088 = vpop.permute.xlu0 %2087
        %2089 = vrot.lane.b32.xlu0 %v2066, 24
        %v2090 = vpop.permute.xlu0 %2089
        %vm2099 = vcmask 261312
        %2100 = vst.msk [vmem:[#allocation3] sm:$0xff] %vm2099, %v2076
        %2101 = vst.msk [vmem:[#allocation3 + $0x8] sm:$0xff] %vm2099, %v2078
        %2102 = vst.msk [vmem:[#allocation3 + $0x10] sm:$0xff] %vm2099, %v2080
        %2103 = vst.msk [vmem:[#allocation3 + $0x18] sm:$0xff] %vm2099, %v2082
        %2104 = vst.msk [vmem:[#allocation3 + $0x20] sm:$0xff] %vm2099, %v2084
        %2105 = vst.msk [vmem:[#allocation3 + $0x28] sm:$0xff] %vm2099, %v2086
        %2106 = vst.msk [vmem:[#allocation3 + $0x30] sm:$0xff] %vm2099, %v2088
        %2107 = vst.msk [vmem:[#allocation3 + $0x38] sm:$0xff] %vm2099, %v2090
        %v2108 = vld [vmem:[#allocation2] sm:$0xff]
        %v2109 = vld [vmem:[#allocation2 + $0x8] sm:$0xff]
        %v2110 = vld [vmem:[#allocation2 + $0x10] sm:$0xff]
        %v2111 = vld [vmem:[#allocation2 + $0x18] sm:$0xff]
        %v2112 = vld [vmem:[#allocation2 + $0x20] sm:$0xff]
        %v2113 = vld [vmem:[#allocation2 + $0x28] sm:$0xff]
        %v2114 = vld [vmem:[#allocation2 + $0x30] sm:$0xff]
        %v2115 = vld [vmem:[#allocation2 + $0x38] sm:$0xff]
        %v2116 = vld [vmem:[%s314 + $0x20] sm:$0xff]
        %v2117 = vld [vmem:[%s319] sm:$0xff]
        %v2118 = vld [vmem:[%s319 + $0x8] sm:$0xff]
        %2127 = vrot.lane.b32.xlu0 %v2108, 96
        %v2128 = vpop.permute.xlu0 %2127
        %2129 = vrot.lane.b32.xlu0 %v2109, 96
        %v2130 = vpop.permute.xlu0 %2129
        %2131 = vrot.lane.b32.xlu0 %v2110, 96
        %v2132 = vpop.permute.xlu0 %2131
        %2133 = vrot.lane.b32.xlu0 %v2111, 96
        %v2134 = vpop.permute.xlu0 %2133
        %2135 = vrot.lane.b32.xlu0 %v2112, 96
        %v2136 = vpop.permute.xlu0 %2135
        %2137 = vrot.lane.b32.xlu0 %v2113, 96
        %v2138 = vpop.permute.xlu0 %2137
        %2139 = vrot.lane.b32.xlu0 %v2114, 96
        %v2140 = vpop.permute.xlu0 %2139
        %2141 = vrot.lane.b32.xlu0 %v2115, 96
        %v2142 = vpop.permute.xlu0 %2141
        %v2143 = vsel %vm486, %v2128, 0
        %v2145 = vsel %vm486, %v2130, 0
        %v2147 = vsel %vm486, %v2132, 0
        %v2149 = vsel %vm486, %v2134, 0
        %v2151 = vsel %vm486, %v2136, 0
        %v2153 = vsel %vm486, %v2138, 0
        %v2155 = vsel %vm486, %v2140, 0
        %v2157 = vsel %vm486, %v2142, 0
        %2159 = vmatprep.subr.mxu0 0.0
        %2160 = vmatpush1.msra.mxu0 %v2116
        %2161 = vmatprep.subr.mxu0 0.0
        %2162 = vmatpush1.msra.mxu0 0.0
        %2163 = vmatprep.subr.mxu0 0.0
        %2164 = vmatpush1.msra.mxu0 0.0
        %2165 = vmatprep.subr.mxu0 0.0
        %2166 = vmatpush1.msra.mxu0 0.0
        %2167 = vmatprep.subr.mxu0 0.0
        %2168 = vmatpush1.msra.mxu0 0.0
        %2169 = vmatprep.subr.mxu0 0.0
        %2170 = vmatpush1.msra.mxu0 0.0
        %2171 = vmatprep.subr.mxu0 0.0
        %2172 = vmatpush1.msra.mxu0 0.0
        %2173 = vmatprep.subr.mxu0 0.0
        %2174 = vmatpush1.msra.mxu0 0.0
        %2175 = vmatprep.subr.mxu0 0.0
        %2176 = vmatpush1.msra.mxu0 0.0
        %2177 = vmatprep.subr.mxu0 0.0
        %2178 = vmatpush1.msra.mxu0 0.0
        %2179 = vmatprep.subr.mxu0 0.0
        %2180 = vmatpush1.msra.mxu0 0.0
        %2181 = vmatprep.subr.mxu0 0.0
        %2182 = vmatpush1.msra.mxu0 0.0
        %2183 = vmatprep.subr.mxu0 0.0
        %2184 = vmatpush1.msra.mxu0 0.0
        %2185 = vmatprep.subr.mxu0 0.0
        %2186 = vmatpush1.msra.mxu0 0.0
        %2187 = vmatprep.subr.mxu0 0.0
        %2188 = vmatpush1.msra.mxu0 0.0
        %2189 = vmatprep.subr.mxu0 0.0
        %2190 = vmatpush1.msra.mxu0 0.0
        %2191 = vmatprep.subr.mxu0 0.0
        %2192 = vmatpush1.msra.mxu0 0.0
        %2193 = vmatprep.subr.mxu0 0.0
        %2194 = vmatpush1.msra.mxu0 0.0
        %2195 = vmatprep.subr.mxu0 0.0
        %2196 = vmatpush1.msra.mxu0 0.0
        %2197 = vmatprep.subr.mxu0 0.0
        %2198 = vmatpush1.msra.mxu0 0.0
        %2199 = vmatprep.subr.mxu0 0.0
        %2200 = vmatpush1.msra.mxu0 0.0
        %2201 = vmatprep.subr.mxu0 0.0
        %2202 = vmatpush1.msra.mxu0 0.0
        %2203 = vmatprep.subr.mxu0 0.0
        %2204 = vmatpush1.msra.mxu0 0.0
        %2205 = vmatprep.subr.mxu0 0.0
        %2206 = vmatpush1.msra.mxu0 0.0
        %2207 = vmatprep.subr.mxu0 0.0
        %2208 = vmatpush1.msra.mxu0 0.0
        %2209 = vmatprep.subr.mxu0 0.0
        %2210 = vmatpush1.msra.mxu0 0.0
        %2211 = vmatprep.subr.mxu0 0.0
        %2212 = vmatpush1.msra.mxu0 0.0
        %2213 = vmatprep.subr.mxu0 0.0
        %2214 = vmatpush1.msra.mxu0 0.0
        %2215 = vmatprep.subr.mxu0 0.0
        %2216 = vmatpush1.msra.mxu0 0.0
        %2217 = vmatprep.subr.mxu0 0.0
        %2218 = vmatpush1.msra.mxu0 0.0
        %2219 = vmatprep.subr.mxu0 0.0
        %2220 = vmatpush1.msra.mxu0 0.0
        %2221 = vmatprep.subr.mxu0 0.0
        %2222 = vmatpush1.msra.mxu0 0.0
        %2223 = vmatprep.mubr.f32.mxu0 0.0
        %2224 = vmatmul.mubr.f32.gmra.mrb[0].mxu0 %v2143
        %v2225 = vpop.f32.mrb[0].mxu0
        %v2226 = vadd.f32 0.0, %v2225
        %v2227 = vpop.f32.mrb[0].mxu0
        %2228 = vmatprep.mubr.f32.mxu0 0.0
        %2229 = vmatmul.mubr.f32.gmra.mrb[0].mxu0 %v2145
        %v2230 = vpop.f32.mrb[0].mxu0
        %v2231 = vadd.f32 0.0, %v2230
        %v2232 = vpop.f32.mrb[0].mxu0
        %2233 = vmatprep.mubr.f32.mxu0 0.0
        %2234 = vmatmul.mubr.f32.gmra.mrb[0].mxu0 %v2147
        %v2235 = vpop.f32.mrb[0].mxu0
        %v2236 = vadd.f32 0.0, %v2235
        %v2237 = vpop.f32.mrb[0].mxu0
        %2238 = vmatprep.mubr.f32.mxu0 0.0
        %2239 = vmatmul.mubr.f32.gmra.mrb[0].mxu0 %v2149
        %v2240 = vpop.f32.mrb[0].mxu0
        %v2241 = vadd.f32 0.0, %v2240
        %v2242 = vpop.f32.mrb[0].mxu0
        %2243 = vmatprep.mubr.f32.mxu0 0.0
        %2244 = vmatmul.mubr.f32.gmra.mrb[0].mxu0 %v2151
        %v2245 = vpop.f32.mrb[0].mxu0
        %v2246 = vadd.f32 0.0, %v2245
        %v2247 = vpop.f32.mrb[0].mxu0
        %2248 = vmatprep.mubr.f32.mxu0 0.0
        %2249 = vmatmul.mubr.f32.gmra.mrb[0].mxu0 %v2153
        %v2250 = vpop.f32.mrb[0].mxu0
        %v2251 = vadd.f32 0.0, %v2250
        %v2252 = vpop.f32.mrb[0].mxu0
        %2253 = vmatprep.mubr.f32.mxu0 0.0
        %2254 = vmatmul.mubr.f32.gmra.mrb[0].mxu0 %v2155
        %v2255 = vpop.f32.mrb[0].mxu0
        %v2256 = vadd.f32 0.0, %v2255
        %v2257 = vpop.f32.mrb[0].mxu0
        %2258 = vmatprep.mubr.f32.mxu0 0.0
        %2259 = vmatmul.mubr.f32.gmra.mrb[0].mxu0 %v2157
        %v2260 = vpop.f32.mrb[0].mxu0
        %v2261 = vadd.f32 0.0, %v2260
        %v2262 = vpop.f32.mrb[0].mxu0
        %2263 = vdwg.mxu0
        %v2264 = vsel %vm616, %v2226, -inf
        %2265 = vmax.xlane.f32.xlu0 %v2264
        %v2266 = vpop.xlane.xlu0 %2265
        %v2267 = vsel %vm616, %v2231, -inf
        %2268 = vmax.xlane.f32.xlu0 %v2267
        %v2269 = vpop.xlane.xlu0 %2268
        %v2270 = vsel %vm616, %v2236, -inf
        %2271 = vmax.xlane.f32.xlu0 %v2270
        %v2272 = vpop.xlane.xlu0 %2271
        %v2273 = vsel %vm616, %v2241, -inf
        %2274 = vmax.xlane.f32.xlu0 %v2273
        %v2275 = vpop.xlane.xlu0 %2274
        %v2276 = vsel %vm616, %v2246, -inf
        %2277 = vmax.xlane.f32.xlu0 %v2276
        %v2278 = vpop.xlane.xlu0 %2277
        %v2279 = vsel %vm616, %v2251, -inf
        %2280 = vmax.xlane.f32.xlu0 %v2279
        %v2281 = vpop.xlane.xlu0 %2280
        %v2282 = vsel %vm616, %v2256, -inf
        %2283 = vmax.xlane.f32.xlu0 %v2282
        %v2284 = vpop.xlane.xlu0 %2283
        %v2285 = vsel %vm616, %v2261, -inf
        %2286 = vmax.xlane.f32.xlu0 %v2285
        %v2287 = vpop.xlane.xlu0 %2286
        %v2288 = vsub.f32 %v2226, %v2266
        %v2289 = vsub.f32 %v2231, %v2269
        %v2290 = vsub.f32 %v2236, %v2272
        %v2291 = vsub.f32 %v2241, %v2275
        %v2292 = vsub.f32 %v2246, %v2278
        %v2293 = vsub.f32 %v2251, %v2281
        %v2294 = vsub.f32 %v2256, %v2284
        %v2295 = vsub.f32 %v2261, %v2287
        %v2296 = vmul.f32 %v2288, 1.442695
        %v2297 = vpow.pop %v2296
        %v2298 = vmul.f32 %v2289, 1.442695
        %v2299 = vpow.pop %v2298
        %v2300 = vmul.f32 %v2290, 1.442695
        %v2301 = vpow.pop %v2300
        %v2302 = vmul.f32 %v2291, 1.442695
        %v2303 = vpow.pop %v2302
        %v2304 = vmul.f32 %v2292, 1.442695
        %v2305 = vpow.pop %v2304
        %v2306 = vmul.f32 %v2293, 1.442695
        %v2307 = vpow.pop %v2306
        %v2308 = vmul.f32 %v2294, 1.442695
        %v2309 = vpow.pop %v2308
        %v2310 = vmul.f32 %v2295, 1.442695
        %v2311 = vpow.pop %v2310
        %v2312 = vsel %vm616, %v2297, 0.0
        %2313 = vadd.xlane.f32.xlu0 %v2312
        %v2314 = vpop.xlane.xlu0 %2313
        %v2315 = vsel %vm616, %v2299, 0.0
        %2316 = vadd.xlane.f32.xlu0 %v2315
        %v2317 = vpop.xlane.xlu0 %2316
        %v2318 = vsel %vm616, %v2301, 0.0
        %2319 = vadd.xlane.f32.xlu0 %v2318
        %v2320 = vpop.xlane.xlu0 %2319
        %v2321 = vsel %vm616, %v2303, 0.0
        %2322 = vadd.xlane.f32.xlu0 %v2321
        %v2323 = vpop.xlane.xlu0 %2322
        %v2324 = vsel %vm616, %v2305, 0.0
        %2325 = vadd.xlane.f32.xlu0 %v2324
        %v2326 = vpop.xlane.xlu0 %2325
        %v2327 = vsel %vm616, %v2307, 0.0
        %2328 = vadd.xlane.f32.xlu0 %v2327
        %v2329 = vpop.xlane.xlu0 %2328
        %v2330 = vsel %vm616, %v2309, 0.0
        %2331 = vadd.xlane.f32.xlu0 %v2330
        %v2332 = vpop.xlane.xlu0 %2331
        %v2333 = vsel %vm616, %v2311, 0.0
        %2334 = vadd.xlane.f32.xlu0 %v2333
        %v2335 = vpop.xlane.xlu0 %2334
        %2338 = vrot.lane.b32.xlu0 %v2117, 96
        %v2339 = vpop.permute.xlu0 %2338
        %2340 = vrot.lane.b32.xlu0 %v2118, 96
        %v2341 = vpop.permute.xlu0 %2340
        %v2345 = vsel %vm616, %v2297, 0
        %v2348 = vsel %vm616, %v2299, 0
        %v2351 = vsel %vm616, %v2301, 0
        %v2354 = vsel %vm616, %v2303, 0
        %v2357 = vsel %vm616, %v2305, 0
        %v2360 = vsel %vm616, %v2307, 0
        %v2363 = vsel %vm616, %v2309, 0
        %v2366 = vsel %vm616, %v2311, 0
        %2368 = vmatprep.subr.mxu0 0.0
        %2369 = vmatpush1.msra.mxu0 %v2339
        %2370 = vmatprep.subr.mxu0 0.0
        %2371 = vmatpush1.msra.mxu0 %v2341
        %2372 = vmatprep.subr.mxu0 0.0
        %2373 = vmatpush1.msra.mxu0 0.0
        %2374 = vmatprep.subr.mxu0 0.0
        %2375 = vmatpush1.msra.mxu0 0.0
        %2376 = vmatprep.subr.mxu0 0.0
        %2377 = vmatpush1.msra.mxu0 0.0
        %2378 = vmatprep.subr.mxu0 0.0
        %2379 = vmatpush1.msra.mxu0 0.0
        %2380 = vmatprep.subr.mxu0 0.0
        %2381 = vmatpush1.msra.mxu0 0.0
        %2382 = vmatprep.subr.mxu0 0.0
        %2383 = vmatpush1.msra.mxu0 0.0
        %2384 = vmatprep.subr.mxu0 0.0
        %2385 = vmatpush1.msra.mxu0 0.0
        %2386 = vmatprep.subr.mxu0 0.0
        %2387 = vmatpush1.msra.mxu0 0.0
        %2388 = vmatprep.subr.mxu0 0.0
        %2389 = vmatpush1.msra.mxu0 0.0
        %2390 = vmatprep.subr.mxu0 0.0
        %2391 = vmatpush1.msra.mxu0 0.0
        %2392 = vmatprep.subr.mxu0 0.0
        %2393 = vmatpush1.msra.mxu0 0.0
        %2394 = vmatprep.subr.mxu0 0.0
        %2395 = vmatpush1.msra.mxu0 0.0
        %2396 = vmatprep.subr.mxu0 0.0
        %2397 = vmatpush1.msra.mxu0 0.0
        %2398 = vmatprep.subr.mxu0 0.0
        %2399 = vmatpush1.msra.mxu0 0.0
        %2400 = vmatprep.subr.mxu0 0.0
        %2401 = vmatpush1.msra.mxu0 0.0
        %2402 = vmatprep.subr.mxu0 0.0
        %2403 = vmatpush1.msra.mxu0 0.0
        %2404 = vmatprep.subr.mxu0 0.0
        %2405 = vmatpush1.msra.mxu0 0.0
        %2406 = vmatprep.subr.mxu0 0.0
        %2407 = vmatpush1.msra.mxu0 0.0
        %2408 = vmatprep.subr.mxu0 0.0
        %2409 = vmatpush1.msra.mxu0 0.0
        %2410 = vmatprep.subr.mxu0 0.0
        %2411 = vmatpush1.msra.mxu0 0.0
        %2412 = vmatprep.subr.mxu0 0.0
        %2413 = vmatpush1.msra.mxu0 0.0
        %2414 = vmatprep.subr.mxu0 0.0
        %2415 = vmatpush1.msra.mxu0 0.0
        %2416 = vmatprep.subr.mxu0 0.0
        %2417 = vmatpush1.msra.mxu0 0.0
        %2418 = vmatprep.subr.mxu0 0.0
        %2419 = vmatpush1.msra.mxu0 0.0
        %2420 = vmatprep.subr.mxu0 0.0
        %2421 = vmatpush1.msra.mxu0 0.0
        %2422 = vmatprep.subr.mxu0 0.0
        %2423 = vmatpush1.msra.mxu0 0.0
        %2424 = vmatprep.subr.mxu0 0.0
        %2425 = vmatpush1.msra.mxu0 0.0
        %2426 = vmatprep.subr.mxu0 0.0
        %2427 = vmatpush1.msra.mxu0 0.0
        %2428 = vmatprep.subr.mxu0 0.0
        %2429 = vmatpush1.msra.mxu0 0.0
        %2430 = vmatprep.subr.mxu0 0.0
        %2431 = vmatpush1.msra.mxu0 0.0
        %2432 = vmatprep.mubr.f32.mxu0 0.0
        %2433 = vmatmul.mubr.f32.gmra.mrb[0].mxu0 %v2345
        %v2434 = vpop.f32.mrb[0].mxu0
        %v2435 = vadd.f32 0.0, %v2434
        %v2436 = vpop.f32.mrb[0].mxu0
        %2437 = vmatprep.mubr.f32.mxu0 0.0
        %2438 = vmatmul.mubr.f32.gmra.mrb[0].mxu0 %v2348
        %v2439 = vpop.f32.mrb[0].mxu0
        %v2440 = vadd.f32 0.0, %v2439
        %v2441 = vpop.f32.mrb[0].mxu0
        %2442 = vmatprep.mubr.f32.mxu0 0.0
        %2443 = vmatmul.mubr.f32.gmra.mrb[0].mxu0 %v2351
        %v2444 = vpop.f32.mrb[0].mxu0
        %v2445 = vadd.f32 0.0, %v2444
        %v2446 = vpop.f32.mrb[0].mxu0
        %2447 = vmatprep.mubr.f32.mxu0 0.0
        %2448 = vmatmul.mubr.f32.gmra.mrb[0].mxu0 %v2354
        %v2449 = vpop.f32.mrb[0].mxu0
        %v2450 = vadd.f32 0.0, %v2449
        %v2451 = vpop.f32.mrb[0].mxu0
        %2452 = vmatprep.mubr.f32.mxu0 0.0
        %2453 = vmatmul.mubr.f32.gmra.mrb[0].mxu0 %v2357
        %v2454 = vpop.f32.mrb[0].mxu0
        %v2455 = vadd.f32 0.0, %v2454
        %v2456 = vpop.f32.mrb[0].mxu0
        %2457 = vmatprep.mubr.f32.mxu0 0.0
        %2458 = vmatmul.mubr.f32.gmra.mrb[0].mxu0 %v2360
        %v2459 = vpop.f32.mrb[0].mxu0
        %v2460 = vadd.f32 0.0, %v2459
        %v2461 = vpop.f32.mrb[0].mxu0
        %2462 = vmatprep.mubr.f32.mxu0 0.0
        %2463 = vmatmul.mubr.f32.gmra.mrb[0].mxu0 %v2363
        %v2464 = vpop.f32.mrb[0].mxu0
        %v2465 = vadd.f32 0.0, %v2464
        %v2466 = vpop.f32.mrb[0].mxu0
        %2467 = vmatprep.mubr.f32.mxu0 0.0
        %2468 = vmatmul.mubr.f32.gmra.mrb[0].mxu0 %v2366
        %v2469 = vpop.f32.mrb[0].mxu0
        %v2470 = vadd.f32 0.0, %v2469
        %v2471 = vpop.f32.mrb[0].mxu0
        %2472 = vdwg.mxu0
        %v2473 = vrcp.pop %v2314
        %v2474 = vrcp.pop %v2317
        %v2475 = vrcp.pop %v2320
        %v2476 = vrcp.pop %v2323
        %v2477 = vrcp.pop %v2326
        %v2478 = vrcp.pop %v2329
        %v2479 = vrcp.pop %v2332
        %v2480 = vrcp.pop %v2335
        %v2481 = vmul.f32 %v2435, %v2473
        %v2482 = vmul.f32 %v2440, %v2474
        %v2483 = vmul.f32 %v2445, %v2475
        %v2484 = vmul.f32 %v2450, %v2476
        %v2485 = vmul.f32 %v2455, %v2477
        %v2486 = vmul.f32 %v2460, %v2478
        %v2487 = vmul.f32 %v2465, %v2479
        %v2488 = vmul.f32 %v2470, %v2480
        %2497 = vrot.lane.b32.xlu0 %v2481, 32
        %v2498 = vpop.permute.xlu0 %2497
        %2499 = vrot.lane.b32.xlu0 %v2482, 32
        %v2500 = vpop.permute.xlu0 %2499
        %2501 = vrot.lane.b32.xlu0 %v2483, 32
        %v2502 = vpop.permute.xlu0 %2501
        %2503 = vrot.lane.b32.xlu0 %v2484, 32
        %v2504 = vpop.permute.xlu0 %2503
        %2505 = vrot.lane.b32.xlu0 %v2485, 32
        %v2506 = vpop.permute.xlu0 %2505
        %2507 = vrot.lane.b32.xlu0 %v2486, 32
        %v2508 = vpop.permute.xlu0 %2507
        %2509 = vrot.lane.b32.xlu0 %v2487, 32
        %v2510 = vpop.permute.xlu0 %2509
        %2511 = vrot.lane.b32.xlu0 %v2488, 32
        %v2512 = vpop.permute.xlu0 %2511
        %vm2521 = vcmask 326912
        %2522 = vst.msk [vmem:[#allocation3] sm:$0xff] %vm2521, %v2498
        %2523 = vst.msk [vmem:[#allocation3 + $0x8] sm:$0xff] %vm2521, %v2500
        %2524 = vst.msk [vmem:[#allocation3 + $0x10] sm:$0xff] %vm2521, %v2502
        %2525 = vst.msk [vmem:[#allocation3 + $0x18] sm:$0xff] %vm2521, %v2504
        %2526 = vst.msk [vmem:[#allocation3 + $0x20] sm:$0xff] %vm2521, %v2506
        %2527 = vst.msk [vmem:[#allocation3 + $0x28] sm:$0xff] %vm2521, %v2508
        %2528 = vst.msk [vmem:[#allocation3 + $0x30] sm:$0xff] %vm2521, %v2510
        %2529 = vst.msk [vmem:[#allocation3 + $0x38] sm:$0xff] %vm2521, %v2512
        %v2530 = vld [vmem:[#allocation2] sm:$0xff]
        %v2531 = vld [vmem:[#allocation2 + $0x8] sm:$0xff]
        %v2532 = vld [vmem:[#allocation2 + $0x10] sm:$0xff]
        %v2533 = vld [vmem:[#allocation2 + $0x18] sm:$0xff]
        %v2534 = vld [vmem:[#allocation2 + $0x20] sm:$0xff]
        %v2535 = vld [vmem:[#allocation2 + $0x28] sm:$0xff]
        %v2536 = vld [vmem:[#allocation2 + $0x30] sm:$0xff]
        %v2537 = vld [vmem:[#allocation2 + $0x38] sm:$0xff]
        %v2538 = vld [vmem:[%s314 + $0x28] sm:$0xff]
        %v2539 = vld [vmem:[%s319] sm:$0xff]
        %v2540 = vld [vmem:[%s319 + $0x8] sm:$0xff]
        %2549 = vrot.lane.b32.xlu0 %v2530, 88
        %v2550 = vpop.permute.xlu0 %2549
        %2551 = vrot.lane.b32.xlu0 %v2531, 88
        %v2552 = vpop.permute.xlu0 %2551
        %2553 = vrot.lane.b32.xlu0 %v2532, 88
        %v2554 = vpop.permute.xlu0 %2553
        %2555 = vrot.lane.b32.xlu0 %v2533, 88
        %v2556 = vpop.permute.xlu0 %2555
        %2557 = vrot.lane.b32.xlu0 %v2534, 88
        %v2558 = vpop.permute.xlu0 %2557
        %2559 = vrot.lane.b32.xlu0 %v2535, 88
        %v2560 = vpop.permute.xlu0 %2559
        %2561 = vrot.lane.b32.xlu0 %v2536, 88
        %v2562 = vpop.permute.xlu0 %2561
        %2563 = vrot.lane.b32.xlu0 %v2537, 88
        %v2564 = vpop.permute.xlu0 %2563
        %v2565 = vsel %vm486, %v2550, 0
        %v2567 = vsel %vm486, %v2552, 0
        %v2569 = vsel %vm486, %v2554, 0
        %v2571 = vsel %vm486, %v2556, 0
        %v2573 = vsel %vm486, %v2558, 0
        %v2575 = vsel %vm486, %v2560, 0
        %v2577 = vsel %vm486, %v2562, 0
        %v2579 = vsel %vm486, %v2564, 0
        %2581 = vmatprep.subr.mxu0 0.0
        %2582 = vmatpush1.msra.mxu0 %v2538
        %2583 = vmatprep.subr.mxu0 0.0
        %2584 = vmatpush1.msra.mxu0 0.0
        %2585 = vmatprep.subr.mxu0 0.0
        %2586 = vmatpush1.msra.mxu0 0.0
        %2587 = vmatprep.subr.mxu0 0.0
        %2588 = vmatpush1.msra.mxu0 0.0
        %2589 = vmatprep.subr.mxu0 0.0
        %2590 = vmatpush1.msra.mxu0 0.0
        %2591 = vmatprep.subr.mxu0 0.0
        %2592 = vmatpush1.msra.mxu0 0.0
        %2593 = vmatprep.subr.mxu0 0.0
        %2594 = vmatpush1.msra.mxu0 0.0
        %2595 = vmatprep.subr.mxu0 0.0
        %2596 = vmatpush1.msra.mxu0 0.0
        %2597 = vmatprep.subr.mxu0 0.0
        %2598 = vmatpush1.msra.mxu0 0.0
        %2599 = vmatprep.subr.mxu0 0.0
        %2600 = vmatpush1.msra.mxu0 0.0
        %2601 = vmatprep.subr.mxu0 0.0
        %2602 = vmatpush1.msra.mxu0 0.0
        %2603 = vmatprep.subr.mxu0 0.0
        %2604 = vmatpush1.msra.mxu0 0.0
        %2605 = vmatprep.subr.mxu0 0.0
        %2606 = vmatpush1.msra.mxu0 0.0
        %2607 = vmatprep.subr.mxu0 0.0
        %2608 = vmatpush1.msra.mxu0 0.0
        %2609 = vmatprep.subr.mxu0 0.0
        %2610 = vmatpush1.msra.mxu0 0.0
        %2611 = vmatprep.subr.mxu0 0.0
        %2612 = vmatpush1.msra.mxu0 0.0
        %2613 = vmatprep.subr.mxu0 0.0
        %2614 = vmatpush1.msra.mxu0 0.0
        %2615 = vmatprep.subr.mxu0 0.0
        %2616 = vmatpush1.msra.mxu0 0.0
        %2617 = vmatprep.subr.mxu0 0.0
        %2618 = vmatpush1.msra.mxu0 0.0
        %2619 = vmatprep.subr.mxu0 0.0
        %2620 = vmatpush1.msra.mxu0 0.0
        %2621 = vmatprep.subr.mxu0 0.0
        %2622 = vmatpush1.msra.mxu0 0.0
        %2623 = vmatprep.subr.mxu0 0.0
        %2624 = vmatpush1.msra.mxu0 0.0
        %2625 = vmatprep.subr.mxu0 0.0
        %2626 = vmatpush1.msra.mxu0 0.0
        %2627 = vmatprep.subr.mxu0 0.0
        %2628 = vmatpush1.msra.mxu0 0.0
        %2629 = vmatprep.subr.mxu0 0.0
        %2630 = vmatpush1.msra.mxu0 0.0
        %2631 = vmatprep.subr.mxu0 0.0
        %2632 = vmatpush1.msra.mxu0 0.0
        %2633 = vmatprep.subr.mxu0 0.0
        %2634 = vmatpush1.msra.mxu0 0.0
        %2635 = vmatprep.subr.mxu0 0.0
        %2636 = vmatpush1.msra.mxu0 0.0
        %2637 = vmatprep.subr.mxu0 0.0
        %2638 = vmatpush1.msra.mxu0 0.0
        %2639 = vmatprep.subr.mxu0 0.0
        %2640 = vmatpush1.msra.mxu0 0.0
        %2641 = vmatprep.subr.mxu0 0.0
        %2642 = vmatpush1.msra.mxu0 0.0
        %2643 = vmatprep.subr.mxu0 0.0
        %2644 = vmatpush1.msra.mxu0 0.0
        %2645 = vmatprep.mubr.f32.mxu0 0.0
        %2646 = vmatmul.mubr.f32.gmra.mrb[0].mxu0 %v2565
        %v2647 = vpop.f32.mrb[0].mxu0
        %v2648 = vadd.f32 0.0, %v2647
        %v2649 = vpop.f32.mrb[0].mxu0
        %2650 = vmatprep.mubr.f32.mxu0 0.0
        %2651 = vmatmul.mubr.f32.gmra.mrb[0].mxu0 %v2567
        %v2652 = vpop.f32.mrb[0].mxu0
        %v2653 = vadd.f32 0.0, %v2652
        %v2654 = vpop.f32.mrb[0].mxu0
        %2655 = vmatprep.mubr.f32.mxu0 0.0
        %2656 = vmatmul.mubr.f32.gmra.mrb[0].mxu0 %v2569
        %v2657 = vpop.f32.mrb[0].mxu0
        %v2658 = vadd.f32 0.0, %v2657
        %v2659 = vpop.f32.mrb[0].mxu0
        %2660 = vmatprep.mubr.f32.mxu0 0.0
        %2661 = vmatmul.mubr.f32.gmra.mrb[0].mxu0 %v2571
        %v2662 = vpop.f32.mrb[0].mxu0
        %v2663 = vadd.f32 0.0, %v2662
        %v2664 = vpop.f32.mrb[0].mxu0
        %2665 = vmatprep.mubr.f32.mxu0 0.0
        %2666 = vmatmul.mubr.f32.gmra.mrb[0].mxu0 %v2573
        %v2667 = vpop.f32.mrb[0].mxu0
        %v2668 = vadd.f32 0.0, %v2667
        %v2669 = vpop.f32.mrb[0].mxu0
        %2670 = vmatprep.mubr.f32.mxu0 0.0
        %2671 = vmatmul.mubr.f32.gmra.mrb[0].mxu0 %v2575
        %v2672 = vpop.f32.mrb[0].mxu0
        %v2673 = vadd.f32 0.0, %v2672
        %v2674 = vpop.f32.mrb[0].mxu0
        %2675 = vmatprep.mubr.f32.mxu0 0.0
        %2676 = vmatmul.mubr.f32.gmra.mrb[0].mxu0 %v2577
        %v2677 = vpop.f32.mrb[0].mxu0
        %v2678 = vadd.f32 0.0, %v2677
        %v2679 = vpop.f32.mrb[0].mxu0
        %2680 = vmatprep.mubr.f32.mxu0 0.0
        %2681 = vmatmul.mubr.f32.gmra.mrb[0].mxu0 %v2579
        %v2682 = vpop.f32.mrb[0].mxu0
        %v2683 = vadd.f32 0.0, %v2682
        %v2684 = vpop.f32.mrb[0].mxu0
        %2685 = vdwg.mxu0
        %v2686 = vsel %vm616, %v2648, -inf
        %2687 = vmax.xlane.f32.xlu0 %v2686
        %v2688 = vpop.xlane.xlu0 %2687
        %v2689 = vsel %vm616, %v2653, -inf
        %2690 = vmax.xlane.f32.xlu0 %v2689
        %v2691 = vpop.xlane.xlu0 %2690
        %v2692 = vsel %vm616, %v2658, -inf
        %2693 = vmax.xlane.f32.xlu0 %v2692
        %v2694 = vpop.xlane.xlu0 %2693
        %v2695 = vsel %vm616, %v2663, -inf
        %2696 = vmax.xlane.f32.xlu0 %v2695
        %v2697 = vpop.xlane.xlu0 %2696
        %v2698 = vsel %vm616, %v2668, -inf
        %2699 = vmax.xlane.f32.xlu0 %v2698
        %v2700 = vpop.xlane.xlu0 %2699
        %v2701 = vsel %vm616, %v2673, -inf
        %2702 = vmax.xlane.f32.xlu0 %v2701
        %v2703 = vpop.xlane.xlu0 %2702
        %v2704 = vsel %vm616, %v2678, -inf
        %2705 = vmax.xlane.f32.xlu0 %v2704
        %v2706 = vpop.xlane.xlu0 %2705
        %v2707 = vsel %vm616, %v2683, -inf
        %2708 = vmax.xlane.f32.xlu0 %v2707
        %v2709 = vpop.xlane.xlu0 %2708
        %v2710 = vsub.f32 %v2648, %v2688
        %v2711 = vsub.f32 %v2653, %v2691
        %v2712 = vsub.f32 %v2658, %v2694
        %v2713 = vsub.f32 %v2663, %v2697
        %v2714 = vsub.f32 %v2668, %v2700
        %v2715 = vsub.f32 %v2673, %v2703
        %v2716 = vsub.f32 %v2678, %v2706
        %v2717 = vsub.f32 %v2683, %v2709
        %v2718 = vmul.f32 %v2710, 1.442695
        %v2719 = vpow.pop %v2718
        %v2720 = vmul.f32 %v2711, 1.442695
        %v2721 = vpow.pop %v2720
        %v2722 = vmul.f32 %v2712, 1.442695
        %v2723 = vpow.pop %v2722
        %v2724 = vmul.f32 %v2713, 1.442695
        %v2725 = vpow.pop %v2724
        %v2726 = vmul.f32 %v2714, 1.442695
        %v2727 = vpow.pop %v2726
        %v2728 = vmul.f32 %v2715, 1.442695
        %v2729 = vpow.pop %v2728
        %v2730 = vmul.f32 %v2716, 1.442695
        %v2731 = vpow.pop %v2730
        %v2732 = vmul.f32 %v2717, 1.442695
        %v2733 = vpow.pop %v2732
        %v2734 = vsel %vm616, %v2719, 0.0
        %2735 = vadd.xlane.f32.xlu0 %v2734
        %v2736 = vpop.xlane.xlu0 %2735
        %v2737 = vsel %vm616, %v2721, 0.0
        %2738 = vadd.xlane.f32.xlu0 %v2737
        %v2739 = vpop.xlane.xlu0 %2738
        %v2740 = vsel %vm616, %v2723, 0.0
        %2741 = vadd.xlane.f32.xlu0 %v2740
        %v2742 = vpop.xlane.xlu0 %2741
        %v2743 = vsel %vm616, %v2725, 0.0
        %2744 = vadd.xlane.f32.xlu0 %v2743
        %v2745 = vpop.xlane.xlu0 %2744
        %v2746 = vsel %vm616, %v2727, 0.0
        %2747 = vadd.xlane.f32.xlu0 %v2746
        %v2748 = vpop.xlane.xlu0 %2747
        %v2749 = vsel %vm616, %v2729, 0.0
        %2750 = vadd.xlane.f32.xlu0 %v2749
        %v2751 = vpop.xlane.xlu0 %2750
        %v2752 = vsel %vm616, %v2731, 0.0
        %2753 = vadd.xlane.f32.xlu0 %v2752
        %v2754 = vpop.xlane.xlu0 %2753
        %v2755 = vsel %vm616, %v2733, 0.0
        %2756 = vadd.xlane.f32.xlu0 %v2755
        %v2757 = vpop.xlane.xlu0 %2756
        %2760 = vrot.lane.b32.xlu0 %v2539, 88
        %v2761 = vpop.permute.xlu0 %2760
        %2762 = vrot.lane.b32.xlu0 %v2540, 88
        %v2763 = vpop.permute.xlu0 %2762
        %v2767 = vsel %vm616, %v2719, 0
        %v2770 = vsel %vm616, %v2721, 0
        %v2773 = vsel %vm616, %v2723, 0
        %v2776 = vsel %vm616, %v2725, 0
        %v2779 = vsel %vm616, %v2727, 0
        %v2782 = vsel %vm616, %v2729, 0
        %v2785 = vsel %vm616, %v2731, 0
        %v2788 = vsel %vm616, %v2733, 0
        %2790 = vmatprep.subr.mxu0 0.0
        %2791 = vmatpush1.msra.mxu0 %v2761
        %2792 = vmatprep.subr.mxu0 0.0
        %2793 = vmatpush1.msra.mxu0 %v2763
        %2794 = vmatprep.subr.mxu0 0.0
        %2795 = vmatpush1.msra.mxu0 0.0
        %2796 = vmatprep.subr.mxu0 0.0
        %2797 = vmatpush1.msra.mxu0 0.0
        %2798 = vmatprep.subr.mxu0 0.0
        %2799 = vmatpush1.msra.mxu0 0.0
        %2800 = vmatprep.subr.mxu0 0.0
        %2801 = vmatpush1.msra.mxu0 0.0
        %2802 = vmatprep.subr.mxu0 0.0
        %2803 = vmatpush1.msra.mxu0 0.0
        %2804 = vmatprep.subr.mxu0 0.0
        %2805 = vmatpush1.msra.mxu0 0.0
        %2806 = vmatprep.subr.mxu0 0.0
        %2807 = vmatpush1.msra.mxu0 0.0
        %2808 = vmatprep.subr.mxu0 0.0
        %2809 = vmatpush1.msra.mxu0 0.0
        %2810 = vmatprep.subr.mxu0 0.0
        %2811 = vmatpush1.msra.mxu0 0.0
        %2812 = vmatprep.subr.mxu0 0.0
        %2813 = vmatpush1.msra.mxu0 0.0
        %2814 = vmatprep.subr.mxu0 0.0
        %2815 = vmatpush1.msra.mxu0 0.0
        %2816 = vmatprep.subr.mxu0 0.0
        %2817 = vmatpush1.msra.mxu0 0.0
        %2818 = vmatprep.subr.mxu0 0.0
        %2819 = vmatpush1.msra.mxu0 0.0
        %2820 = vmatprep.subr.mxu0 0.0
        %2821 = vmatpush1.msra.mxu0 0.0
        %2822 = vmatprep.subr.mxu0 0.0
        %2823 = vmatpush1.msra.mxu0 0.0
        %2824 = vmatprep.subr.mxu0 0.0
        %2825 = vmatpush1.msra.mxu0 0.0
        %2826 = vmatprep.subr.mxu0 0.0
        %2827 = vmatpush1.msra.mxu0 0.0
        %2828 = vmatprep.subr.mxu0 0.0
        %2829 = vmatpush1.msra.mxu0 0.0
        %2830 = vmatprep.subr.mxu0 0.0
        %2831 = vmatpush1.msra.mxu0 0.0
        %2832 = vmatprep.subr.mxu0 0.0
        %2833 = vmatpush1.msra.mxu0 0.0
        %2834 = vmatprep.subr.mxu0 0.0
        %2835 = vmatpush1.msra.mxu0 0.0
        %2836 = vmatprep.subr.mxu0 0.0
        %2837 = vmatpush1.msra.mxu0 0.0
        %2838 = vmatprep.subr.mxu0 0.0
        %2839 = vmatpush1.msra.mxu0 0.0
        %2840 = vmatprep.subr.mxu0 0.0
        %2841 = vmatpush1.msra.mxu0 0.0
        %2842 = vmatprep.subr.mxu0 0.0
        %2843 = vmatpush1.msra.mxu0 0.0
        %2844 = vmatprep.subr.mxu0 0.0
        %2845 = vmatpush1.msra.mxu0 0.0
        %2846 = vmatprep.subr.mxu0 0.0
        %2847 = vmatpush1.msra.mxu0 0.0
        %2848 = vmatprep.subr.mxu0 0.0
        %2849 = vmatpush1.msra.mxu0 0.0
        %2850 = vmatprep.subr.mxu0 0.0
        %2851 = vmatpush1.msra.mxu0 0.0
        %2852 = vmatprep.subr.mxu0 0.0
        %2853 = vmatpush1.msra.mxu0 0.0
        %2854 = vmatprep.mubr.f32.mxu0 0.0
        %2855 = vmatmul.mubr.f32.gmra.mrb[0].mxu0 %v2767
        %v2856 = vpop.f32.mrb[0].mxu0
        %v2857 = vadd.f32 0.0, %v2856
        %v2858 = vpop.f32.mrb[0].mxu0
        %2859 = vmatprep.mubr.f32.mxu0 0.0
        %2860 = vmatmul.mubr.f32.gmra.mrb[0].mxu0 %v2770
        %v2861 = vpop.f32.mrb[0].mxu0
        %v2862 = vadd.f32 0.0, %v2861
        %v2863 = vpop.f32.mrb[0].mxu0
        %2864 = vmatprep.mubr.f32.mxu0 0.0
        %2865 = vmatmul.mubr.f32.gmra.mrb[0].mxu0 %v2773
        %v2866 = vpop.f32.mrb[0].mxu0
        %v2867 = vadd.f32 0.0, %v2866
        %v2868 = vpop.f32.mrb[0].mxu0
        %2869 = vmatprep.mubr.f32.mxu0 0.0
        %2870 = vmatmul.mubr.f32.gmra.mrb[0].mxu0 %v2776
        %v2871 = vpop.f32.mrb[0].mxu0
        %v2872 = vadd.f32 0.0, %v2871
        %v2873 = vpop.f32.mrb[0].mxu0
        %2874 = vmatprep.mubr.f32.mxu0 0.0
        %2875 = vmatmul.mubr.f32.gmra.mrb[0].mxu0 %v2779
        %v2876 = vpop.f32.mrb[0].mxu0
        %v2877 = vadd.f32 0.0, %v2876
        %v2878 = vpop.f32.mrb[0].mxu0
        %2879 = vmatprep.mubr.f32.mxu0 0.0
        %2880 = vmatmul.mubr.f32.gmra.mrb[0].mxu0 %v2782
        %v2881 = vpop.f32.mrb[0].mxu0
        %v2882 = vadd.f32 0.0, %v2881
        %v2883 = vpop.f32.mrb[0].mxu0
        %2884 = vmatprep.mubr.f32.mxu0 0.0
        %2885 = vmatmul.mubr.f32.gmra.mrb[0].mxu0 %v2785
        %v2886 = vpop.f32.mrb[0].mxu0
        %v2887 = vadd.f32 0.0, %v2886
        %v2888 = vpop.f32.mrb[0].mxu0
        %2889 = vmatprep.mubr.f32.mxu0 0.0
        %2890 = vmatmul.mubr.f32.gmra.mrb[0].mxu0 %v2788
        %v2891 = vpop.f32.mrb[0].mxu0
        %v2892 = vadd.f32 0.0, %v2891
        %v2893 = vpop.f32.mrb[0].mxu0
        %2894 = vdwg.mxu0
        %v2895 = vrcp.pop %v2736
        %v2896 = vrcp.pop %v2739
        %v2897 = vrcp.pop %v2742
        %v2898 = vrcp.pop %v2745
        %v2899 = vrcp.pop %v2748
        %v2900 = vrcp.pop %v2751
        %v2901 = vrcp.pop %v2754
        %v2902 = vrcp.pop %v2757
        %v2903 = vmul.f32 %v2857, %v2895
        %v2904 = vmul.f32 %v2862, %v2896
        %v2905 = vmul.f32 %v2867, %v2897
        %v2906 = vmul.f32 %v2872, %v2898
        %v2907 = vmul.f32 %v2877, %v2899
        %v2908 = vmul.f32 %v2882, %v2900
        %v2909 = vmul.f32 %v2887, %v2901
        %v2910 = vmul.f32 %v2892, %v2902
        %2919 = vrot.lane.b32.xlu0 %v2903, 40
        %v2920 = vpop.permute.xlu0 %2919
        %2921 = vrot.lane.b32.xlu0 %v2904, 40
        %v2922 = vpop.permute.xlu0 %2921
        %2923 = vrot.lane.b32.xlu0 %v2905, 40
        %v2924 = vpop.permute.xlu0 %2923
        %2925 = vrot.lane.b32.xlu0 %v2906, 40
        %v2926 = vpop.permute.xlu0 %2925
        %2927 = vrot.lane.b32.xlu0 %v2907, 40
        %v2928 = vpop.permute.xlu0 %2927
        %2929 = vrot.lane.b32.xlu0 %v2908, 40
        %v2930 = vpop.permute.xlu0 %2929
        %2931 = vrot.lane.b32.xlu0 %v2909, 40
        %v2932 = vpop.permute.xlu0 %2931
        %2933 = vrot.lane.b32.xlu0 %v2910, 40
        %v2934 = vpop.permute.xlu0 %2933
        %vm2943 = vcmask 392512
        %2944 = vst.msk [vmem:[#allocation3] sm:$0xff] %vm2943, %v2920
        %2945 = vst.msk [vmem:[#allocation3 + $0x8] sm:$0xff] %vm2943, %v2922
        %2946 = vst.msk [vmem:[#allocation3 + $0x10] sm:$0xff] %vm2943, %v2924
        %2947 = vst.msk [vmem:[#allocation3 + $0x18] sm:$0xff] %vm2943, %v2926
        %2948 = vst.msk [vmem:[#allocation3 + $0x20] sm:$0xff] %vm2943, %v2928
        %2949 = vst.msk [vmem:[#allocation3 + $0x28] sm:$0xff] %vm2943, %v2930
        %2950 = vst.msk [vmem:[#allocation3 + $0x30] sm:$0xff] %vm2943, %v2932
        %2951 = vst.msk [vmem:[#allocation3 + $0x38] sm:$0xff] %vm2943, %v2934
        %v2952 = vld [vmem:[#allocation2] sm:$0xff]
        %v2953 = vld [vmem:[#allocation2 + $0x8] sm:$0xff]
        %v2954 = vld [vmem:[#allocation2 + $0x10] sm:$0xff]
        %v2955 = vld [vmem:[#allocation2 + $0x18] sm:$0xff]
        %v2956 = vld [vmem:[#allocation2 + $0x20] sm:$0xff]
        %v2957 = vld [vmem:[#allocation2 + $0x28] sm:$0xff]
        %v2958 = vld [vmem:[#allocation2 + $0x30] sm:$0xff]
        %v2959 = vld [vmem:[#allocation2 + $0x38] sm:$0xff]
        %v2960 = vld [vmem:[%s314 + $0x30] sm:$0xff]
        %v2961 = vld [vmem:[%s319] sm:$0xff]
        %v2962 = vld [vmem:[%s319 + $0x8] sm:$0xff]
        %2971 = vrot.lane.b32.xlu0 %v2952, 80
        %v2972 = vpop.permute.xlu0 %2971
        %2973 = vrot.lane.b32.xlu0 %v2953, 80
        %v2974 = vpop.permute.xlu0 %2973
        %2975 = vrot.lane.b32.xlu0 %v2954, 80
        %v2976 = vpop.permute.xlu0 %2975
        %2977 = vrot.lane.b32.xlu0 %v2955, 80
        %v2978 = vpop.permute.xlu0 %2977
        %2979 = vrot.lane.b32.xlu0 %v2956, 80
        %v2980 = vpop.permute.xlu0 %2979
        %2981 = vrot.lane.b32.xlu0 %v2957, 80
        %v2982 = vpop.permute.xlu0 %2981
        %2983 = vrot.lane.b32.xlu0 %v2958, 80
        %v2984 = vpop.permute.xlu0 %2983
        %2985 = vrot.lane.b32.xlu0 %v2959, 80
        %v2986 = vpop.permute.xlu0 %2985
        %v2987 = vsel %vm486, %v2972, 0
        %v2989 = vsel %vm486, %v2974, 0
        %v2991 = vsel %vm486, %v2976, 0
        %v2993 = vsel %vm486, %v2978, 0
        %v2995 = vsel %vm486, %v2980, 0
        %v2997 = vsel %vm486, %v2982, 0
        %v2999 = vsel %vm486, %v2984, 0
        %v3001 = vsel %vm486, %v2986, 0
        %3003 = vmatprep.subr.mxu0 0.0
        %3004 = vmatpush1.msra.mxu0 %v2960
        %3005 = vmatprep.subr.mxu0 0.0
        %3006 = vmatpush1.msra.mxu0 0.0
        %3007 = vmatprep.subr.mxu0 0.0
        %3008 = vmatpush1.msra.mxu0 0.0
        %3009 = vmatprep.subr.mxu0 0.0
        %3010 = vmatpush1.msra.mxu0 0.0
        %3011 = vmatprep.subr.mxu0 0.0
        %3012 = vmatpush1.msra.mxu0 0.0
        %3013 = vmatprep.subr.mxu0 0.0
        %3014 = vmatpush1.msra.mxu0 0.0
        %3015 = vmatprep.subr.mxu0 0.0
        %3016 = vmatpush1.msra.mxu0 0.0
        %3017 = vmatprep.subr.mxu0 0.0
        %3018 = vmatpush1.msra.mxu0 0.0
        %3019 = vmatprep.subr.mxu0 0.0
        %3020 = vmatpush1.msra.mxu0 0.0
        %3021 = vmatprep.subr.mxu0 0.0
        %3022 = vmatpush1.msra.mxu0 0.0
        %3023 = vmatprep.subr.mxu0 0.0
        %3024 = vmatpush1.msra.mxu0 0.0
        %3025 = vmatprep.subr.mxu0 0.0
        %3026 = vmatpush1.msra.mxu0 0.0
        %3027 = vmatprep.subr.mxu0 0.0
        %3028 = vmatpush1.msra.mxu0 0.0
        %3029 = vmatprep.subr.mxu0 0.0
        %3030 = vmatpush1.msra.mxu0 0.0
        %3031 = vmatprep.subr.mxu0 0.0
        %3032 = vmatpush1.msra.mxu0 0.0
        %3033 = vmatprep.subr.mxu0 0.0
        %3034 = vmatpush1.msra.mxu0 0.0
        %3035 = vmatprep.subr.mxu0 0.0
        %3036 = vmatpush1.msra.mxu0 0.0
        %3037 = vmatprep.subr.mxu0 0.0
        %3038 = vmatpush1.msra.mxu0 0.0
        %3039 = vmatprep.subr.mxu0 0.0
        %3040 = vmatpush1.msra.mxu0 0.0
        %3041 = vmatprep.subr.mxu0 0.0
        %3042 = vmatpush1.msra.mxu0 0.0
        %3043 = vmatprep.subr.mxu0 0.0
        %3044 = vmatpush1.msra.mxu0 0.0
        %3045 = vmatprep.subr.mxu0 0.0
        %3046 = vmatpush1.msra.mxu0 0.0
        %3047 = vmatprep.subr.mxu0 0.0
        %3048 = vmatpush1.msra.mxu0 0.0
        %3049 = vmatprep.subr.mxu0 0.0
        %3050 = vmatpush1.msra.mxu0 0.0
        %3051 = vmatprep.subr.mxu0 0.0
        %3052 = vmatpush1.msra.mxu0 0.0
        %3053 = vmatprep.subr.mxu0 0.0
        %3054 = vmatpush1.msra.mxu0 0.0
        %3055 = vmatprep.subr.mxu0 0.0
        %3056 = vmatpush1.msra.mxu0 0.0
        %3057 = vmatprep.subr.mxu0 0.0
        %3058 = vmatpush1.msra.mxu0 0.0
        %3059 = vmatprep.subr.mxu0 0.0
        %3060 = vmatpush1.msra.mxu0 0.0
        %3061 = vmatprep.subr.mxu0 0.0
        %3062 = vmatpush1.msra.mxu0 0.0
        %3063 = vmatprep.subr.mxu0 0.0
        %3064 = vmatpush1.msra.mxu0 0.0
        %3065 = vmatprep.subr.mxu0 0.0
        %3066 = vmatpush1.msra.mxu0 0.0
        %3067 = vmatprep.mubr.f32.mxu0 0.0
        %3068 = vmatmul.mubr.f32.gmra.mrb[0].mxu0 %v2987
        %v3069 = vpop.f32.mrb[0].mxu0
        %v3070 = vadd.f32 0.0, %v3069
        %v3071 = vpop.f32.mrb[0].mxu0
        %3072 = vmatprep.mubr.f32.mxu0 0.0
        %3073 = vmatmul.mubr.f32.gmra.mrb[0].mxu0 %v2989
        %v3074 = vpop.f32.mrb[0].mxu0
        %v3075 = vadd.f32 0.0, %v3074
        %v3076 = vpop.f32.mrb[0].mxu0
        %3077 = vmatprep.mubr.f32.mxu0 0.0
        %3078 = vmatmul.mubr.f32.gmra.mrb[0].mxu0 %v2991
        %v3079 = vpop.f32.mrb[0].mxu0
        %v3080 = vadd.f32 0.0, %v3079
        %v3081 = vpop.f32.mrb[0].mxu0
        %3082 = vmatprep.mubr.f32.mxu0 0.0
        %3083 = vmatmul.mubr.f32.gmra.mrb[0].mxu0 %v2993
        %v3084 = vpop.f32.mrb[0].mxu0
        %v3085 = vadd.f32 0.0, %v3084
        %v3086 = vpop.f32.mrb[0].mxu0
        %3087 = vmatprep.mubr.f32.mxu0 0.0
        %3088 = vmatmul.mubr.f32.gmra.mrb[0].mxu0 %v2995
        %v3089 = vpop.f32.mrb[0].mxu0
        %v3090 = vadd.f32 0.0, %v3089
        %v3091 = vpop.f32.mrb[0].mxu0
        %3092 = vmatprep.mubr.f32.mxu0 0.0
        %3093 = vmatmul.mubr.f32.gmra.mrb[0].mxu0 %v2997
        %v3094 = vpop.f32.mrb[0].mxu0
        %v3095 = vadd.f32 0.0, %v3094
        %v3096 = vpop.f32.mrb[0].mxu0
        %3097 = vmatprep.mubr.f32.mxu0 0.0
        %3098 = vmatmul.mubr.f32.gmra.mrb[0].mxu0 %v2999
        %v3099 = vpop.f32.mrb[0].mxu0
        %v3100 = vadd.f32 0.0, %v3099
        %v3101 = vpop.f32.mrb[0].mxu0
        %3102 = vmatprep.mubr.f32.mxu0 0.0
        %3103 = vmatmul.mubr.f32.gmra.mrb[0].mxu0 %v3001
        %v3104 = vpop.f32.mrb[0].mxu0
        %v3105 = vadd.f32 0.0, %v3104
        %v3106 = vpop.f32.mrb[0].mxu0
        %3107 = vdwg.mxu0
        %v3108 = vsel %vm616, %v3070, -inf
        %3109 = vmax.xlane.f32.xlu0 %v3108
        %v3110 = vpop.xlane.xlu0 %3109
        %v3111 = vsel %vm616, %v3075, -inf
        %3112 = vmax.xlane.f32.xlu0 %v3111
        %v3113 = vpop.xlane.xlu0 %3112
        %v3114 = vsel %vm616, %v3080, -inf
        %3115 = vmax.xlane.f32.xlu0 %v3114
        %v3116 = vpop.xlane.xlu0 %3115
        %v3117 = vsel %vm616, %v3085, -inf
        %3118 = vmax.xlane.f32.xlu0 %v3117
        %v3119 = vpop.xlane.xlu0 %3118
        %v3120 = vsel %vm616, %v3090, -inf
        %3121 = vmax.xlane.f32.xlu0 %v3120
        %v3122 = vpop.xlane.xlu0 %3121
        %v3123 = vsel %vm616, %v3095, -inf
        %3124 = vmax.xlane.f32.xlu0 %v3123
        %v3125 = vpop.xlane.xlu0 %3124
        %v3126 = vsel %vm616, %v3100, -inf
        %3127 = vmax.xlane.f32.xlu0 %v3126
        %v3128 = vpop.xlane.xlu0 %3127
        %v3129 = vsel %vm616, %v3105, -inf
        %3130 = vmax.xlane.f32.xlu0 %v3129
        %v3131 = vpop.xlane.xlu0 %3130
        %v3132 = vsub.f32 %v3070, %v3110
        %v3133 = vsub.f32 %v3075, %v3113
        %v3134 = vsub.f32 %v3080, %v3116
        %v3135 = vsub.f32 %v3085, %v3119
        %v3136 = vsub.f32 %v3090, %v3122
        %v3137 = vsub.f32 %v3095, %v3125
        %v3138 = vsub.f32 %v3100, %v3128
        %v3139 = vsub.f32 %v3105, %v3131
        %v3140 = vmul.f32 %v3132, 1.442695
        %v3141 = vpow.pop %v3140
        %v3142 = vmul.f32 %v3133, 1.442695
        %v3143 = vpow.pop %v3142
        %v3144 = vmul.f32 %v3134, 1.442695
        %v3145 = vpow.pop %v3144
        %v3146 = vmul.f32 %v3135, 1.442695
        %v3147 = vpow.pop %v3146
        %v3148 = vmul.f32 %v3136, 1.442695
        %v3149 = vpow.pop %v3148
        %v3150 = vmul.f32 %v3137, 1.442695
        %v3151 = vpow.pop %v3150
        %v3152 = vmul.f32 %v3138, 1.442695
        %v3153 = vpow.pop %v3152
        %v3154 = vmul.f32 %v3139, 1.442695
        %v3155 = vpow.pop %v3154
        %v3156 = vsel %vm616, %v3141, 0.0
        %3157 = vadd.xlane.f32.xlu0 %v3156
        %v3158 = vpop.xlane.xlu0 %3157
        %v3159 = vsel %vm616, %v3143, 0.0
        %3160 = vadd.xlane.f32.xlu0 %v3159
        %v3161 = vpop.xlane.xlu0 %3160
        %v3162 = vsel %vm616, %v3145, 0.0
        %3163 = vadd.xlane.f32.xlu0 %v3162
        %v3164 = vpop.xlane.xlu0 %3163
        %v3165 = vsel %vm616, %v3147, 0.0
        %3166 = vadd.xlane.f32.xlu0 %v3165
        %v3167 = vpop.xlane.xlu0 %3166
        %v3168 = vsel %vm616, %v3149, 0.0
        %3169 = vadd.xlane.f32.xlu0 %v3168
        %v3170 = vpop.xlane.xlu0 %3169
        %v3171 = vsel %vm616, %v3151, 0.0
        %3172 = vadd.xlane.f32.xlu0 %v3171
        %v3173 = vpop.xlane.xlu0 %3172
        %v3174 = vsel %vm616, %v3153, 0.0
        %3175 = vadd.xlane.f32.xlu0 %v3174
        %v3176 = vpop.xlane.xlu0 %3175
        %v3177 = vsel %vm616, %v3155, 0.0
        %3178 = vadd.xlane.f32.xlu0 %v3177
        %v3179 = vpop.xlane.xlu0 %3178
        %3182 = vrot.lane.b32.xlu0 %v2961, 80
        %v3183 = vpop.permute.xlu0 %3182
        %3184 = vrot.lane.b32.xlu0 %v2962, 80
        %v3185 = vpop.permute.xlu0 %3184
        %v3189 = vsel %vm616, %v3141, 0
        %v3192 = vsel %vm616, %v3143, 0
        %v3195 = vsel %vm616, %v3145, 0
        %v3198 = vsel %vm616, %v3147, 0
        %v3201 = vsel %vm616, %v3149, 0
        %v3204 = vsel %vm616, %v3151, 0
        %v3207 = vsel %vm616, %v3153, 0
        %v3210 = vsel %vm616, %v3155, 0
        %3212 = vmatprep.subr.mxu0 0.0
        %3213 = vmatpush1.msra.mxu0 %v3183
        %3214 = vmatprep.subr.mxu0 0.0
        %3215 = vmatpush1.msra.mxu0 %v3185
        %3216 = vmatprep.subr.mxu0 0.0
        %3217 = vmatpush1.msra.mxu0 0.0
        %3218 = vmatprep.subr.mxu0 0.0
        %3219 = vmatpush1.msra.mxu0 0.0
        %3220 = vmatprep.subr.mxu0 0.0
        %3221 = vmatpush1.msra.mxu0 0.0
        %3222 = vmatprep.subr.mxu0 0.0
        %3223 = vmatpush1.msra.mxu0 0.0
        %3224 = vmatprep.subr.mxu0 0.0
        %3225 = vmatpush1.msra.mxu0 0.0
        %3226 = vmatprep.subr.mxu0 0.0
        %3227 = vmatpush1.msra.mxu0 0.0
        %3228 = vmatprep.subr.mxu0 0.0
        %3229 = vmatpush1.msra.mxu0 0.0
        %3230 = vmatprep.subr.mxu0 0.0
        %3231 = vmatpush1.msra.mxu0 0.0
        %3232 = vmatprep.subr.mxu0 0.0
        %3233 = vmatpush1.msra.mxu0 0.0
        %3234 = vmatprep.subr.mxu0 0.0
        %3235 = vmatpush1.msra.mxu0 0.0
        %3236 = vmatprep.subr.mxu0 0.0
        %3237 = vmatpush1.msra.mxu0 0.0
        %3238 = vmatprep.subr.mxu0 0.0
        %3239 = vmatpush1.msra.mxu0 0.0
        %3240 = vmatprep.subr.mxu0 0.0
        %3241 = vmatpush1.msra.mxu0 0.0
        %3242 = vmatprep.subr.mxu0 0.0
        %3243 = vmatpush1.msra.mxu0 0.0
        %3244 = vmatprep.subr.mxu0 0.0
        %3245 = vmatpush1.msra.mxu0 0.0
        %3246 = vmatprep.subr.mxu0 0.0
        %3247 = vmatpush1.msra.mxu0 0.0
        %3248 = vmatprep.subr.mxu0 0.0
        %3249 = vmatpush1.msra.mxu0 0.0
        %3250 = vmatprep.subr.mxu0 0.0
        %3251 = vmatpush1.msra.mxu0 0.0
        %3252 = vmatprep.subr.mxu0 0.0
        %3253 = vmatpush1.msra.mxu0 0.0
        %3254 = vmatprep.subr.mxu0 0.0
        %3255 = vmatpush1.msra.mxu0 0.0
        %3256 = vmatprep.subr.mxu0 0.0
        %3257 = vmatpush1.msra.mxu0 0.0
        %3258 = vmatprep.subr.mxu0 0.0
        %3259 = vmatpush1.msra.mxu0 0.0
        %3260 = vmatprep.subr.mxu0 0.0
        %3261 = vmatpush1.msra.mxu0 0.0
        %3262 = vmatprep.subr.mxu0 0.0
        %3263 = vmatpush1.msra.mxu0 0.0
        %3264 = vmatprep.subr.mxu0 0.0
        %3265 = vmatpush1.msra.mxu0 0.0
        %3266 = vmatprep.subr.mxu0 0.0
        %3267 = vmatpush1.msra.mxu0 0.0
        %3268 = vmatprep.subr.mxu0 0.0
        %3269 = vmatpush1.msra.mxu0 0.0
        %3270 = vmatprep.subr.mxu0 0.0
        %3271 = vmatpush1.msra.mxu0 0.0
        %3272 = vmatprep.subr.mxu0 0.0
        %3273 = vmatpush1.msra.mxu0 0.0
        %3274 = vmatprep.subr.mxu0 0.0
        %3275 = vmatpush1.msra.mxu0 0.0
        %3276 = vmatprep.mubr.f32.mxu0 0.0
        %3277 = vmatmul.mubr.f32.gmra.mrb[0].mxu0 %v3189
        %v3278 = vpop.f32.mrb[0].mxu0
        %v3279 = vadd.f32 0.0, %v3278
        %v3280 = vpop.f32.mrb[0].mxu0
        %3281 = vmatprep.mubr.f32.mxu0 0.0
        %3282 = vmatmul.mubr.f32.gmra.mrb[0].mxu0 %v3192
        %v3283 = vpop.f32.mrb[0].mxu0
        %v3284 = vadd.f32 0.0, %v3283
        %v3285 = vpop.f32.mrb[0].mxu0
        %3286 = vmatprep.mubr.f32.mxu0 0.0
        %3287 = vmatmul.mubr.f32.gmra.mrb[0].mxu0 %v3195
        %v3288 = vpop.f32.mrb[0].mxu0
        %v3289 = vadd.f32 0.0, %v3288
        %v3290 = vpop.f32.mrb[0].mxu0
        %3291 = vmatprep.mubr.f32.mxu0 0.0
        %3292 = vmatmul.mubr.f32.gmra.mrb[0].mxu0 %v3198
        %v3293 = vpop.f32.mrb[0].mxu0
        %v3294 = vadd.f32 0.0, %v3293
        %v3295 = vpop.f32.mrb[0].mxu0
        %3296 = vmatprep.mubr.f32.mxu0 0.0
        %3297 = vmatmul.mubr.f32.gmra.mrb[0].mxu0 %v3201
        %v3298 = vpop.f32.mrb[0].mxu0
        %v3299 = vadd.f32 0.0, %v3298
        %v3300 = vpop.f32.mrb[0].mxu0
        %3301 = vmatprep.mubr.f32.mxu0 0.0
        %3302 = vmatmul.mubr.f32.gmra.mrb[0].mxu0 %v3204
        %v3303 = vpop.f32.mrb[0].mxu0
        %v3304 = vadd.f32 0.0, %v3303
        %v3305 = vpop.f32.mrb[0].mxu0
        %3306 = vmatprep.mubr.f32.mxu0 0.0
        %3307 = vmatmul.mubr.f32.gmra.mrb[0].mxu0 %v3207
        %v3308 = vpop.f32.mrb[0].mxu0
        %v3309 = vadd.f32 0.0, %v3308
        %v3310 = vpop.f32.mrb[0].mxu0
        %3311 = vmatprep.mubr.f32.mxu0 0.0
        %3312 = vmatmul.mubr.f32.gmra.mrb[0].mxu0 %v3210
        %v3313 = vpop.f32.mrb[0].mxu0
        %v3314 = vadd.f32 0.0, %v3313
        %v3315 = vpop.f32.mrb[0].mxu0
        %3316 = vdwg.mxu0
        %v3317 = vrcp.pop %v3158
        %v3318 = vrcp.pop %v3161
        %v3319 = vrcp.pop %v3164
        %v3320 = vrcp.pop %v3167
        %v3321 = vrcp.pop %v3170
        %v3322 = vrcp.pop %v3173
        %v3323 = vrcp.pop %v3176
        %v3324 = vrcp.pop %v3179
        %v3325 = vmul.f32 %v3279, %v3317
        %v3326 = vmul.f32 %v3284, %v3318
        %v3327 = vmul.f32 %v3289, %v3319
        %v3328 = vmul.f32 %v3294, %v3320
        %v3329 = vmul.f32 %v3299, %v3321
        %v3330 = vmul.f32 %v3304, %v3322
        %v3331 = vmul.f32 %v3309, %v3323
        %v3332 = vmul.f32 %v3314, %v3324
        %3341 = vrot.lane.b32.xlu0 %v3325, 48
        %v3342 = vpop.permute.xlu0 %3341
        %3343 = vrot.lane.b32.xlu0 %v3326, 48
        %v3344 = vpop.permute.xlu0 %3343
        %3345 = vrot.lane.b32.xlu0 %v3327, 48
        %v3346 = vpop.permute.xlu0 %3345
        %3347 = vrot.lane.b32.xlu0 %v3328, 48
        %v3348 = vpop.permute.xlu0 %3347
        %3349 = vrot.lane.b32.xlu0 %v3329, 48
        %v3350 = vpop.permute.xlu0 %3349
        %3351 = vrot.lane.b32.xlu0 %v3330, 48
        %v3352 = vpop.permute.xlu0 %3351
        %3353 = vrot.lane.b32.xlu0 %v3331, 48
        %v3354 = vpop.permute.xlu0 %3353
        %3355 = vrot.lane.b32.xlu0 %v3332, 48
        %v3356 = vpop.permute.xlu0 %3355
        %vm3365 = vcmask 458112
        %3366 = vst.msk [vmem:[#allocation3] sm:$0xff] %vm3365, %v3342
        %3367 = vst.msk [vmem:[#allocation3 + $0x8] sm:$0xff] %vm3365, %v3344
        %3368 = vst.msk [vmem:[#allocation3 + $0x10] sm:$0xff] %vm3365, %v3346
        %3369 = vst.msk [vmem:[#allocation3 + $0x18] sm:$0xff] %vm3365, %v3348
        %3370 = vst.msk [vmem:[#allocation3 + $0x20] sm:$0xff] %vm3365, %v3350
        %3371 = vst.msk [vmem:[#allocation3 + $0x28] sm:$0xff] %vm3365, %v3352
        %3372 = vst.msk [vmem:[#allocation3 + $0x30] sm:$0xff] %vm3365, %v3354
        %3373 = vst.msk [vmem:[#allocation3 + $0x38] sm:$0xff] %vm3365, %v3356
        %v3374 = vld [vmem:[#allocation2] sm:$0xff]
        %v3375 = vld [vmem:[#allocation2 + $0x8] sm:$0xff]
        %v3376 = vld [vmem:[#allocation2 + $0x10] sm:$0xff]
        %v3377 = vld [vmem:[#allocation2 + $0x18] sm:$0xff]
        %v3378 = vld [vmem:[#allocation2 + $0x20] sm:$0xff]
        %v3379 = vld [vmem:[#allocation2 + $0x28] sm:$0xff]
        %v3380 = vld [vmem:[#allocation2 + $0x30] sm:$0xff]
        %v3381 = vld [vmem:[#allocation2 + $0x38] sm:$0xff]
        %v3382 = vld [vmem:[%s314 + $0x38] sm:$0xff]
        %v3383 = vld [vmem:[%s319] sm:$0xff]
        %v3384 = vld [vmem:[%s319 + $0x8] sm:$0xff]
        %3393 = vrot.lane.b32.xlu0 %v3374, 72
        %v3394 = vpop.permute.xlu0 %3393
        %3395 = vrot.lane.b32.xlu0 %v3375, 72
        %v3396 = vpop.permute.xlu0 %3395
        %3397 = vrot.lane.b32.xlu0 %v3376, 72
        %v3398 = vpop.permute.xlu0 %3397
        %3399 = vrot.lane.b32.xlu0 %v3377, 72
        %v3400 = vpop.permute.xlu0 %3399
        %3401 = vrot.lane.b32.xlu0 %v3378, 72
        %v3402 = vpop.permute.xlu0 %3401
        %3403 = vrot.lane.b32.xlu0 %v3379, 72
        %v3404 = vpop.permute.xlu0 %3403
        %3405 = vrot.lane.b32.xlu0 %v3380, 72
        %v3406 = vpop.permute.xlu0 %3405
        %3407 = vrot.lane.b32.xlu0 %v3381, 72
        %v3408 = vpop.permute.xlu0 %3407
        %v3409 = vsel %vm486, %v3394, 0
        %v3411 = vsel %vm486, %v3396, 0
        %v3413 = vsel %vm486, %v3398, 0
        %v3415 = vsel %vm486, %v3400, 0
        %v3417 = vsel %vm486, %v3402, 0
        %v3419 = vsel %vm486, %v3404, 0
        %v3421 = vsel %vm486, %v3406, 0
        %v3423 = vsel %vm486, %v3408, 0
        %3425 = vmatprep.subr.mxu0 0.0
        %3426 = vmatpush1.msra.mxu0 %v3382
        %3427 = vmatprep.subr.mxu0 0.0
        %3428 = vmatpush1.msra.mxu0 0.0
        %3429 = vmatprep.subr.mxu0 0.0
        %3430 = vmatpush1.msra.mxu0 0.0
        %3431 = vmatprep.subr.mxu0 0.0
        %3432 = vmatpush1.msra.mxu0 0.0
        %3433 = vmatprep.subr.mxu0 0.0
        %3434 = vmatpush1.msra.mxu0 0.0
        %3435 = vmatprep.subr.mxu0 0.0
        %3436 = vmatpush1.msra.mxu0 0.0
        %3437 = vmatprep.subr.mxu0 0.0
        %3438 = vmatpush1.msra.mxu0 0.0
        %3439 = vmatprep.subr.mxu0 0.0
        %3440 = vmatpush1.msra.mxu0 0.0
        %3441 = vmatprep.subr.mxu0 0.0
        %3442 = vmatpush1.msra.mxu0 0.0
        %3443 = vmatprep.subr.mxu0 0.0
        %3444 = vmatpush1.msra.mxu0 0.0
        %3445 = vmatprep.subr.mxu0 0.0
        %3446 = vmatpush1.msra.mxu0 0.0
        %3447 = vmatprep.subr.mxu0 0.0
        %3448 = vmatpush1.msra.mxu0 0.0
        %3449 = vmatprep.subr.mxu0 0.0
        %3450 = vmatpush1.msra.mxu0 0.0
        %3451 = vmatprep.subr.mxu0 0.0
        %3452 = vmatpush1.msra.mxu0 0.0
        %3453 = vmatprep.subr.mxu0 0.0
        %3454 = vmatpush1.msra.mxu0 0.0
        %3455 = vmatprep.subr.mxu0 0.0
        %3456 = vmatpush1.msra.mxu0 0.0
        %3457 = vmatprep.subr.mxu0 0.0
        %3458 = vmatpush1.msra.mxu0 0.0
        %3459 = vmatprep.subr.mxu0 0.0
        %3460 = vmatpush1.msra.mxu0 0.0
        %3461 = vmatprep.subr.mxu0 0.0
        %3462 = vmatpush1.msra.mxu0 0.0
        %3463 = vmatprep.subr.mxu0 0.0
        %3464 = vmatpush1.msra.mxu0 0.0
        %3465 = vmatprep.subr.mxu0 0.0
        %3466 = vmatpush1.msra.mxu0 0.0
        %3467 = vmatprep.subr.mxu0 0.0
        %3468 = vmatpush1.msra.mxu0 0.0
        %3469 = vmatprep.subr.mxu0 0.0
        %3470 = vmatpush1.msra.mxu0 0.0
        %3471 = vmatprep.subr.mxu0 0.0
        %3472 = vmatpush1.msra.mxu0 0.0
        %3473 = vmatprep.subr.mxu0 0.0
        %3474 = vmatpush1.msra.mxu0 0.0
        %3475 = vmatprep.subr.mxu0 0.0
        %3476 = vmatpush1.msra.mxu0 0.0
        %3477 = vmatprep.subr.mxu0 0.0
        %3478 = vmatpush1.msra.mxu0 0.0
        %3479 = vmatprep.subr.mxu0 0.0
        %3480 = vmatpush1.msra.mxu0 0.0
        %3481 = vmatprep.subr.mxu0 0.0
        %3482 = vmatpush1.msra.mxu0 0.0
        %3483 = vmatprep.subr.mxu0 0.0
        %3484 = vmatpush1.msra.mxu0 0.0
        %3485 = vmatprep.subr.mxu0 0.0
        %3486 = vmatpush1.msra.mxu0 0.0
        %3487 = vmatprep.subr.mxu0 0.0
        %3488 = vmatpush1.msra.mxu0 0.0
        %3489 = vmatprep.mubr.f32.mxu0 0.0
        %3490 = vmatmul.mubr.f32.gmra.mrb[0].mxu0 %v3409
        %v3491 = vpop.f32.mrb[0].mxu0
        %v3492 = vadd.f32 0.0, %v3491
        %v3493 = vpop.f32.mrb[0].mxu0
        %3494 = vmatprep.mubr.f32.mxu0 0.0
        %3495 = vmatmul.mubr.f32.gmra.mrb[0].mxu0 %v3411
        %v3496 = vpop.f32.mrb[0].mxu0
        %v3497 = vadd.f32 0.0, %v3496
        %v3498 = vpop.f32.mrb[0].mxu0
        %3499 = vmatprep.mubr.f32.mxu0 0.0
        %3500 = vmatmul.mubr.f32.gmra.mrb[0].mxu0 %v3413
        %v3501 = vpop.f32.mrb[0].mxu0
        %v3502 = vadd.f32 0.0, %v3501
        %v3503 = vpop.f32.mrb[0].mxu0
        %3504 = vmatprep.mubr.f32.mxu0 0.0
        %3505 = vmatmul.mubr.f32.gmra.mrb[0].mxu0 %v3415
        %v3506 = vpop.f32.mrb[0].mxu0
        %v3507 = vadd.f32 0.0, %v3506
        %v3508 = vpop.f32.mrb[0].mxu0
        %3509 = vmatprep.mubr.f32.mxu0 0.0
        %3510 = vmatmul.mubr.f32.gmra.mrb[0].mxu0 %v3417
        %v3511 = vpop.f32.mrb[0].mxu0
        %v3512 = vadd.f32 0.0, %v3511
        %v3513 = vpop.f32.mrb[0].mxu0
        %3514 = vmatprep.mubr.f32.mxu0 0.0
        %3515 = vmatmul.mubr.f32.gmra.mrb[0].mxu0 %v3419
        %v3516 = vpop.f32.mrb[0].mxu0
        %v3517 = vadd.f32 0.0, %v3516
        %v3518 = vpop.f32.mrb[0].mxu0
        %3519 = vmatprep.mubr.f32.mxu0 0.0
        %3520 = vmatmul.mubr.f32.gmra.mrb[0].mxu0 %v3421
        %v3521 = vpop.f32.mrb[0].mxu0
        %v3522 = vadd.f32 0.0, %v3521
        %v3523 = vpop.f32.mrb[0].mxu0
        %3524 = vmatprep.mubr.f32.mxu0 0.0
        %3525 = vmatmul.mubr.f32.gmra.mrb[0].mxu0 %v3423
        %v3526 = vpop.f32.mrb[0].mxu0
        %v3527 = vadd.f32 0.0, %v3526
        %v3528 = vpop.f32.mrb[0].mxu0
        %3529 = vdwg.mxu0
        %v3530 = vsel %vm616, %v3492, -inf
        %3531 = vmax.xlane.f32.xlu0 %v3530
        %v3532 = vpop.xlane.xlu0 %3531
        %v3533 = vsel %vm616, %v3497, -inf
        %3534 = vmax.xlane.f32.xlu0 %v3533
        %v3535 = vpop.xlane.xlu0 %3534
        %v3536 = vsel %vm616, %v3502, -inf
        %3537 = vmax.xlane.f32.xlu0 %v3536
        %v3538 = vpop.xlane.xlu0 %3537
        %v3539 = vsel %vm616, %v3507, -inf
        %3540 = vmax.xlane.f32.xlu0 %v3539
        %v3541 = vpop.xlane.xlu0 %3540
        %v3542 = vsel %vm616, %v3512, -inf
        %3543 = vmax.xlane.f32.xlu0 %v3542
        %v3544 = vpop.xlane.xlu0 %3543
        %v3545 = vsel %vm616, %v3517, -inf
        %3546 = vmax.xlane.f32.xlu0 %v3545
        %v3547 = vpop.xlane.xlu0 %3546
        %v3548 = vsel %vm616, %v3522, -inf
        %3549 = vmax.xlane.f32.xlu0 %v3548
        %v3550 = vpop.xlane.xlu0 %3549
        %v3551 = vsel %vm616, %v3527, -inf
        %3552 = vmax.xlane.f32.xlu0 %v3551
        %v3553 = vpop.xlane.xlu0 %3552
        %v3554 = vsub.f32 %v3492, %v3532
        %v3555 = vsub.f32 %v3497, %v3535
        %v3556 = vsub.f32 %v3502, %v3538
        %v3557 = vsub.f32 %v3507, %v3541
        %v3558 = vsub.f32 %v3512, %v3544
        %v3559 = vsub.f32 %v3517, %v3547
        %v3560 = vsub.f32 %v3522, %v3550
        %v3561 = vsub.f32 %v3527, %v3553
        %v3562 = vmul.f32 %v3554, 1.442695
        %v3563 = vpow.pop %v3562
        %v3564 = vmul.f32 %v3555, 1.442695
        %v3565 = vpow.pop %v3564
        %v3566 = vmul.f32 %v3556, 1.442695
        %v3567 = vpow.pop %v3566
        %v3568 = vmul.f32 %v3557, 1.442695
        %v3569 = vpow.pop %v3568
        %v3570 = vmul.f32 %v3558, 1.442695
        %v3571 = vpow.pop %v3570
        %v3572 = vmul.f32 %v3559, 1.442695
        %v3573 = vpow.pop %v3572
        %v3574 = vmul.f32 %v3560, 1.442695
        %v3575 = vpow.pop %v3574
        %v3576 = vmul.f32 %v3561, 1.442695
        %v3577 = vpow.pop %v3576
        %v3578 = vsel %vm616, %v3563, 0.0
        %3579 = vadd.xlane.f32.xlu0 %v3578
        %v3580 = vpop.xlane.xlu0 %3579
        %v3581 = vsel %vm616, %v3565, 0.0
        %3582 = vadd.xlane.f32.xlu0 %v3581
        %v3583 = vpop.xlane.xlu0 %3582
        %v3584 = vsel %vm616, %v3567, 0.0
        %3585 = vadd.xlane.f32.xlu0 %v3584
        %v3586 = vpop.xlane.xlu0 %3585
        %v3587 = vsel %vm616, %v3569, 0.0
        %3588 = vadd.xlane.f32.xlu0 %v3587
        %v3589 = vpop.xlane.xlu0 %3588
        %v3590 = vsel %vm616, %v3571, 0.0
        %3591 = vadd.xlane.f32.xlu0 %v3590
        %v3592 = vpop.xlane.xlu0 %3591
        %v3593 = vsel %vm616, %v3573, 0.0
        %3594 = vadd.xlane.f32.xlu0 %v3593
        %v3595 = vpop.xlane.xlu0 %3594
        %v3596 = vsel %vm616, %v3575, 0.0
        %3597 = vadd.xlane.f32.xlu0 %v3596
        %v3598 = vpop.xlane.xlu0 %3597
        %v3599 = vsel %vm616, %v3577, 0.0
        %3600 = vadd.xlane.f32.xlu0 %v3599
        %v3601 = vpop.xlane.xlu0 %3600
        %3604 = vrot.lane.b32.xlu0 %v3383, 72
        %v3605 = vpop.permute.xlu0 %3604
        %3606 = vrot.lane.b32.xlu0 %v3384, 72
        %v3607 = vpop.permute.xlu0 %3606
        %v3611 = vsel %vm616, %v3563, 0
        %v3614 = vsel %vm616, %v3565, 0
        %v3617 = vsel %vm616, %v3567, 0
        %v3620 = vsel %vm616, %v3569, 0
        %v3623 = vsel %vm616, %v3571, 0
        %v3626 = vsel %vm616, %v3573, 0
        %v3629 = vsel %vm616, %v3575, 0
        %v3632 = vsel %vm616, %v3577, 0
        %3634 = vmatprep.subr.mxu0 0.0
        %3635 = vmatpush1.msra.mxu0 %v3605
        %3636 = vmatprep.subr.mxu0 0.0
        %3637 = vmatpush1.msra.mxu0 %v3607
        %3638 = vmatprep.subr.mxu0 0.0
        %3639 = vmatpush1.msra.mxu0 0.0
        %3640 = vmatprep.subr.mxu0 0.0
        %3641 = vmatpush1.msra.mxu0 0.0
        %3642 = vmatprep.subr.mxu0 0.0
        %3643 = vmatpush1.msra.mxu0 0.0
        %3644 = vmatprep.subr.mxu0 0.0
        %3645 = vmatpush1.msra.mxu0 0.0
        %3646 = vmatprep.subr.mxu0 0.0
        %3647 = vmatpush1.msra.mxu0 0.0
        %3648 = vmatprep.subr.mxu0 0.0
        %3649 = vmatpush1.msra.mxu0 0.0
        %3650 = vmatprep.subr.mxu0 0.0
        %3651 = vmatpush1.msra.mxu0 0.0
        %3652 = vmatprep.subr.mxu0 0.0
        %3653 = vmatpush1.msra.mxu0 0.0
        %3654 = vmatprep.subr.mxu0 0.0
        %3655 = vmatpush1.msra.mxu0 0.0
        %3656 = vmatprep.subr.mxu0 0.0
        %3657 = vmatpush1.msra.mxu0 0.0
        %3658 = vmatprep.subr.mxu0 0.0
        %3659 = vmatpush1.msra.mxu0 0.0
        %3660 = vmatprep.subr.mxu0 0.0
        %3661 = vmatpush1.msra.mxu0 0.0
        %3662 = vmatprep.subr.mxu0 0.0
        %3663 = vmatpush1.msra.mxu0 0.0
        %3664 = vmatprep.subr.mxu0 0.0
        %3665 = vmatpush1.msra.mxu0 0.0
        %3666 = vmatprep.subr.mxu0 0.0
        %3667 = vmatpush1.msra.mxu0 0.0
        %3668 = vmatprep.subr.mxu0 0.0
        %3669 = vmatpush1.msra.mxu0 0.0
        %3670 = vmatprep.subr.mxu0 0.0
        %3671 = vmatpush1.msra.mxu0 0.0
        %3672 = vmatprep.subr.mxu0 0.0
        %3673 = vmatpush1.msra.mxu0 0.0
        %3674 = vmatprep.subr.mxu0 0.0
        %3675 = vmatpush1.msra.mxu0 0.0
        %3676 = vmatprep.subr.mxu0 0.0
        %3677 = vmatpush1.msra.mxu0 0.0
        %3678 = vmatprep.subr.mxu0 0.0
        %3679 = vmatpush1.msra.mxu0 0.0
        %3680 = vmatprep.subr.mxu0 0.0
        %3681 = vmatpush1.msra.mxu0 0.0
        %3682 = vmatprep.subr.mxu0 0.0
        %3683 = vmatpush1.msra.mxu0 0.0
        %3684 = vmatprep.subr.mxu0 0.0
        %3685 = vmatpush1.msra.mxu0 0.0
        %3686 = vmatprep.subr.mxu0 0.0
        %3687 = vmatpush1.msra.mxu0 0.0
        %3688 = vmatprep.subr.mxu0 0.0
        %3689 = vmatpush1.msra.mxu0 0.0
        %3690 = vmatprep.subr.mxu0 0.0
        %3691 = vmatpush1.msra.mxu0 0.0
        %3692 = vmatprep.subr.mxu0 0.0
        %3693 = vmatpush1.msra.mxu0 0.0
        %3694 = vmatprep.subr.mxu0 0.0
        %3695 = vmatpush1.msra.mxu0 0.0
        %3696 = vmatprep.subr.mxu0 0.0
        %3697 = vmatpush1.msra.mxu0 0.0
        %3698 = vmatprep.mubr.f32.mxu0 0.0
        %3699 = vmatmul.mubr.f32.gmra.mrb[0].mxu0 %v3611
        %v3700 = vpop.f32.mrb[0].mxu0
        %v3701 = vadd.f32 0.0, %v3700
        %v3702 = vpop.f32.mrb[0].mxu0
        %3703 = vmatprep.mubr.f32.mxu0 0.0
        %3704 = vmatmul.mubr.f32.gmra.mrb[0].mxu0 %v3614
        %v3705 = vpop.f32.mrb[0].mxu0
        %v3706 = vadd.f32 0.0, %v3705
        %v3707 = vpop.f32.mrb[0].mxu0
        %3708 = vmatprep.mubr.f32.mxu0 0.0
        %3709 = vmatmul.mubr.f32.gmra.mrb[0].mxu0 %v3617
        %v3710 = vpop.f32.mrb[0].mxu0
        %v3711 = vadd.f32 0.0, %v3710
        %v3712 = vpop.f32.mrb[0].mxu0
        %3713 = vmatprep.mubr.f32.mxu0 0.0
        %3714 = vmatmul.mubr.f32.gmra.mrb[0].mxu0 %v3620
        %v3715 = vpop.f32.mrb[0].mxu0
        %v3716 = vadd.f32 0.0, %v3715
        %v3717 = vpop.f32.mrb[0].mxu0
        %3718 = vmatprep.mubr.f32.mxu0 0.0
        %3719 = vmatmul.mubr.f32.gmra.mrb[0].mxu0 %v3623
        %v3720 = vpop.f32.mrb[0].mxu0
        %v3721 = vadd.f32 0.0, %v3720
        %v3722 = vpop.f32.mrb[0].mxu0
        %3723 = vmatprep.mubr.f32.mxu0 0.0
        %3724 = vmatmul.mubr.f32.gmra.mrb[0].mxu0 %v3626
        %v3725 = vpop.f32.mrb[0].mxu0
        %v3726 = vadd.f32 0.0, %v3725
        %v3727 = vpop.f32.mrb[0].mxu0
        %3728 = vmatprep.mubr.f32.mxu0 0.0
        %3729 = vmatmul.mubr.f32.gmra.mrb[0].mxu0 %v3629
        %v3730 = vpop.f32.mrb[0].mxu0
        %v3731 = vadd.f32 0.0, %v3730
        %v3732 = vpop.f32.mrb[0].mxu0
        %3733 = vmatprep.mubr.f32.mxu0 0.0
        %3734 = vmatmul.mubr.f32.gmra.mrb[0].mxu0 %v3632
        %v3735 = vpop.f32.mrb[0].mxu0
        %v3736 = vadd.f32 0.0, %v3735
        %v3737 = vpop.f32.mrb[0].mxu0
        %3738 = vdwg.mxu0
        %v3739 = vrcp.pop %v3580
        %v3740 = vrcp.pop %v3583
        %v3741 = vrcp.pop %v3586
        %v3742 = vrcp.pop %v3589
        %v3743 = vrcp.pop %v3592
        %v3744 = vrcp.pop %v3595
        %v3745 = vrcp.pop %v3598
        %v3746 = vrcp.pop %v3601
        %v3747 = vmul.f32 %v3701, %v3739
        %v3748 = vmul.f32 %v3706, %v3740
        %v3749 = vmul.f32 %v3711, %v3741
        %v3750 = vmul.f32 %v3716, %v3742
        %v3751 = vmul.f32 %v3721, %v3743
        %v3752 = vmul.f32 %v3726, %v3744
        %v3753 = vmul.f32 %v3731, %v3745
        %v3754 = vmul.f32 %v3736, %v3746
        %3763 = vrot.lane.b32.xlu0 %v3747, 56
        %v3764 = vpop.permute.xlu0 %3763
        %3765 = vrot.lane.b32.xlu0 %v3748, 56
        %v3766 = vpop.permute.xlu0 %3765
        %3767 = vrot.lane.b32.xlu0 %v3749, 56
        %v3768 = vpop.permute.xlu0 %3767
        %3769 = vrot.lane.b32.xlu0 %v3750, 56
        %v3770 = vpop.permute.xlu0 %3769
        %3771 = vrot.lane.b32.xlu0 %v3751, 56
        %v3772 = vpop.permute.xlu0 %3771
        %3773 = vrot.lane.b32.xlu0 %v3752, 56
        %v3774 = vpop.permute.xlu0 %3773
        %3775 = vrot.lane.b32.xlu0 %v3753, 56
        %v3776 = vpop.permute.xlu0 %3775
        %3777 = vrot.lane.b32.xlu0 %v3754, 56
        %v3778 = vpop.permute.xlu0 %3777
        %vm3787 = vcmask 523712
        %3788 = vst.msk [vmem:[#allocation3] sm:$0xff] %vm3787, %v3764
        %3789 = vst.msk [vmem:[#allocation3 + $0x8] sm:$0xff] %vm3787, %v3766
        %3790 = vst.msk [vmem:[#allocation3 + $0x10] sm:$0xff] %vm3787, %v3768
        %3791 = vst.msk [vmem:[#allocation3 + $0x18] sm:$0xff] %vm3787, %v3770
        %3792 = vst.msk [vmem:[#allocation3 + $0x20] sm:$0xff] %vm3787, %v3772
        %3793 = vst.msk [vmem:[#allocation3 + $0x28] sm:$0xff] %vm3787, %v3774
        %3794 = vst.msk [vmem:[#allocation3 + $0x30] sm:$0xff] %vm3787, %v3776
        %3795 = vst.msk [vmem:[#allocation3 + $0x38] sm:$0xff] %vm3787, %v3778
        %v3796 = vld [vmem:[#allocation3] sm:$0xff]
        %v3797 = vld [vmem:[#allocation3 + $0x8] sm:$0xff]
        %v3798 = vld [vmem:[#allocation3 + $0x10] sm:$0xff]
        %v3799 = vld [vmem:[#allocation3 + $0x18] sm:$0xff]
        %v3800 = vld [vmem:[#allocation3 + $0x20] sm:$0xff]
        %v3801 = vld [vmem:[#allocation3 + $0x28] sm:$0xff]
        %v3802 = vld [vmem:[#allocation3 + $0x30] sm:$0xff]
        %v3803 = vld [vmem:[#allocation3 + $0x38] sm:$0xff]
        %v3804 = vld [vmem:[%s4] sm:$0xff]
        %v3805 = vld [vmem:[%s4 + $0x8] sm:$0xff]
        %v3806 = vld [vmem:[%s4 + $0x10] sm:$0xff]
        %v3807 = vld [vmem:[%s4 + $0x18] sm:$0xff]
        %v3808 = vld [vmem:[%s4 + $0x20] sm:$0xff]
        %v3809 = vld [vmem:[%s4 + $0x28] sm:$0xff]
        %v3810 = vld [vmem:[%s4 + $0x30] sm:$0xff]
        %v3811 = vld [vmem:[%s4 + $0x38] sm:$0xff]
        %v3812 = vld [vmem:[%s5] sm:$0x1]
        %v3814 = vlaneseq
        %v3815 = vshrl.u32 %v3814, 7
        %v3816 = vsub.s32 0, %v3815
        %v3817 = vrot.slane %v3812, %v3816
        %v3820 = vsel %vm337, %v3796, 0
        %v3823 = vsel %vm337, %v3797, 0
        %v3826 = vsel %vm337, %v3798, 0
        %v3829 = vsel %vm337, %v3799, 0
        %v3832 = vsel %vm337, %v3800, 0
        %v3835 = vsel %vm337, %v3801, 0
        %v3838 = vsel %vm337, %v3802, 0
        %v3841 = vsel %vm337, %v3803, 0
        %3843 = vmatprep.subr.mxu0 0.0
        %3844 = vmatpush1.msra.mxu0 %v3804
        %3845 = vmatprep.subr.mxu0 0.0
        %3846 = vmatpush1.msra.mxu0 %v3805
        %3847 = vmatprep.subr.mxu0 0.0
        %3848 = vmatpush1.msra.mxu0 %v3806
        %3849 = vmatprep.subr.mxu0 0.0
        %3850 = vmatpush1.msra.mxu0 %v3807
        %3851 = vmatprep.subr.mxu0 0.0
        %3852 = vmatpush1.msra.mxu0 %v3808
        %3853 = vmatprep.subr.mxu0 0.0
        %3854 = vmatpush1.msra.mxu0 %v3809
        %3855 = vmatprep.subr.mxu0 0.0
        %3856 = vmatpush1.msra.mxu0 %v3810
        %3857 = vmatprep.subr.mxu0 0.0
        %3858 = vmatpush1.msra.mxu0 %v3811
        %3859 = vmatprep.subr.mxu0 0.0
        %3860 = vmatpush1.msra.mxu0 0.0
        %3861 = vmatprep.subr.mxu0 0.0
        %3862 = vmatpush1.msra.mxu0 0.0
        %3863 = vmatprep.subr.mxu0 0.0
        %3864 = vmatpush1.msra.mxu0 0.0
        %3865 = vmatprep.subr.mxu0 0.0
        %3866 = vmatpush1.msra.mxu0 0.0
        %3867 = vmatprep.subr.mxu0 0.0
        %3868 = vmatpush1.msra.mxu0 0.0
        %3869 = vmatprep.subr.mxu0 0.0
        %3870 = vmatpush1.msra.mxu0 0.0
        %3871 = vmatprep.subr.mxu0 0.0
        %3872 = vmatpush1.msra.mxu0 0.0
        %3873 = vmatprep.subr.mxu0 0.0
        %3874 = vmatpush1.msra.mxu0 0.0
        %3875 = vmatprep.subr.mxu0 0.0
        %3876 = vmatpush1.msra.mxu0 0.0
        %3877 = vmatprep.subr.mxu0 0.0
        %3878 = vmatpush1.msra.mxu0 0.0
        %3879 = vmatprep.subr.mxu0 0.0
        %3880 = vmatpush1.msra.mxu0 0.0
        %3881 = vmatprep.subr.mxu0 0.0
        %3882 = vmatpush1.msra.mxu0 0.0
        %3883 = vmatprep.subr.mxu0 0.0
        %3884 = vmatpush1.msra.mxu0 0.0
        %3885 = vmatprep.subr.mxu0 0.0
        %3886 = vmatpush1.msra.mxu0 0.0
        %3887 = vmatprep.subr.mxu0 0.0
        %3888 = vmatpush1.msra.mxu0 0.0
        %3889 = vmatprep.subr.mxu0 0.0
        %3890 = vmatpush1.msra.mxu0 0.0
        %3891 = vmatprep.subr.mxu0 0.0
        %3892 = vmatpush1.msra.mxu0 0.0
        %3893 = vmatprep.subr.mxu0 0.0
        %3894 = vmatpush1.msra.mxu0 0.0
        %3895 = vmatprep.subr.mxu0 0.0
        %3896 = vmatpush1.msra.mxu0 0.0
        %3897 = vmatprep.subr.mxu0 0.0
        %3898 = vmatpush1.msra.mxu0 0.0
        %3899 = vmatprep.subr.mxu0 0.0
        %3900 = vmatpush1.msra.mxu0 0.0
        %3901 = vmatprep.subr.mxu0 0.0
        %3902 = vmatpush1.msra.mxu0 0.0
        %3903 = vmatprep.subr.mxu0 0.0
        %3904 = vmatpush1.msra.mxu0 0.0
        %3905 = vmatprep.subr.mxu0 0.0
        %3906 = vmatpush1.msra.mxu0 0.0
        %3907 = vmatprep.mubr.f32.mxu0 0.0
        %3908 = vmatmul.mubr.f32.gmra.mrb[0].mxu0 %v3820
        %v3909 = vpop.f32.mrb[0].mxu0
        %v3910 = vadd.f32 %v3817, %v3909
        %v3911 = vpop.f32.mrb[0].mxu0
        %3912 = vmatprep.mubr.f32.mxu0 0.0
        %3913 = vmatmul.mubr.f32.gmra.mrb[0].mxu0 %v3823
        %v3914 = vpop.f32.mrb[0].mxu0
        %v3915 = vadd.f32 %v3817, %v3914
        %v3916 = vpop.f32.mrb[0].mxu0
        %3917 = vmatprep.mubr.f32.mxu0 0.0
        %3918 = vmatmul.mubr.f32.gmra.mrb[0].mxu0 %v3826
        %v3919 = vpop.f32.mrb[0].mxu0
        %v3920 = vadd.f32 %v3817, %v3919
        %v3921 = vpop.f32.mrb[0].mxu0
        %3922 = vmatprep.mubr.f32.mxu0 0.0
        %3923 = vmatmul.mubr.f32.gmra.mrb[0].mxu0 %v3829
        %v3924 = vpop.f32.mrb[0].mxu0
        %v3925 = vadd.f32 %v3817, %v3924
        %v3926 = vpop.f32.mrb[0].mxu0
        %3927 = vmatprep.mubr.f32.mxu0 0.0
        %3928 = vmatmul.mubr.f32.gmra.mrb[0].mxu0 %v3832
        %v3929 = vpop.f32.mrb[0].mxu0
        %v3930 = vadd.f32 %v3817, %v3929
        %v3931 = vpop.f32.mrb[0].mxu0
        %3932 = vmatprep.mubr.f32.mxu0 0.0
        %3933 = vmatmul.mubr.f32.gmra.mrb[0].mxu0 %v3835
        %v3934 = vpop.f32.mrb[0].mxu0
        %v3935 = vadd.f32 %v3817, %v3934
        %v3936 = vpop.f32.mrb[0].mxu0
        %3937 = vmatprep.mubr.f32.mxu0 0.0
        %3938 = vmatmul.mubr.f32.gmra.mrb[0].mxu0 %v3838
        %v3939 = vpop.f32.mrb[0].mxu0
        %v3940 = vadd.f32 %v3817, %v3939
        %v3941 = vpop.f32.mrb[0].mxu0
        %3942 = vmatprep.mubr.f32.mxu0 0.0
        %3943 = vmatmul.mubr.f32.gmra.mrb[0].mxu0 %v3841
        %v3944 = vpop.f32.mrb[0].mxu0
        %v3945 = vadd.f32 %v3817, %v3944
        %v3946 = vpop.f32.mrb[0].mxu0
        %3947 = vdwg.mxu0
        %3948 = vst.msk [vmem:[%s299] sm:$0xff] %vm337, %v3910
        %3949 = vst.msk [vmem:[%s299 + $0x8] sm:$0xff] %vm337, %v3915
        %3950 = vst.msk [vmem:[%s299 + $0x10] sm:$0xff] %vm337, %v3920
        %3951 = vst.msk [vmem:[%s299 + $0x18] sm:$0xff] %vm337, %v3925
        %3952 = vst.msk [vmem:[%s299 + $0x20] sm:$0xff] %vm337, %v3930
        %3953 = vst.msk [vmem:[%s299 + $0x28] sm:$0xff] %vm337, %v3935
        %3954 = vst.msk [vmem:[%s299 + $0x30] sm:$0xff] %vm337, %v3940
        %3955 = vst.msk [vmem:[%s299 + $0x38] sm:$0xff] %vm337, %v3945
        %s3956 = sand.u32 %s185, 1
        %s3957 = scalar_lea.sflag [#allocation5], %s3956
        %s3958 = sand.u32 %s185, 1
        %s3959 = smul.addr %s3958, 64
        %s3960 = scalar_lea.vmem [#allocation4], %s3959
        // Predicated region
        $region45: #{attention_forward.3} parent=43 // pred_check
          %p3961 = pneg %p195
        $region46: #{attention_forward.3} parent=43 // pred_check_branch
          %3963 = sbr.rel (%p3961) target = $region48
        $region47: #{attention_forward.3} parent=43 // pred_region
          %s3964 = smul.u32 8, %s25
          %s3966 = ssub.s32 1024, 1024
          %3967 = vsyncadd %s3957, %s3966
          %s3968 = smul.addr %s24, 8
          %s3969 = sadd.s32 %s3964, %s3968
          %s3970 = smul.addr %s3969, 128
          %s3971 = scalar_lea.hbm %s6, %s3970
          %s3972 = sshll.u32 %s3960, 4
          %s3973 = int_to_ptr.vmem [resolvable:$true] %s3972
          %3978 = dma.vmem_to_hbm [thread:$0]  %s3973, 1024, %s3971, %s3957, 128, 128, 8
        $region48: #{attention_forward.3} parent=43 // pred_fallthru
          _
      $region44: #{attention_forward.3} parent=5 // pred_fallthru
        _
      %p3979 = scmp.le.s32.totalorder 2, %s15
      // Predicated region
      $region49: #{attention_forward.3} parent=5 // pred_check
        %p3980 = pneg %p3979
      $region50: #{attention_forward.3} parent=5 // pred_check_branch
        %3982 = sbr.rel (%p3980) target = $region52
      $region51: #{attention_forward.3} parent=5 // pred_region
        %s3983 = ssub.s32 %s15, 2
        // Predicated region
        $region53: #{attention_forward.3} parent=51 // pred_check
          %p3984 = pneg %p201
        $region54: #{attention_forward.3} parent=51 // pred_check_branch
          %3986 = sbr.rel (%p3984) target = $region56
        $region55: #{attention_forward.3} parent=51 // pred_region
          %s3987 = sand.u32 %s186, 1
          %s3988 = scalar_lea.sflag [#allocation5], %s3987
          %s3989 = sand.u32 %s186, 1
          %s3990 = smul.addr %s3989, 64
          %s3991 = scalar_lea.vmem [#allocation4], %s3990
          %3992 = dma.done %s3988, 1024
        $region56: #{attention_forward.3} parent=51 // pred_fallthru
          _
      $region52: #{attention_forward.3} parent=5 // pred_fallthru
        _
    $region6: #{attention_forward.3} parent=1 // loop_footer
      %s19 = sadd.s32 1, %s15
    $region7: #{attention_forward.3} parent=1 // loop_footer_branch
      %14 = sbr.rel target = $region3
    $region8: #{attention_forward.3} parent=1 // loop_exit
      _
    %3993 = vsyncpa [#allocation5], 1
    %s3994 = scalar_lea.sflag [#allocation5], 1
    %3995 = vsyncpa %s3994, 1

</llo_original>
